<compile_context>
chip_gen: v6e
topology: v6e:2x2x1
jax: 0.10.0
libtpu: 0.0.40
codegen_flags: <defaults>
</compile_context>

<pallas_src>
import jax
import jax.numpy as jnp
from jax.experimental import pallas as pl
from jax.experimental.pallas import tpu as pltpu

# ---------------------------------------------------------------------------
# Static architecture config (Python constants, never traced -> fixes the
# ConcretizationTypeError from padding values living inside the jitted pytree).
# ---------------------------------------------------------------------------
N_ROT = 4
DIHEDRAL = True
G = 2 * N_ROT if DIHEDRAL else N_ROT          # |D_4| = 8
CONV_CFG = (
    dict(k=5, pad=2, fields=8,  cout=128),    # real cout = 64, padded to 128
    dict(k=3, pad=1, fields=16, cout=128),
    dict(k=3, pad=1, fields=32, cout=256),
)
BN_EPS = 1e-5
LN_EPS = 1e-5
HIDDEN = 256
LOGITS_PAD = 128
NUM_CLASSES = 3


def _round_up(x, m):
    return ((x + m - 1) // m) * m


# ---------------------------------------------------------------------------
# Pallas kernels
# ---------------------------------------------------------------------------

def conv_bn_relu_pool_kernel(col_ref, w_ref, scale_ref, shift_ref, out_ref):
    """Fused conv (as matmul) + folded-BN affine + ReLU + 2x2 max-pool.

    col_ref:   (4, tile_m, K) bf16 -- patch rows grouped by pool parity
    w_ref:     (K, Cout)      bf16
    scale_ref: (1, Cout)      f32   (gamma / sqrt(var+eps), per channel)
    shift_ref: (1, Cout)      f32   (conv_bias * scale + beta)
    out_ref:   (tile_m, Cout) f32   = maxpool2x2(relu(bn(conv(x))))
    """
    w = w_ref[...]
    scale = scale_ref[...]
    shift = shift_ref[...]
    pooled = None
    for p in range(4):  # static unroll over the 2x2 pooling window parity
        acc = jnp.dot(col_ref[p], w, preferred_element_type=jnp.float32)
        y = jnp.maximum(acc * scale + shift, 0.0)
        pooled = y if pooled is None else jnp.maximum(pooled, y)
    out_ref[...] = pooled


def conv_bn_relu_pool(col4, w, scale, shift):
    _, mp, kdim = col4.shape
    cout = w.shape[1]
    tile_m = 128 if mp % 128 == 0 else mp
    grid = (mp // tile_m,)
    return pl.pallas_call(
        conv_bn_relu_pool_kernel,
        out_shape=jax.ShapeDtypeStruct((mp, cout), jnp.float32),
        grid_spec=pltpu.PrefetchScalarGridSpec(
            num_scalar_prefetch=0,
            grid=grid,
            in_specs=[
                pl.BlockSpec((4, tile_m, kdim), lambda m: (0, m, 0)),
                pl.BlockSpec((kdim, cout), lambda m: (0, 0)),
                pl.BlockSpec((1, cout), lambda m: (0, 0)),
                pl.BlockSpec((1, cout), lambda m: (0, 0)),
            ],
            out_specs=pl.BlockSpec((tile_m, cout), lambda m: (m, 0)),
        ),
        compiler_params=pltpu.CompilerParams(
            dimension_semantics=("parallel",),
            vmem_limit_bytes=32 * 1024 * 1024,
        ),
    )(col4, w, scale, shift)


def head_kernel(x_ref, w1_ref, b1_ref, g_ref, beta_ref, w2_ref, b2_ref,
                latent_ref, logits_ref):
    """fc1 -> LayerNorm (single-pass stats) -> latent -> fc2 -> padded logits."""
    h = jnp.dot(x_ref[...], w1_ref[...], preferred_element_type=jnp.float32)
    h = h + b1_ref[...]
    mean = jnp.mean(h, axis=-1, keepdims=True)
    ex2 = jnp.mean(h * h, axis=-1, keepdims=True)
    var = jnp.maximum(ex2 - mean * mean, 0.0)
    ln = (h - mean) * jax.lax.rsqrt(var + LN_EPS) * g_ref[...] + beta_ref[...]
    latent_ref[...] = ln
    logits_ref[...] = (
        jnp.dot(ln.astype(jnp.bfloat16), w2_ref[...],
                preferred_element_type=jnp.float32) + b2_ref[...]
    )


def head(flat, w1, b1, ln_g, ln_b, w2, b2):
    B = flat.shape[0]
    vspec = pl.BlockSpec(memory_space=pltpu.MemorySpace.VMEM)
    return pl.pallas_call(
        head_kernel,
        out_shape=(jax.ShapeDtypeStruct((B, HIDDEN), jnp.float32),
                   jax.ShapeDtypeStruct((B, LOGITS_PAD), jnp.float32)),
        in_specs=[vspec] * 7,
        out_specs=(vspec, vspec),
        compiler_params=pltpu.CompilerParams(
            vmem_limit_bytes=32 * 1024 * 1024),
    )(flat, w1, b1, ln_g, ln_b, w2, b2)


# ---------------------------------------------------------------------------
# XLA glue: parity-grouped im2col (static kernel size / padding)
# ---------------------------------------------------------------------------

def im2col_pool_blocks(x, k, pad):
    """x: (B, H, W, C) NHWC -> (4, B*(H//2)*(W//2), k*k*C).

    Row groups are the 2x2-maxpool parities (pi, pj); within a group rows are
    ordered (b, i2, j2).  Feature order is (di, dj, c) to match the weights.
    """
    B, H, W, C = x.shape
    xp = jnp.pad(x, ((0, 0), (pad, pad), (pad, pad), (0, 0)))
    taps = [xp[:, di:di + H, dj:dj + W, :] for di in range(k) for dj in range(k)]
    patches = jnp.concatenate(taps, axis=-1)                  # (B, H, W, k*k*C)
    kk = k * k * C
    patches = patches.reshape(B, H // 2, 2, W // 2, 2, kk)
    patches = jnp.transpose(patches, (2, 4, 0, 1, 3, 5))      # (pi,pj,B,H/2,W/2,kk)
    return patches.reshape(4, B * (H // 2) * (W // 2), kk)


# ---------------------------------------------------------------------------
# Parameters (arrays only; all structural ints stay in CONV_CFG)
# ---------------------------------------------------------------------------

def init_params(key, num_channels=1, num_classes=NUM_CLASSES, input_size=(16, 16)):
    conv_w, conv_scale, conv_shift = [], [], []
    cin_carried = num_channels            # channels present in the fed activation
    for li, cfg in enumerate(CONV_CFG):
        k, fields, cout_pad = cfg["k"], cfg["fields"], cfg["cout"]
        cout_real = fields * G
        cin_real = num_channels if li == 0 else CONV_CFG[li - 1]["fields"] * G
        key, kw, kb = jax.random.split(key, 3)

        # TODO(synk): steerable-basis expansion of R2Conv weights not replicated.
        w_real = jax.random.normal(kw, (k * k, cin_real, cout_real), jnp.float32)
        w_real = w_real / jnp.sqrt(float(k * k * cin_real))
        # embed into the carried/padded layout: (k*k, cin_carried, cout_pad)
        w = jnp.pad(w_real, ((0, 0),
                             (0, cin_carried - cin_real),
                             (0, cout_pad - cout_real)))
        w = w.reshape(k * k * cin_carried, cout_pad)
        kdim = _round_up(k * k * cin_carried, 8)              # 25 -> 32 for conv1
        if kdim > w.shape[0]:
            w = jnp.pad(w, ((0, kdim - w.shape[0]), (0, 0)))

        # R2Conv bias is per field, replicated over the |G| group channels.
        bias_f = 0.01 * jax.random.normal(kb, (fields,), jnp.float32)
        bias_c = jnp.repeat(bias_f, G)
        gamma = jnp.ones((cout_real,), jnp.float32)           # InnerBatchNorm affine
        beta = jnp.zeros((cout_real,), jnp.float32)
        scale = gamma / jnp.sqrt(1.0 + BN_EPS)                # running stats (0, 1)
        shift = bias_c * scale + beta
        scale = jnp.pad(scale, (0, cout_pad - cout_real)).reshape(1, cout_pad)
        shift = jnp.pad(shift, (0, cout_pad - cout_real)).reshape(1, cout_pad)

        conv_w.append(w.astype(jnp.bfloat16))
        conv_scale.append(scale)
        conv_shift.append(shift)
        cin_carried = cout_pad

    Hf, Wf = input_size[0] // 8, input_size[1] // 8
    fields = CONV_CFG[-1]["fields"]
    flattened = fields * Hf * Wf
    key, k1, k2 = jax.random.split(key, 3)
    # fc1 rows in PyTorch NCHW-flatten order, then permuted once so the wrapper
    # can flatten the NHWC group-pooled tensor directly (transpose folded away).
    w1_torch = 0.005 * jax.random.normal(k1, (flattened, HIDDEN), jnp.float32)
    nhwc_idx = jnp.arange(flattened)
    s = nhwc_idx // fields
    f = nhwc_idx % fields
    w1 = w1_torch[f * (Hf * Wf) + s, :]

    w2_real = 0.01 * jax.random.normal(k2, (HIDDEN, num_classes), jnp.float32)
    w2 = jnp.pad(w2_real, ((0, 0), (0, LOGITS_PAD - num_classes)))

    return {
        "conv_w": conv_w,
        "conv_scale": conv_scale,
        "conv_shift": conv_shift,
        "fc1_w": w1.astype(jnp.bfloat16),
        "fc1_b": jnp.zeros((1, HIDDEN), jnp.float32),
        "ln_g": jnp.ones((1, HIDDEN), jnp.float32),
        "ln_b": jnp.zeros((1, HIDDEN), jnp.float32),
        "fc2_w": w2.astype(jnp.bfloat16),
        "fc2_b": jnp.zeros((1, LOGITS_PAD), jnp.float32),
    }


# ---------------------------------------------------------------------------
# Forward pass
# ---------------------------------------------------------------------------

def enn_forward(params, x_nchw):
    x = jnp.transpose(x_nchw, (0, 2, 3, 1)).astype(jnp.float32)   # NHWC
    for li, cfg in enumerate(CONV_CFG):
        B, H, W, _ = x.shape
        col4 = im2col_pool_blocks(x, cfg["k"], cfg["pad"])
        kdim = params["conv_w"][li].shape[0]
        if kdim > col4.shape[-1]:                                 # conv1: 25 -> 32
            col4 = jnp.pad(col4, ((0, 0), (0, 0), (0, kdim - col4.shape[-1])))
        pooled = conv_bn_relu_pool(
            col4.astype(jnp.bfloat16),
            params["conv_w"][li],
            params["conv_scale"][li],
            params["conv_shift"][li],
        )
        cout = params["conv_w"][li].shape[1]
        x = pooled.reshape(B, H // 2, W // 2, cout)
        # PointwiseDropout: identity in eval mode.

    # GroupPooling: max over the |G| group channels within each field.
    B, Hf, Wf, C = x.shape
    fields = CONV_CFG[-1]["fields"]
    gp = x.reshape(B, Hf, Wf, fields, G).max(axis=-1)             # (B, Hf, Wf, F)
    flat = gp.reshape(B, Hf * Wf * fields)        # NHWC flatten; perm is in fc1_w

    latent, logits_pad = head(
        flat.astype(jnp.bfloat16),
        params["fc1_w"], params["fc1_b"],
        params["ln_g"], params["ln_b"],
        params["fc2_w"], params["fc2_b"],
    )
    return latent, logits_pad[:, :NUM_CLASSES]


# ---------------------------------------------------------------------------

if __name__ == "__main__":
    key = jax.random.PRNGKey(0)
    key, kx, kp = jax.random.split(key, 3)

    batch, num_channels, input_size = 2, 1, (16, 16)
    params = init_params(kp, num_channels=num_channels,
                         num_classes=NUM_CLASSES, input_size=input_size)
    x = jax.random.normal(kx, (batch, num_channels, *input_size), jnp.float32)

    fwd = jax.jit(enn_forward)
    latent, logits = fwd(params, x)
    latent = jax.block_until_ready(latent)
    logits = jax.block_until_ready(logits)

    assert latent.shape == (batch, HIDDEN), latent.shape
    assert logits.shape == (batch, NUM_CLASSES), logits.shape
    assert bool(jnp.all(jnp.isfinite(latent))) and bool(jnp.all(jnp.isfinite(logits)))
    print("KERNEL_OK")
</pallas_src>

<mosaic_0001>
module attributes {stable_mosaic.version = 11 : i64} {
  func.func @conv_bn_relu_pool_kernel(%arg0: i32, %arg1: memref<4x128x32xbf16, #tpu.memory_space<vmem>>, %arg2: memref<32x128xbf16, #tpu.memory_space<vmem>>, %arg3: memref<1x128xf32, #tpu.memory_space<vmem>>, %arg4: memref<1x128xf32, #tpu.memory_space<vmem>>, %arg5: memref<128x128xf32, #tpu.memory_space<vmem>>) attributes {dimension_semantics = [#tpu.dimension_semantics<parallel>], iteration_bounds = array<i64: 1>, scalar_prefetch = 0 : i64, scratch_operands = 0 : i64, tpu.core_type = #tpu.core_type<tc>, window_params = [{transform_indices = @transform_0, window_bounds = array<i64: 4, 128, 32>}, {pipeline_mode = #tpu.pipeline_mode<synchronous>, transform_indices = @transform_1, window_bounds = array<i64: 32, 128>}, {pipeline_mode = #tpu.pipeline_mode<synchronous>, transform_indices = @transform_2, window_bounds = array<i64: 1, 128>}, {pipeline_mode = #tpu.pipeline_mode<synchronous>, transform_indices = @transform_3, window_bounds = array<i64: 1, 128>}, {transform_indices = @transform_4, window_bounds = array<i64: 128, 128>}]} {
    %c0 = arith.constant 0 : index
    %c0_0 = arith.constant 0 : index
    %0 = vector.load %arg2[%c0, %c0_0] : memref<32x128xbf16, #tpu.memory_space<vmem>>, vector<32x128xbf16>
    %c0_1 = arith.constant 0 : index
    %c0_2 = arith.constant 0 : index
    %1 = vector.load %arg3[%c0_1, %c0_2] : memref<1x128xf32, #tpu.memory_space<vmem>>, vector<1x128xf32>
    %c0_3 = arith.constant 0 : index
    %c0_4 = arith.constant 0 : index
    %2 = vector.load %arg4[%c0_3, %c0_4] : memref<1x128xf32, #tpu.memory_space<vmem>>, vector<1x128xf32>
    %c0_5 = arith.constant 0 : index
    %c0_6 = arith.constant 0 : index
    %c0_7 = arith.constant 0 : index
    %3 = vector.load %arg1[%c0_5, %c0_6, %c0_7] : memref<4x128x32xbf16, #tpu.memory_space<vmem>>, vector<1x128x32xbf16>
    %4 = vector.shape_cast %3 : vector<1x128x32xbf16> to vector<128x32xbf16>
    %cst = arith.constant dense<0.000000e+00> : vector<128x128xf32>
    %5 = tpu.matmul %4, %0, %cst {dimension_numbers = #tpu.dot_dimension_numbers<[1], [0], [0], [1], [0, 0, 1, 1], [], []>} : vector<128x32xbf16>, vector<32x128xbf16>, vector<128x128xf32> -> vector<128x128xf32>
    %6 = vector.broadcast %1 : vector<1x128xf32> to vector<128x128xf32>
    %7 = arith.mulf %5, %6 : vector<128x128xf32>
    %8 = vector.broadcast %2 : vector<1x128xf32> to vector<128x128xf32>
    %9 = arith.addf %7, %8 : vector<128x128xf32>
    %cst_8 = arith.constant 0.000000e+00 : f32
    %10 = vector.broadcast %cst_8 : f32 to vector<128x128xf32>
    %11 = arith.maximumf %9, %10 : vector<128x128xf32>
    %c1 = arith.constant 1 : index
    %c0_9 = arith.constant 0 : index
    %c0_10 = arith.constant 0 : index
    %12 = vector.load %arg1[%c1, %c0_9, %c0_10] : memref<4x128x32xbf16, #tpu.memory_space<vmem>>, vector<1x128x32xbf16>
    %13 = vector.shape_cast %12 : vector<1x128x32xbf16> to vector<128x32xbf16>
    %cst_11 = arith.constant dense<0.000000e+00> : vector<128x128xf32>
    %14 = tpu.matmul %13, %0, %cst_11 {dimension_numbers = #tpu.dot_dimension_numbers<[1], [0], [0], [1], [0, 0, 1, 1], [], []>} : vector<128x32xbf16>, vector<32x128xbf16>, vector<128x128xf32> -> vector<128x128xf32>
    %15 = vector.broadcast %1 : vector<1x128xf32> to vector<128x128xf32>
    %16 = arith.mulf %14, %15 : vector<128x128xf32>
    %17 = vector.broadcast %2 : vector<1x128xf32> to vector<128x128xf32>
    %18 = arith.addf %16, %17 : vector<128x128xf32>
    %cst_12 = arith.constant 0.000000e+00 : f32
    %19 = vector.broadcast %cst_12 : f32 to vector<128x128xf32>
    %20 = arith.maximumf %18, %19 : vector<128x128xf32>
    %21 = arith.maximumf %11, %20 : vector<128x128xf32>
    %c2 = arith.constant 2 : index
    %c0_13 = arith.constant 0 : index
    %c0_14 = arith.constant 0 : index
    %22 = vector.load %arg1[%c2, %c0_13, %c0_14] : memref<4x128x32xbf16, #tpu.memory_space<vmem>>, vector<1x128x32xbf16>
    %23 = vector.shape_cast %22 : vector<1x128x32xbf16> to vector<128x32xbf16>
    %cst_15 = arith.constant dense<0.000000e+00> : vector<128x128xf32>
    %24 = tpu.matmul %23, %0, %cst_15 {dimension_numbers = #tpu.dot_dimension_numbers<[1], [0], [0], [1], [0, 0, 1, 1], [], []>} : vector<128x32xbf16>, vector<32x128xbf16>, vector<128x128xf32> -> vector<128x128xf32>
    %25 = vector.broadcast %1 : vector<1x128xf32> to vector<128x128xf32>
    %26 = arith.mulf %24, %25 : vector<128x128xf32>
    %27 = vector.broadcast %2 : vector<1x128xf32> to vector<128x128xf32>
    %28 = arith.addf %26, %27 : vector<128x128xf32>
    %cst_16 = arith.constant 0.000000e+00 : f32
    %29 = vector.broadcast %cst_16 : f32 to vector<128x128xf32>
    %30 = arith.maximumf %28, %29 : vector<128x128xf32>
    %31 = arith.maximumf %21, %30 : vector<128x128xf32>
    %c3 = arith.constant 3 : index
    %c0_17 = arith.constant 0 : index
    %c0_18 = arith.constant 0 : index
    %32 = vector.load %arg1[%c3, %c0_17, %c0_18] : memref<4x128x32xbf16, #tpu.memory_space<vmem>>, vector<1x128x32xbf16>
    %33 = vector.shape_cast %32 : vector<1x128x32xbf16> to vector<128x32xbf16>
    %cst_19 = arith.constant dense<0.000000e+00> : vector<128x128xf32>
    %34 = tpu.matmul %33, %0, %cst_19 {dimension_numbers = #tpu.dot_dimension_numbers<[1], [0], [0], [1], [0, 0, 1, 1], [], []>} : vector<128x32xbf16>, vector<32x128xbf16>, vector<128x128xf32> -> vector<128x128xf32>
    %35 = vector.broadcast %1 : vector<1x128xf32> to vector<128x128xf32>
    %36 = arith.mulf %34, %35 : vector<128x128xf32>
    %37 = vector.broadcast %2 : vector<1x128xf32> to vector<128x128xf32>
    %38 = arith.addf %36, %37 : vector<128x128xf32>
    %cst_20 = arith.constant 0.000000e+00 : f32
    %39 = vector.broadcast %cst_20 : f32 to vector<128x128xf32>
    %40 = arith.maximumf %38, %39 : vector<128x128xf32>
    %41 = arith.maximumf %31, %40 : vector<128x128xf32>
    %c0_21 = arith.constant 0 : index
    %c0_22 = arith.constant 0 : index
    %42 = vector.load %arg5[%c0_21, %c0_22] : memref<128x128xf32, #tpu.memory_space<vmem>>, vector<128x128xf32>
    tpu.vector_store %arg5[%c0_21, %c0_22], %41 {strides = array<i32>} : memref<128x128xf32, #tpu.memory_space<vmem>>, vector<128x128xf32>,
    return
  }
  func.func @transform_0(%arg0: i32) -> (i32, i32, i32) {
    %c0_i32 = arith.constant 0 : i32
    %c0_i32_0 = arith.constant 0 : i32
    %c0_i32_1 = arith.constant 0 : i32
    return %c0_i32, %arg0, %c0_i32_0 : i32, i32, i32
  }
  func.func @transform_1(%arg0: i32) -> (i32, i32) {
    %c0_i32 = arith.constant 0 : i32
    %c0_i32_0 = arith.constant 0 : i32
    %c0_i32_1 = arith.constant 0 : i32
    return %c0_i32, %c0_i32_0 : i32, i32
  }
  func.func @transform_2(%arg0: i32) -> (i32, i32) {
    %c0_i32 = arith.constant 0 : i32
    %c0_i32_0 = arith.constant 0 : i32
    %c0_i32_1 = arith.constant 0 : i32
    return %c0_i32, %c0_i32_0 : i32, i32
  }
  func.func @transform_3(%arg0: i32) -> (i32, i32) {
    %c0_i32 = arith.constant 0 : i32
    %c0_i32_0 = arith.constant 0 : i32
    %c0_i32_1 = arith.constant 0 : i32
    return %c0_i32, %c0_i32_0 : i32, i32
  }
  func.func @transform_4(%arg0: i32) -> (i32, i32) {
    %c0_i32 = arith.constant 0 : i32
    %c0_i32_0 = arith.constant 0 : i32
    return %arg0, %c0_i32 : i32, i32
  }
}

module attributes {stable_mosaic.version = 11 : i64} {
  func.func @conv_bn_relu_pool_kernel(%arg0: i32, %arg1: memref<4x32x1152xbf16, #tpu.memory_space<vmem>>, %arg2: memref<1152x128xbf16, #tpu.memory_space<vmem>>, %arg3: memref<1x128xf32, #tpu.memory_space<vmem>>, %arg4: memref<1x128xf32, #tpu.memory_space<vmem>>, %arg5: memref<32x128xf32, #tpu.memory_space<vmem>>) attributes {dimension_semantics = [#tpu.dimension_semantics<parallel>], iteration_bounds = array<i64: 1>, scalar_prefetch = 0 : i64, scratch_operands = 0 : i64, tpu.core_type = #tpu.core_type<tc>, window_params = [{transform_indices = @transform_0, window_bounds = array<i64: 4, 32, 1152>}, {pipeline_mode = #tpu.pipeline_mode<synchronous>, transform_indices = @transform_1, window_bounds = array<i64: 1152, 128>}, {pipeline_mode = #tpu.pipeline_mode<synchronous>, transform_indices = @transform_2, window_bounds = array<i64: 1, 128>}, {pipeline_mode = #tpu.pipeline_mode<synchronous>, transform_indices = @transform_3, window_bounds = array<i64: 1, 128>}, {transform_indices = @transform_4, window_bounds = array<i64: 32, 128>}]} {
    %c0 = arith.constant 0 : index
    %c0_0 = arith.constant 0 : index
    %0 = vector.load %arg2[%c0, %c0_0] : memref<1152x128xbf16, #tpu.memory_space<vmem>>, vector<1152x128xbf16>
    %c0_1 = arith.constant 0 : index
    %c0_2 = arith.constant 0 : index
    %1 = vector.load %arg3[%c0_1, %c0_2] : memref<1x128xf32, #tpu.memory_space<vmem>>, vector<1x128xf32>
    %c0_3 = arith.constant 0 : index
    %c0_4 = arith.constant 0 : index
    %2 = vector.load %arg4[%c0_3, %c0_4] : memref<1x128xf32, #tpu.memory_space<vmem>>, vector<1x128xf32>
    %c0_5 = arith.constant 0 : index
    %c0_6 = arith.constant 0 : index
    %c0_7 = arith.constant 0 : index
    %3 = vector.load %arg1[%c0_5, %c0_6, %c0_7] : memref<4x32x1152xbf16, #tpu.memory_space<vmem>>, vector<1x32x1152xbf16>
    %4 = vector.shape_cast %3 : vector<1x32x1152xbf16> to vector<32x1152xbf16>
    %cst = arith.constant dense<0.000000e+00> : vector<32x128xf32>
    %5 = tpu.matmul %4, %0, %cst {dimension_numbers = #tpu.dot_dimension_numbers<[1], [0], [0], [1], [0, 0, 1, 1], [], []>} : vector<32x1152xbf16>, vector<1152x128xbf16>, vector<32x128xf32> -> vector<32x128xf32>
    %6 = vector.broadcast %1 : vector<1x128xf32> to vector<32x128xf32>
    %7 = arith.mulf %5, %6 : vector<32x128xf32>
    %8 = vector.broadcast %2 : vector<1x128xf32> to vector<32x128xf32>
    %9 = arith.addf %7, %8 : vector<32x128xf32>
    %cst_8 = arith.constant 0.000000e+00 : f32
    %10 = vector.broadcast %cst_8 : f32 to vector<32x128xf32>
    %11 = arith.maximumf %9, %10 : vector<32x128xf32>
    %c1 = arith.constant 1 : index
    %c0_9 = arith.constant 0 : index
    %c0_10 = arith.constant 0 : index
    %12 = vector.load %arg1[%c1, %c0_9, %c0_10] : memref<4x32x1152xbf16, #tpu.memory_space<vmem>>, vector<1x32x1152xbf16>
    %13 = vector.shape_cast %12 : vector<1x32x1152xbf16> to vector<32x1152xbf16>
    %cst_11 = arith.constant dense<0.000000e+00> : vector<32x128xf32>
    %14 = tpu.matmul %13, %0, %cst_11 {dimension_numbers = #tpu.dot_dimension_numbers<[1], [0], [0], [1], [0, 0, 1, 1], [], []>} : vector<32x1152xbf16>, vector<1152x128xbf16>, vector<32x128xf32> -> vector<32x128xf32>
    %15 = vector.broadcast %1 : vector<1x128xf32> to vector<32x128xf32>
    %16 = arith.mulf %14, %15 : vector<32x128xf32>
    %17 = vector.broadcast %2 : vector<1x128xf32> to vector<32x128xf32>
    %18 = arith.addf %16, %17 : vector<32x128xf32>
    %cst_12 = arith.constant 0.000000e+00 : f32
    %19 = vector.broadcast %cst_12 : f32 to vector<32x128xf32>
    %20 = arith.maximumf %18, %19 : vector<32x128xf32>
    %21 = arith.maximumf %11, %20 : vector<32x128xf32>
    %c2 = arith.constant 2 : index
    %c0_13 = arith.constant 0 : index
    %c0_14 = arith.constant 0 : index
    %22 = vector.load %arg1[%c2, %c0_13, %c0_14] : memref<4x32x1152xbf16, #tpu.memory_space<vmem>>, vector<1x32x1152xbf16>
    %23 = vector.shape_cast %22 : vector<1x32x1152xbf16> to vector<32x1152xbf16>
    %cst_15 = arith.constant dense<0.000000e+00> : vector<32x128xf32>
    %24 = tpu.matmul %23, %0, %cst_15 {dimension_numbers = #tpu.dot_dimension_numbers<[1], [0], [0], [1], [0, 0, 1, 1], [], []>} : vector<32x1152xbf16>, vector<1152x128xbf16>, vector<32x128xf32> -> vector<32x128xf32>
    %25 = vector.broadcast %1 : vector<1x128xf32> to vector<32x128xf32>
    %26 = arith.mulf %24, %25 : vector<32x128xf32>
    %27 = vector.broadcast %2 : vector<1x128xf32> to vector<32x128xf32>
    %28 = arith.addf %26, %27 : vector<32x128xf32>
    %cst_16 = arith.constant 0.000000e+00 : f32
    %29 = vector.broadcast %cst_16 : f32 to vector<32x128xf32>
    %30 = arith.maximumf %28, %29 : vector<32x128xf32>
    %31 = arith.maximumf %21, %30 : vector<32x128xf32>
    %c3 = arith.constant 3 : index
    %c0_17 = arith.constant 0 : index
    %c0_18 = arith.constant 0 : index
    %32 = vector.load %arg1[%c3, %c0_17, %c0_18] : memref<4x32x1152xbf16, #tpu.memory_space<vmem>>, vector<1x32x1152xbf16>
    %33 = vector.shape_cast %32 : vector<1x32x1152xbf16> to vector<32x1152xbf16>
    %cst_19 = arith.constant dense<0.000000e+00> : vector<32x128xf32>
    %34 = tpu.matmul %33, %0, %cst_19 {dimension_numbers = #tpu.dot_dimension_numbers<[1], [0], [0], [1], [0, 0, 1, 1], [], []>} : vector<32x1152xbf16>, vector<1152x128xbf16>, vector<32x128xf32> -> vector<32x128xf32>
    %35 = vector.broadcast %1 : vector<1x128xf32> to vector<32x128xf32>
    %36 = arith.mulf %34, %35 : vector<32x128xf32>
    %37 = vector.broadcast %2 : vector<1x128xf32> to vector<32x128xf32>
    %38 = arith.addf %36, %37 : vector<32x128xf32>
    %cst_20 = arith.constant 0.000000e+00 : f32
    %39 = vector.broadcast %cst_20 : f32 to vector<32x128xf32>
    %40 = arith.maximumf %38, %39 : vector<32x128xf32>
    %41 = arith.maximumf %31, %40 : vector<32x128xf32>
    %c0_21 = arith.constant 0 : index
    %c0_22 = arith.constant 0 : index
    %42 = vector.load %arg5[%c0_21, %c0_22] : memref<32x128xf32, #tpu.memory_space<vmem>>, vector<32x128xf32>
    tpu.vector_store %arg5[%c0_21, %c0_22], %41 {strides = array<i32>} : memref<32x128xf32, #tpu.memory_space<vmem>>, vector<32x128xf32>,
    return
  }
  func.func @transform_0(%arg0: i32) -> (i32, i32, i32) {
    %c0_i32 = arith.constant 0 : i32
    %c0_i32_0 = arith.constant 0 : i32
    %c0_i32_1 = arith.constant 0 : i32
    return %c0_i32, %arg0, %c0_i32_0 : i32, i32, i32
  }
  func.func @transform_1(%arg0: i32) -> (i32, i32) {
    %c0_i32 = arith.constant 0 : i32
    %c0_i32_0 = arith.constant 0 : i32
    %c0_i32_1 = arith.constant 0 : i32
    return %c0_i32, %c0_i32_0 : i32, i32
  }
  func.func @transform_2(%arg0: i32) -> (i32, i32) {
    %c0_i32 = arith.constant 0 : i32
    %c0_i32_0 = arith.constant 0 : i32
    %c0_i32_1 = arith.constant 0 : i32
    return %c0_i32, %c0_i32_0 : i32, i32
  }
  func.func @transform_3(%arg0: i32) -> (i32, i32) {
    %c0_i32 = arith.constant 0 : i32
    %c0_i32_0 = arith.constant 0 : i32
    %c0_i32_1 = arith.constant 0 : i32
    return %c0_i32, %c0_i32_0 : i32, i32
  }
  func.func @transform_4(%arg0: i32) -> (i32, i32) {
    %c0_i32 = arith.constant 0 : i32
    %c0_i32_0 = arith.constant 0 : i32
    return %arg0, %c0_i32 : i32, i32
  }
}

module attributes {stable_mosaic.version = 11 : i64} {
  func.func @conv_bn_relu_pool_kernel(%arg0: i32, %arg1: memref<4x8x1152xbf16, #tpu.memory_space<vmem>>, %arg2: memref<1152x256xbf16, #tpu.memory_space<vmem>>, %arg3: memref<1x256xf32, #tpu.memory_space<vmem>>, %arg4: memref<1x256xf32, #tpu.memory_space<vmem>>, %arg5: memref<8x256xf32, #tpu.memory_space<vmem>>) attributes {dimension_semantics = [#tpu.dimension_semantics<parallel>], iteration_bounds = array<i64: 1>, scalar_prefetch = 0 : i64, scratch_operands = 0 : i64, tpu.core_type = #tpu.core_type<tc>, window_params = [{transform_indices = @transform_0, window_bounds = array<i64: 4, 8, 1152>}, {pipeline_mode = #tpu.pipeline_mode<synchronous>, transform_indices = @transform_1, window_bounds = array<i64: 1152, 256>}, {pipeline_mode = #tpu.pipeline_mode<synchronous>, transform_indices = @transform_2, window_bounds = array<i64: 1, 256>}, {pipeline_mode = #tpu.pipeline_mode<synchronous>, transform_indices = @transform_3, window_bounds = array<i64: 1, 256>}, {transform_indices = @transform_4, window_bounds = array<i64: 8, 256>}]} {
    %c0 = arith.constant 0 : index
    %c0_0 = arith.constant 0 : index
    %0 = vector.load %arg2[%c0, %c0_0] : memref<1152x256xbf16, #tpu.memory_space<vmem>>, vector<1152x256xbf16>
    %c0_1 = arith.constant 0 : index
    %c0_2 = arith.constant 0 : index
    %1 = vector.load %arg3[%c0_1, %c0_2] : memref<1x256xf32, #tpu.memory_space<vmem>>, vector<1x256xf32>
    %c0_3 = arith.constant 0 : index
    %c0_4 = arith.constant 0 : index
    %2 = vector.load %arg4[%c0_3, %c0_4] : memref<1x256xf32, #tpu.memory_space<vmem>>, vector<1x256xf32>
    %c0_5 = arith.constant 0 : index
    %c0_6 = arith.constant 0 : index
    %c0_7 = arith.constant 0 : index
    %3 = vector.load %arg1[%c0_5, %c0_6, %c0_7] : memref<4x8x1152xbf16, #tpu.memory_space<vmem>>, vector<1x8x1152xbf16>
    %4 = vector.shape_cast %3 : vector<1x8x1152xbf16> to vector<8x1152xbf16>
    %cst = arith.constant dense<0.000000e+00> : vector<8x256xf32>
    %5 = tpu.matmul %4, %0, %cst {dimension_numbers = #tpu.dot_dimension_numbers<[1], [0], [0], [1], [0, 0, 1, 1], [], []>} : vector<8x1152xbf16>, vector<1152x256xbf16>, vector<8x256xf32> -> vector<8x256xf32>
    %6 = vector.broadcast %1 : vector<1x256xf32> to vector<8x256xf32>
    %7 = arith.mulf %5, %6 : vector<8x256xf32>
    %8 = vector.broadcast %2 : vector<1x256xf32> to vector<8x256xf32>
    %9 = arith.addf %7, %8 : vector<8x256xf32>
    %cst_8 = arith.constant 0.000000e+00 : f32
    %10 = vector.broadcast %cst_8 : f32 to vector<8x256xf32>
    %11 = arith.maximumf %9, %10 : vector<8x256xf32>
    %c1 = arith.constant 1 : index
    %c0_9 = arith.constant 0 : index
    %c0_10 = arith.constant 0 : index
    %12 = vector.load %arg1[%c1, %c0_9, %c0_10] : memref<4x8x1152xbf16, #tpu.memory_space<vmem>>, vector<1x8x1152xbf16>
    %13 = vector.shape_cast %12 : vector<1x8x1152xbf16> to vector<8x1152xbf16>
    %cst_11 = arith.constant dense<0.000000e+00> : vector<8x256xf32>
    %14 = tpu.matmul %13, %0, %cst_11 {dimension_numbers = #tpu.dot_dimension_numbers<[1], [0], [0], [1], [0, 0, 1, 1], [], []>} : vector<8x1152xbf16>, vector<1152x256xbf16>, vector<8x256xf32> -> vector<8x256xf32>
    %15 = vector.broadcast %1 : vector<1x256xf32> to vector<8x256xf32>
    %16 = arith.mulf %14, %15 : vector<8x256xf32>
    %17 = vector.broadcast %2 : vector<1x256xf32> to vector<8x256xf32>
    %18 = arith.addf %16, %17 : vector<8x256xf32>
    %cst_12 = arith.constant 0.000000e+00 : f32
    %19 = vector.broadcast %cst_12 : f32 to vector<8x256xf32>
    %20 = arith.maximumf %18, %19 : vector<8x256xf32>
    %21 = arith.maximumf %11, %20 : vector<8x256xf32>
    %c2 = arith.constant 2 : index
    %c0_13 = arith.constant 0 : index
    %c0_14 = arith.constant 0 : index
    %22 = vector.load %arg1[%c2, %c0_13, %c0_14] : memref<4x8x1152xbf16, #tpu.memory_space<vmem>>, vector<1x8x1152xbf16>
    %23 = vector.shape_cast %22 : vector<1x8x1152xbf16> to vector<8x1152xbf16>
    %cst_15 = arith.constant dense<0.000000e+00> : vector<8x256xf32>
    %24 = tpu.matmul %23, %0, %cst_15 {dimension_numbers = #tpu.dot_dimension_numbers<[1], [0], [0], [1], [0, 0, 1, 1], [], []>} : vector<8x1152xbf16>, vector<1152x256xbf16>, vector<8x256xf32> -> vector<8x256xf32>
    %25 = vector.broadcast %1 : vector<1x256xf32> to vector<8x256xf32>
    %26 = arith.mulf %24, %25 : vector<8x256xf32>
    %27 = vector.broadcast %2 : vector<1x256xf32> to vector<8x256xf32>
    %28 = arith.addf %26, %27 : vector<8x256xf32>
    %cst_16 = arith.constant 0.000000e+00 : f32
    %29 = vector.broadcast %cst_16 : f32 to vector<8x256xf32>
    %30 = arith.maximumf %28, %29 : vector<8x256xf32>
    %31 = arith.maximumf %21, %30 : vector<8x256xf32>
    %c3 = arith.constant 3 : index
    %c0_17 = arith.constant 0 : index
    %c0_18 = arith.constant 0 : index
    %32 = vector.load %arg1[%c3, %c0_17, %c0_18] : memref<4x8x1152xbf16, #tpu.memory_space<vmem>>, vector<1x8x1152xbf16>
    %33 = vector.shape_cast %32 : vector<1x8x1152xbf16> to vector<8x1152xbf16>
    %cst_19 = arith.constant dense<0.000000e+00> : vector<8x256xf32>
    %34 = tpu.matmul %33, %0, %cst_19 {dimension_numbers = #tpu.dot_dimension_numbers<[1], [0], [0], [1], [0, 0, 1, 1], [], []>} : vector<8x1152xbf16>, vector<1152x256xbf16>, vector<8x256xf32> -> vector<8x256xf32>
    %35 = vector.broadcast %1 : vector<1x256xf32> to vector<8x256xf32>
    %36 = arith.mulf %34, %35 : vector<8x256xf32>
    %37 = vector.broadcast %2 : vector<1x256xf32> to vector<8x256xf32>
    %38 = arith.addf %36, %37 : vector<8x256xf32>
    %cst_20 = arith.constant 0.000000e+00 : f32
    %39 = vector.broadcast %cst_20 : f32 to vector<8x256xf32>
    %40 = arith.maximumf %38, %39 : vector<8x256xf32>
    %41 = arith.maximumf %31, %40 : vector<8x256xf32>
    %c0_21 = arith.constant 0 : index
    %c0_22 = arith.constant 0 : index
    %42 = vector.load %arg5[%c0_21, %c0_22] : memref<8x256xf32, #tpu.memory_space<vmem>>, vector<8x256xf32>
    tpu.vector_store %arg5[%c0_21, %c0_22], %41 {strides = array<i32>} : memref<8x256xf32, #tpu.memory_space<vmem>>, vector<8x256xf32>,
    return
  }
  func.func @transform_0(%arg0: i32) -> (i32, i32, i32) {
    %c0_i32 = arith.constant 0 : i32
    %c0_i32_0 = arith.constant 0 : i32
    %c0_i32_1 = arith.constant 0 : i32
    return %c0_i32, %arg0, %c0_i32_0 : i32, i32, i32
  }
  func.func @transform_1(%arg0: i32) -> (i32, i32) {
    %c0_i32 = arith.constant 0 : i32
    %c0_i32_0 = arith.constant 0 : i32
    %c0_i32_1 = arith.constant 0 : i32
    return %c0_i32, %c0_i32_0 : i32, i32
  }
  func.func @transform_2(%arg0: i32) -> (i32, i32) {
    %c0_i32 = arith.constant 0 : i32
    %c0_i32_0 = arith.constant 0 : i32
    %c0_i32_1 = arith.constant 0 : i32
    return %c0_i32, %c0_i32_0 : i32, i32
  }
  func.func @transform_3(%arg0: i32) -> (i32, i32) {
    %c0_i32 = arith.constant 0 : i32
    %c0_i32_0 = arith.constant 0 : i32
    %c0_i32_1 = arith.constant 0 : i32
    return %c0_i32, %c0_i32_0 : i32, i32
  }
  func.func @transform_4(%arg0: i32) -> (i32, i32) {
    %c0_i32 = arith.constant 0 : i32
    %c0_i32_0 = arith.constant 0 : i32
    return %arg0, %c0_i32 : i32, i32
  }
}

module attributes {stable_mosaic.version = 11 : i64} {
  func.func @head_kernel(%arg0: memref<2x128xbf16, #tpu.memory_space<vmem>>, %arg1: memref<128x256xbf16, #tpu.memory_space<vmem>>, %arg2: memref<1x256xf32, #tpu.memory_space<vmem>>, %arg3: memref<1x256xf32, #tpu.memory_space<vmem>>, %arg4: memref<1x256xf32, #tpu.memory_space<vmem>>, %arg5: memref<256x128xbf16, #tpu.memory_space<vmem>>, %arg6: memref<1x128xf32, #tpu.memory_space<vmem>>, %arg7: memref<2x256xf32, #tpu.memory_space<vmem>>, %arg8: memref<2x128xf32, #tpu.memory_space<vmem>>) attributes {dimension_semantics = [], scalar_prefetch = 0 : i64, scratch_operands = 0 : i64, tpu.core_type = #tpu.core_type<tc>} {
    %c0 = arith.constant 0 : index
    %c0_0 = arith.constant 0 : index
    %0 = vector.load %arg0[%c0, %c0_0] : memref<2x128xbf16, #tpu.memory_space<vmem>>, vector<2x128xbf16>
    %c0_1 = arith.constant 0 : index
    %c0_2 = arith.constant 0 : index
    %1 = vector.load %arg1[%c0_1, %c0_2] : memref<128x256xbf16, #tpu.memory_space<vmem>>, vector<128x256xbf16>
    %cst = arith.constant dense<0.000000e+00> : vector<2x256xf32>
    %2 = tpu.matmul %0, %1, %cst {dimension_numbers = #tpu.dot_dimension_numbers<[1], [0], [0], [1], [0, 0, 1, 1], [], []>} : vector<2x128xbf16>, vector<128x256xbf16>, vector<2x256xf32> -> vector<2x256xf32>
    %c0_3 = arith.constant 0 : index
    %c0_4 = arith.constant 0 : index
    %3 = vector.load %arg2[%c0_3, %c0_4] : memref<1x256xf32, #tpu.memory_space<vmem>>, vector<1x256xf32>
    %4 = vector.broadcast %3 : vector<1x256xf32> to vector<2x256xf32>
    %5 = arith.addf %2, %4 : vector<2x256xf32>
    %cst_5 = arith.constant dense<0.000000e+00> : vector<2xf32>
    %6 = vector.multi_reduction <add>, %5, %cst_5 [1] : vector<2x256xf32> to vector<2xf32>
    %7 = vector.shape_cast %6 : vector<2xf32> to vector<2x1xf32>
    %cst_6 = arith.constant 2.560000e+02 : f32
    %8 = vector.broadcast %cst_6 : f32 to vector<2x1xf32>
    %9 = arith.divf %7, %8 : vector<2x1xf32>
    %10 = arith.mulf %5, %5 : vector<2x256xf32>
    %cst_7 = arith.constant dense<0.000000e+00> : vector<2xf32>
    %11 = vector.multi_reduction <add>, %10, %cst_7 [1] : vector<2x256xf32> to vector<2xf32>
    %12 = vector.shape_cast %11 : vector<2xf32> to vector<2x1xf32>
    %cst_8 = arith.constant 2.560000e+02 : f32
    %13 = vector.broadcast %cst_8 : f32 to vector<2x1xf32>
    %14 = arith.divf %12, %13 : vector<2x1xf32>
    %15 = arith.mulf %9, %9 : vector<2x1xf32>
    %16 = arith.subf %14, %15 : vector<2x1xf32>
    %cst_9 = arith.constant 0.000000e+00 : f32
    %17 = vector.broadcast %cst_9 : f32 to vector<2x1xf32>
    %18 = arith.maximumf %16, %17 : vector<2x1xf32>
    %19 = vector.broadcast %9 : vector<2x1xf32> to vector<2x256xf32>
    %20 = arith.subf %5, %19 : vector<2x256xf32>
    %cst_10 = arith.constant 9.99999974E-6 : f32
    %21 = vector.broadcast %cst_10 : f32 to vector<2x1xf32>
    %22 = arith.addf %18, %21 : vector<2x1xf32>
    %23 = math.rsqrt %22 : vector<2x1xf32>
    %24 = vector.broadcast %23 : vector<2x1xf32> to vector<2x256xf32>
    %25 = arith.mulf %20, %24 : vector<2x256xf32>
    %c0_11 = arith.constant 0 : index
    %c0_12 = arith.constant 0 : index
    %26 = vector.load %arg3[%c0_11, %c0_12] : memref<1x256xf32, #tpu.memory_space<vmem>>, vector<1x256xf32>
    %27 = vector.broadcast %26 : vector<1x256xf32> to vector<2x256xf32>
    %28 = arith.mulf %25, %27 : vector<2x256xf32>
    %c0_13 = arith.constant 0 : index
    %c0_14 = arith.constant 0 : index
    %29 = vector.load %arg4[%c0_13, %c0_14] : memref<1x256xf32, #tpu.memory_space<vmem>>, vector<1x256xf32>
    %30 = vector.broadcast %29 : vector<1x256xf32> to vector<2x256xf32>
    %31 = arith.addf %28, %30 : vector<2x256xf32>
    %c0_15 = arith.constant 0 : index
    %c0_16 = arith.constant 0 : index
    %32 = vector.load %arg7[%c0_15, %c0_16] : memref<2x256xf32, #tpu.memory_space<vmem>>, vector<2x256xf32>
    tpu.vector_store %arg7[%c0_15, %c0_16], %31 {strides = array<i32>} : memref<2x256xf32, #tpu.memory_space<vmem>>, vector<2x256xf32>,
    %33 = arith.truncf %31 : vector<2x256xf32> to vector<2x256xbf16>
    %c0_17 = arith.constant 0 : index
    %c0_18 = arith.constant 0 : index
    %34 = vector.load %arg5[%c0_17, %c0_18] : memref<256x128xbf16, #tpu.memory_space<vmem>>, vector<256x128xbf16>
    %cst_19 = arith.constant dense<0.000000e+00> : vector<2x128xf32>
    %35 = tpu.matmul %33, %34, %cst_19 {dimension_numbers = #tpu.dot_dimension_numbers<[1], [0], [0], [1], [0, 0, 1, 1], [], []>} : vector<2x256xbf16>, vector<256x128xbf16>, vector<2x128xf32> -> vector<2x128xf32>
    %c0_20 = arith.constant 0 : index
    %c0_21 = arith.constant 0 : index
    %36 = vector.load %arg6[%c0_20, %c0_21] : memref<1x128xf32, #tpu.memory_space<vmem>>, vector<1x128xf32>
    %37 = vector.broadcast %36 : vector<1x128xf32> to vector<2x128xf32>
    %38 = arith.addf %35, %37 : vector<2x128xf32>
    %c0_22 = arith.constant 0 : index
    %c0_23 = arith.constant 0 : index
    %39 = vector.load %arg8[%c0_22, %c0_23] : memref<2x128xf32, #tpu.memory_space<vmem>>, vector<2x128xf32>
    tpu.vector_store %arg8[%c0_22, %c0_23], %38 {strides = array<i32>} : memref<2x128xf32, #tpu.memory_space<vmem>>, vector<2x128xf32>,
    return
  }
}

</mosaic_0001>

<llo_original>
// kernel: enn_forward.4
$region0: #{enn_forward.4}
  #allocation0 [shape = 'u32[]', space=smem, size = 0x4, offset = 0x4, fixed_abs, tag = 'smem constant byte address 0x4 - core index']
  #allocation1 [shape = 'u32[144,128]{1,0:T(1,128)}', space=vmem, size = 0x12000, scoped, tag = 'internal scratch']
  %s0 = inlined_call_operand.vmem [shape: bf16[4,128,32], index: 0, kind: input, shape index: {}]
  %s1 = inlined_call_operand.vmem [shape: bf16[32,128], index: 1, kind: input, shape index: {}]
  %s2 = inlined_call_operand.vmem [shape: f32[1,128], index: 2, kind: input, shape index: {}]
  %s3 = inlined_call_operand.vmem [shape: f32[1,128], index: 3, kind: input, shape index: {}]
  %s4 = inlined_call_operand.vmem [shape: f32[128,128], index: 4, kind: output, shape index: {}]
  %s5 = sld [smem:[#allocation0]]
  $region26: #{enn_forward.4} parent=0
    _
  %s7 = ssub.s32 1, %s5
  %s8 = scalar_select 0, %s7, %s5
  // Predicated region
  $region2: #{enn_forward.4} parent=0 // pred_check
    _
  $region3: #{enn_forward.4} parent=0 // pred_check_branch
    %10 = sbr.rel (0) target = $region5
  $region4: #{enn_forward.4} parent=0 // pred_region
    _
  $region5: #{enn_forward.4} parent=0 // pred_fallthru
    _
  // Predicated region
  $region6: #{enn_forward.4} parent=0 // pred_check
    _
  $region7: #{enn_forward.4} parent=0 // pred_check_branch
    %12 = sbr.rel (0) target = $region9
  $region8: #{enn_forward.4} parent=0 // pred_region
    _
  $region9: #{enn_forward.4} parent=0 // pred_fallthru
    _
  // Predicated region
  $region10: #{enn_forward.4} parent=0 // pred_check
    _
  $region11: #{enn_forward.4} parent=0 // pred_check_branch
    %14 = sbr.rel (0) target = $region13
  $region12: #{enn_forward.4} parent=0 // pred_region
    _
  $region13: #{enn_forward.4} parent=0 // pred_fallthru
    _
  // Predicated region
  $region14: #{enn_forward.4} parent=0 // pred_check
    _
  $region15: #{enn_forward.4} parent=0 // pred_check_branch
    %16 = sbr.rel (0) target = $region17
  $region16: #{enn_forward.4} parent=0 // pred_region
    _
  $region17: #{enn_forward.4} parent=0 // pred_fallthru
    _
  %v18 = vld [vmem:[%s1] sm:$0xf]
  %v19 = vld [vmem:[%s1 + $0x4] sm:$0xf]
  %v20 = vld [vmem:[%s1 + $0x8] sm:$0xf]
  %v21 = vld [vmem:[%s1 + $0xc] sm:$0xf]
  %v22 = vld [vmem:[%s2] sm:$0x1]
  %v23 = vld [vmem:[%s3] sm:$0x1]
  %v24 = vld [vmem:[%s0] sm:$0xf]
  %v25 = vld [vmem:[%s0 + $0x4] sm:$0xf]
  %v26 = vld [vmem:[%s0 + $0x8] sm:$0xf]
  %v27 = vld [vmem:[%s0 + $0xc] sm:$0xf]
  %v28 = vld [vmem:[%s0 + $0x10] sm:$0xf]
  %v29 = vld [vmem:[%s0 + $0x14] sm:$0xf]
  %v30 = vld [vmem:[%s0 + $0x18] sm:$0xf]
  %v31 = vld [vmem:[%s0 + $0x1c] sm:$0xf]
  %v32 = vld [vmem:[%s0 + $0x20] sm:$0xf]
  %v33 = vld [vmem:[%s0 + $0x24] sm:$0xf]
  %v34 = vld [vmem:[%s0 + $0x28] sm:$0xf]
  %v35 = vld [vmem:[%s0 + $0x2c] sm:$0xf]
  %v36 = vld [vmem:[%s0 + $0x30] sm:$0xf]
  %v37 = vld [vmem:[%s0 + $0x34] sm:$0xf]
  %v38 = vld [vmem:[%s0 + $0x38] sm:$0xf]
  %v39 = vld [vmem:[%s0 + $0x3c] sm:$0xf]
  %v56 = vunpack.c.l.b16 %v24
  %v57 = vunpack.c.l.b16 %v25
  %v58 = vunpack.c.l.b16 %v26
  %v59 = vunpack.c.l.b16 %v27
  %v60 = vunpack.c.l.b16 %v28
  %v61 = vunpack.c.l.b16 %v29
  %v62 = vunpack.c.l.b16 %v30
  %v63 = vunpack.c.l.b16 %v31
  %v64 = vunpack.c.l.b16 %v32
  %v65 = vunpack.c.l.b16 %v33
  %v66 = vunpack.c.l.b16 %v34
  %v67 = vunpack.c.l.b16 %v35
  %v68 = vunpack.c.l.b16 %v36
  %v69 = vunpack.c.l.b16 %v37
  %v70 = vunpack.c.l.b16 %v38
  %v71 = vunpack.c.l.b16 %v39
  %v72 = vpack.c.b16 %v57, %v56
  %v73 = vpack.c.b16 %v59, %v58
  %v74 = vpack.c.b16 %v61, %v60
  %v75 = vpack.c.b16 %v63, %v62
  %v76 = vpack.c.b16 %v65, %v64
  %v77 = vpack.c.b16 %v67, %v66
  %v78 = vpack.c.b16 %v69, %v68
  %v79 = vpack.c.b16 %v71, %v70
  %v84 = vunpack.c.l.b16 %v18
  %v85 = vunpack.c.l.b16 %v19
  %v86 = vunpack.c.l.b16 %v20
  %v87 = vunpack.c.l.b16 %v21
  %v88 = vpack.c.b16 %v85, %v84
  %v89 = vpack.c.b16 %v87, %v86
  %vm92 = vcmask 261120
  %v94 = vsel %vm92, %v72, 0
  %v97 = vsel %vm92, %v73, 0
  %v100 = vsel %vm92, %v74, 0
  %v103 = vsel %vm92, %v75, 0
  %v106 = vsel %vm92, %v76, 0
  %v109 = vsel %vm92, %v77, 0
  %v112 = vsel %vm92, %v78, 0
  %v115 = vsel %vm92, %v79, 0
  %117 = vmatprep.subr.bf16.mxu0 0
  %118 = vmatpush1.bf16.msra.mxu0 0
  %119 = vmatprep.subr.bf16.mxu0 0
  %120 = vmatpush1.bf16.msra.mxu0 0
  %121 = vmatprep.subr.bf16.mxu0 0
  %122 = vmatpush1.bf16.msra.mxu0 0
  %123 = vmatprep.subr.bf16.mxu0 0
  %124 = vmatpush1.bf16.msra.mxu0 0
  %125 = vmatprep.subr.bf16.mxu0 0
  %126 = vmatpush1.bf16.msra.mxu0 0
  %127 = vmatprep.subr.bf16.mxu0 0
  %128 = vmatpush1.bf16.msra.mxu0 0
  %129 = vmatprep.subr.bf16.mxu0 0
  %130 = vmatpush1.bf16.msra.mxu0 %v89
  %131 = vmatprep.subr.bf16.mxu0 0
  %132 = vmatpush1.bf16.msra.mxu0 %v88
  %133 = vmatprep.subr.bf16.mxu0 0
  %134 = vmatpush2.bf16.msra.mxu0 0
  %135 = vmatprep.subr.bf16.mxu0 0
  %136 = vmatpush2.bf16.msra.mxu0 0
  %137 = vmatprep.subr.bf16.mxu0 0
  %138 = vmatpush2.bf16.msra.mxu0 0
  %139 = vmatprep.subr.bf16.mxu0 0
  %140 = vmatpush2.bf16.msra.mxu0 0
  %141 = vmatprep.subr.bf16.mxu0 0
  %142 = vmatpush2.bf16.msra.mxu0 0
  %143 = vmatprep.subr.bf16.mxu0 0
  %144 = vmatpush2.bf16.msra.mxu0 0
  %145 = vmatprep.subr.bf16.mxu0 0
  %146 = vmatpush2.bf16.msra.mxu0 0
  %147 = vmatprep.subr.bf16.mxu0 0
  %148 = vmatpush2.bf16.msra.mxu0 0
  %149 = vmatprep.mubr.bf16.mxu0 0
  %150 = vmatmul.mubr.bf16.gmra.mxu0 %v94
  %v151 = vpop.f32.mrf.mxu0
  %v152 = vadd.f32 0.0, %v151
  %v153 = vpop.f32.mrf.mxu0
  %v154 = vpop.f32.mrf.mxu0
  %v155 = vadd.f32 0.0, %v154
  %v156 = vpop.f32.mrf.mxu0
  %157 = vmatprep.mubr.bf16.mxu0 0
  %158 = vmatmul.mubr.bf16.gmra.mxu0 %v97
  %v159 = vpop.f32.mrf.mxu0
  %v160 = vadd.f32 0.0, %v159
  %v161 = vpop.f32.mrf.mxu0
  %v162 = vpop.f32.mrf.mxu0
  %v163 = vadd.f32 0.0, %v162
  %v164 = vpop.f32.mrf.mxu0
  %165 = vmatprep.mubr.bf16.mxu0 0
  %166 = vmatmul.mubr.bf16.gmra.mxu0 %v100
  %v167 = vpop.f32.mrf.mxu0
  %v168 = vadd.f32 0.0, %v167
  %v169 = vpop.f32.mrf.mxu0
  %v170 = vpop.f32.mrf.mxu0
  %v171 = vadd.f32 0.0, %v170
  %v172 = vpop.f32.mrf.mxu0
  %173 = vmatprep.mubr.bf16.mxu0 0
  %174 = vmatmul.mubr.bf16.gmra.mxu0 %v103
  %v175 = vpop.f32.mrf.mxu0
  %v176 = vadd.f32 0.0, %v175
  %v177 = vpop.f32.mrf.mxu0
  %v178 = vpop.f32.mrf.mxu0
  %v179 = vadd.f32 0.0, %v178
  %v180 = vpop.f32.mrf.mxu0
  %181 = vmatprep.mubr.bf16.mxu0 0
  %182 = vmatmul.mubr.bf16.gmra.mxu0 %v106
  %v183 = vpop.f32.mrf.mxu0
  %v184 = vadd.f32 0.0, %v183
  %v185 = vpop.f32.mrf.mxu0
  %v186 = vpop.f32.mrf.mxu0
  %v187 = vadd.f32 0.0, %v186
  %v188 = vpop.f32.mrf.mxu0
  %189 = vmatprep.mubr.bf16.mxu0 0
  %190 = vmatmul.mubr.bf16.gmra.mxu0 %v109
  %v191 = vpop.f32.mrf.mxu0
  %v192 = vadd.f32 0.0, %v191
  %v193 = vpop.f32.mrf.mxu0
  %v194 = vpop.f32.mrf.mxu0
  %v195 = vadd.f32 0.0, %v194
  %v196 = vpop.f32.mrf.mxu0
  %197 = vmatprep.mubr.bf16.mxu0 0
  %198 = vmatmul.mubr.bf16.gmra.mxu0 %v112
  %v199 = vpop.f32.mrf.mxu0
  %v200 = vadd.f32 0.0, %v199
  %v201 = vpop.f32.mrf.mxu0
  %v202 = vpop.f32.mrf.mxu0
  %v203 = vadd.f32 0.0, %v202
  %v204 = vpop.f32.mrf.mxu0
  %205 = vmatprep.mubr.bf16.mxu0 0
  %206 = vmatmul.mubr.bf16.gmra.mxu0 %v115
  %v207 = vpop.f32.mrf.mxu0
  %v208 = vadd.f32 0.0, %v207
  %v209 = vpop.f32.mrf.mxu0
  %v210 = vpop.f32.mrf.mxu0
  %v211 = vadd.f32 0.0, %v210
  %v212 = vpop.f32.mrf.mxu0
  %213 = vdwg.mxu0
  %v215 = vlaneseq
  %v216 = vshrl.u32 %v215, 7
  %v217 = vsub.s32 0, %v216
  %v218 = vrot.slane %v22, %v217
  %v220 = vmul.f32 %v152, %v218
  %v221 = vmul.f32 %v155, %v218
  %v222 = vmul.f32 %v160, %v218
  %v223 = vmul.f32 %v163, %v218
  %v224 = vmul.f32 %v168, %v218
  %v225 = vmul.f32 %v171, %v218
  %v226 = vmul.f32 %v176, %v218
  %v227 = vmul.f32 %v179, %v218
  %v228 = vmul.f32 %v184, %v218
  %v229 = vmul.f32 %v187, %v218
  %v230 = vmul.f32 %v192, %v218
  %v231 = vmul.f32 %v195, %v218
  %v232 = vmul.f32 %v200, %v218
  %v233 = vmul.f32 %v203, %v218
  %v234 = vmul.f32 %v208, %v218
  %v235 = vmul.f32 %v211, %v218
  %v237 = vlaneseq
  %v238 = vshrl.u32 %v237, 7
  %v239 = vsub.s32 0, %v238
  %v240 = vrot.slane %v23, %v239
  %v242 = vadd.f32 %v220, %v240
  %v243 = vadd.f32 %v221, %v240
  %v244 = vadd.f32 %v222, %v240
  %v245 = vadd.f32 %v223, %v240
  %v246 = vadd.f32 %v224, %v240
  %v247 = vadd.f32 %v225, %v240
  %v248 = vadd.f32 %v226, %v240
  %v249 = vadd.f32 %v227, %v240
  %v250 = vadd.f32 %v228, %v240
  %v251 = vadd.f32 %v229, %v240
  %v252 = vadd.f32 %v230, %v240
  %v253 = vadd.f32 %v231, %v240
  %v254 = vadd.f32 %v232, %v240
  %v255 = vadd.f32 %v233, %v240
  %v256 = vadd.f32 %v234, %v240
  %v257 = vadd.f32 %v235, %v240
  %v258 = vmax.f32 %v242, 0.0
  %v259 = vmax.f32 %v243, 0.0
  %v260 = vmax.f32 %v244, 0.0
  %v261 = vmax.f32 %v245, 0.0
  %v262 = vmax.f32 %v246, 0.0
  %v263 = vmax.f32 %v247, 0.0
  %v264 = vmax.f32 %v248, 0.0
  %v265 = vmax.f32 %v249, 0.0
  %v266 = vmax.f32 %v250, 0.0
  %v267 = vmax.f32 %v251, 0.0
  %v268 = vmax.f32 %v252, 0.0
  %v269 = vmax.f32 %v253, 0.0
  %v270 = vmax.f32 %v254, 0.0
  %v271 = vmax.f32 %v255, 0.0
  %v272 = vmax.f32 %v256, 0.0
  %v273 = vmax.f32 %v257, 0.0
  %s274 = scalar_lea.vmem %s0, 64
  %v275 = vld [vmem:[%s274] sm:$0xf]
  %v276 = vld [vmem:[%s274 + $0x4] sm:$0xf]
  %v277 = vld [vmem:[%s274 + $0x8] sm:$0xf]
  %v278 = vld [vmem:[%s274 + $0xc] sm:$0xf]
  %v279 = vld [vmem:[%s274 + $0x10] sm:$0xf]
  %v280 = vld [vmem:[%s274 + $0x14] sm:$0xf]
  %v281 = vld [vmem:[%s274 + $0x18] sm:$0xf]
  %v282 = vld [vmem:[%s274 + $0x1c] sm:$0xf]
  %v283 = vld [vmem:[%s274 + $0x20] sm:$0xf]
  %v284 = vld [vmem:[%s274 + $0x24] sm:$0xf]
  %v285 = vld [vmem:[%s274 + $0x28] sm:$0xf]
  %v286 = vld [vmem:[%s274 + $0x2c] sm:$0xf]
  %v287 = vld [vmem:[%s274 + $0x30] sm:$0xf]
  %v288 = vld [vmem:[%s274 + $0x34] sm:$0xf]
  %v289 = vld [vmem:[%s274 + $0x38] sm:$0xf]
  %v290 = vld [vmem:[%s274 + $0x3c] sm:$0xf]
  %v307 = vunpack.c.l.b16 %v275
  %v308 = vunpack.c.l.b16 %v276
  %v309 = vunpack.c.l.b16 %v277
  %v310 = vunpack.c.l.b16 %v278
  %v311 = vunpack.c.l.b16 %v279
  %v312 = vunpack.c.l.b16 %v280
  %v313 = vunpack.c.l.b16 %v281
  %v314 = vunpack.c.l.b16 %v282
  %v315 = vunpack.c.l.b16 %v283
  %v316 = vunpack.c.l.b16 %v284
  %v317 = vunpack.c.l.b16 %v285
  %v318 = vunpack.c.l.b16 %v286
  %v319 = vunpack.c.l.b16 %v287
  %v320 = vunpack.c.l.b16 %v288
  %v321 = vunpack.c.l.b16 %v289
  %v322 = vunpack.c.l.b16 %v290
  %v323 = vpack.c.b16 %v308, %v307
  %v324 = vpack.c.b16 %v310, %v309
  %v325 = vpack.c.b16 %v312, %v311
  %v326 = vpack.c.b16 %v314, %v313
  %v327 = vpack.c.b16 %v316, %v315
  %v328 = vpack.c.b16 %v318, %v317
  %v329 = vpack.c.b16 %v320, %v319
  %v330 = vpack.c.b16 %v322, %v321
  %v332 = vsel %vm92, %v323, 0
  %v335 = vsel %vm92, %v324, 0
  %v338 = vsel %vm92, %v325, 0
  %v341 = vsel %vm92, %v326, 0
  %v344 = vsel %vm92, %v327, 0
  %v347 = vsel %vm92, %v328, 0
  %v350 = vsel %vm92, %v329, 0
  %v353 = vsel %vm92, %v330, 0
  %355 = vmatprep.subr.bf16.mxu0 0
  %356 = vmatpush1.bf16.msra.mxu0 0
  %357 = vmatprep.subr.bf16.mxu0 0
  %358 = vmatpush1.bf16.msra.mxu0 0
  %359 = vmatprep.subr.bf16.mxu0 0
  %360 = vmatpush1.bf16.msra.mxu0 0
  %361 = vmatprep.subr.bf16.mxu0 0
  %362 = vmatpush1.bf16.msra.mxu0 0
  %363 = vmatprep.subr.bf16.mxu0 0
  %364 = vmatpush1.bf16.msra.mxu0 0
  %365 = vmatprep.subr.bf16.mxu0 0
  %366 = vmatpush1.bf16.msra.mxu0 0
  %367 = vmatprep.subr.bf16.mxu0 0
  %368 = vmatpush1.bf16.msra.mxu0 %v89
  %369 = vmatprep.subr.bf16.mxu0 0
  %370 = vmatpush1.bf16.msra.mxu0 %v88
  %371 = vmatprep.subr.bf16.mxu0 0
  %372 = vmatpush2.bf16.msra.mxu0 0
  %373 = vmatprep.subr.bf16.mxu0 0
  %374 = vmatpush2.bf16.msra.mxu0 0
  %375 = vmatprep.subr.bf16.mxu0 0
  %376 = vmatpush2.bf16.msra.mxu0 0
  %377 = vmatprep.subr.bf16.mxu0 0
  %378 = vmatpush2.bf16.msra.mxu0 0
  %379 = vmatprep.subr.bf16.mxu0 0
  %380 = vmatpush2.bf16.msra.mxu0 0
  %381 = vmatprep.subr.bf16.mxu0 0
  %382 = vmatpush2.bf16.msra.mxu0 0
  %383 = vmatprep.subr.bf16.mxu0 0
  %384 = vmatpush2.bf16.msra.mxu0 0
  %385 = vmatprep.subr.bf16.mxu0 0
  %386 = vmatpush2.bf16.msra.mxu0 0
  %387 = vmatprep.mubr.bf16.mxu0 0
  %388 = vmatmul.mubr.bf16.gmra.mxu0 %v332
  %v389 = vpop.f32.mrf.mxu0
  %v390 = vadd.f32 0.0, %v389
  %v391 = vpop.f32.mrf.mxu0
  %v392 = vpop.f32.mrf.mxu0
  %v393 = vadd.f32 0.0, %v392
  %v394 = vpop.f32.mrf.mxu0
  %395 = vmatprep.mubr.bf16.mxu0 0
  %396 = vmatmul.mubr.bf16.gmra.mxu0 %v335
  %v397 = vpop.f32.mrf.mxu0
  %v398 = vadd.f32 0.0, %v397
  %v399 = vpop.f32.mrf.mxu0
  %v400 = vpop.f32.mrf.mxu0
  %v401 = vadd.f32 0.0, %v400
  %v402 = vpop.f32.mrf.mxu0
  %403 = vmatprep.mubr.bf16.mxu0 0
  %404 = vmatmul.mubr.bf16.gmra.mxu0 %v338
  %v405 = vpop.f32.mrf.mxu0
  %v406 = vadd.f32 0.0, %v405
  %v407 = vpop.f32.mrf.mxu0
  %v408 = vpop.f32.mrf.mxu0
  %v409 = vadd.f32 0.0, %v408
  %v410 = vpop.f32.mrf.mxu0
  %411 = vmatprep.mubr.bf16.mxu0 0
  %412 = vmatmul.mubr.bf16.gmra.mxu0 %v341
  %v413 = vpop.f32.mrf.mxu0
  %v414 = vadd.f32 0.0, %v413
  %v415 = vpop.f32.mrf.mxu0
  %v416 = vpop.f32.mrf.mxu0
  %v417 = vadd.f32 0.0, %v416
  %v418 = vpop.f32.mrf.mxu0
  %419 = vmatprep.mubr.bf16.mxu0 0
  %420 = vmatmul.mubr.bf16.gmra.mxu0 %v344
  %v421 = vpop.f32.mrf.mxu0
  %v422 = vadd.f32 0.0, %v421
  %v423 = vpop.f32.mrf.mxu0
  %v424 = vpop.f32.mrf.mxu0
  %v425 = vadd.f32 0.0, %v424
  %v426 = vpop.f32.mrf.mxu0
  %427 = vmatprep.mubr.bf16.mxu0 0
  %428 = vmatmul.mubr.bf16.gmra.mxu0 %v347
  %v429 = vpop.f32.mrf.mxu0
  %v430 = vadd.f32 0.0, %v429
  %v431 = vpop.f32.mrf.mxu0
  %v432 = vpop.f32.mrf.mxu0
  %v433 = vadd.f32 0.0, %v432
  %v434 = vpop.f32.mrf.mxu0
  %435 = vmatprep.mubr.bf16.mxu0 0
  %436 = vmatmul.mubr.bf16.gmra.mxu0 %v350
  %v437 = vpop.f32.mrf.mxu0
  %v438 = vadd.f32 0.0, %v437
  %v439 = vpop.f32.mrf.mxu0
  %v440 = vpop.f32.mrf.mxu0
  %v441 = vadd.f32 0.0, %v440
  %v442 = vpop.f32.mrf.mxu0
  %443 = vmatprep.mubr.bf16.mxu0 0
  %444 = vmatmul.mubr.bf16.gmra.mxu0 %v353
  %v445 = vpop.f32.mrf.mxu0
  %v446 = vadd.f32 0.0, %v445
  %v447 = vpop.f32.mrf.mxu0
  %v448 = vpop.f32.mrf.mxu0
  %v449 = vadd.f32 0.0, %v448
  %v450 = vpop.f32.mrf.mxu0
  %451 = vdwg.mxu0
  %v452 = vmul.f32 %v390, %v218
  %v453 = vmul.f32 %v393, %v218
  %v454 = vmul.f32 %v398, %v218
  %v455 = vmul.f32 %v401, %v218
  %v456 = vmul.f32 %v406, %v218
  %v457 = vmul.f32 %v409, %v218
  %v458 = vmul.f32 %v414, %v218
  %v459 = vmul.f32 %v417, %v218
  %v460 = vmul.f32 %v422, %v218
  %v461 = vmul.f32 %v425, %v218
  %v462 = vmul.f32 %v430, %v218
  %v463 = vmul.f32 %v433, %v218
  %v464 = vmul.f32 %v438, %v218
  %v465 = vmul.f32 %v441, %v218
  %v466 = vmul.f32 %v446, %v218
  %v467 = vmul.f32 %v449, %v218
  %v468 = vadd.f32 %v452, %v240
  %v469 = vadd.f32 %v453, %v240
  %v470 = vadd.f32 %v454, %v240
  %v471 = vadd.f32 %v455, %v240
  %v472 = vadd.f32 %v456, %v240
  %v473 = vadd.f32 %v457, %v240
  %v474 = vadd.f32 %v458, %v240
  %v475 = vadd.f32 %v459, %v240
  %v476 = vadd.f32 %v460, %v240
  %v477 = vadd.f32 %v461, %v240
  %v478 = vadd.f32 %v462, %v240
  %v479 = vadd.f32 %v463, %v240
  %v480 = vadd.f32 %v464, %v240
  %v481 = vadd.f32 %v465, %v240
  %v482 = vadd.f32 %v466, %v240
  %v483 = vadd.f32 %v467, %v240
  %v484 = vmax.f32 %v468, 0.0
  %v485 = vmax.f32 %v469, 0.0
  %v486 = vmax.f32 %v470, 0.0
  %v487 = vmax.f32 %v471, 0.0
  %v488 = vmax.f32 %v472, 0.0
  %v489 = vmax.f32 %v473, 0.0
  %v490 = vmax.f32 %v474, 0.0
  %v491 = vmax.f32 %v475, 0.0
  %v492 = vmax.f32 %v476, 0.0
  %v493 = vmax.f32 %v477, 0.0
  %v494 = vmax.f32 %v478, 0.0
  %v495 = vmax.f32 %v479, 0.0
  %v496 = vmax.f32 %v480, 0.0
  %v497 = vmax.f32 %v481, 0.0
  %v498 = vmax.f32 %v482, 0.0
  %v499 = vmax.f32 %v483, 0.0
  %v500 = vmax.f32 %v258, %v484
  %v501 = vmax.f32 %v259, %v485
  %v502 = vmax.f32 %v260, %v486
  %v503 = vmax.f32 %v261, %v487
  %v504 = vmax.f32 %v262, %v488
  %v505 = vmax.f32 %v263, %v489
  %v506 = vmax.f32 %v264, %v490
  %v507 = vmax.f32 %v265, %v491
  %v508 = vmax.f32 %v266, %v492
  %v509 = vmax.f32 %v267, %v493
  %v510 = vmax.f32 %v268, %v494
  %v511 = vmax.f32 %v269, %v495
  %v512 = vmax.f32 %v270, %v496
  %v513 = vmax.f32 %v271, %v497
  %v514 = vmax.f32 %v272, %v498
  %v515 = vmax.f32 %v273, %v499
  %s516 = scalar_lea.vmem %s0, 128
  %v517 = vld [vmem:[%s516] sm:$0xf]
  %v518 = vld [vmem:[%s516 + $0x4] sm:$0xf]
  %v519 = vld [vmem:[%s516 + $0x8] sm:$0xf]
  %v520 = vld [vmem:[%s516 + $0xc] sm:$0xf]
  %v521 = vld [vmem:[%s516 + $0x10] sm:$0xf]
  %v522 = vld [vmem:[%s516 + $0x14] sm:$0xf]
  %v523 = vld [vmem:[%s516 + $0x18] sm:$0xf]
  %v524 = vld [vmem:[%s516 + $0x1c] sm:$0xf]
  %v525 = vld [vmem:[%s516 + $0x20] sm:$0xf]
  %v526 = vld [vmem:[%s516 + $0x24] sm:$0xf]
  %v527 = vld [vmem:[%s516 + $0x28] sm:$0xf]
  %v528 = vld [vmem:[%s516 + $0x2c] sm:$0xf]
  %v529 = vld [vmem:[%s516 + $0x30] sm:$0xf]
  %v530 = vld [vmem:[%s516 + $0x34] sm:$0xf]
  %v531 = vld [vmem:[%s516 + $0x38] sm:$0xf]
  %v532 = vld [vmem:[%s516 + $0x3c] sm:$0xf]
  %v549 = vunpack.c.l.b16 %v517
  %v550 = vunpack.c.l.b16 %v518
  %v551 = vunpack.c.l.b16 %v519
  %v552 = vunpack.c.l.b16 %v520
  %v553 = vunpack.c.l.b16 %v521
  %v554 = vunpack.c.l.b16 %v522
  %v555 = vunpack.c.l.b16 %v523
  %v556 = vunpack.c.l.b16 %v524
  %v557 = vunpack.c.l.b16 %v525
  %v558 = vunpack.c.l.b16 %v526
  %v559 = vunpack.c.l.b16 %v527
  %v560 = vunpack.c.l.b16 %v528
  %v561 = vunpack.c.l.b16 %v529
  %v562 = vunpack.c.l.b16 %v530
  %v563 = vunpack.c.l.b16 %v531
  %v564 = vunpack.c.l.b16 %v532
  %v565 = vpack.c.b16 %v550, %v549
  %v566 = vpack.c.b16 %v552, %v551
  %v567 = vpack.c.b16 %v554, %v553
  %v568 = vpack.c.b16 %v556, %v555
  %v569 = vpack.c.b16 %v558, %v557
  %v570 = vpack.c.b16 %v560, %v559
  %v571 = vpack.c.b16 %v562, %v561
  %v572 = vpack.c.b16 %v564, %v563
  %v574 = vsel %vm92, %v565, 0
  %v577 = vsel %vm92, %v566, 0
  %v580 = vsel %vm92, %v567, 0
  %v583 = vsel %vm92, %v568, 0
  %v586 = vsel %vm92, %v569, 0
  %v589 = vsel %vm92, %v570, 0
  %v592 = vsel %vm92, %v571, 0
  %v595 = vsel %vm92, %v572, 0
  %597 = vmatprep.subr.bf16.mxu0 0
  %598 = vmatpush1.bf16.msra.mxu0 0
  %599 = vmatprep.subr.bf16.mxu0 0
  %600 = vmatpush1.bf16.msra.mxu0 0
  %601 = vmatprep.subr.bf16.mxu0 0
  %602 = vmatpush1.bf16.msra.mxu0 0
  %603 = vmatprep.subr.bf16.mxu0 0
  %604 = vmatpush1.bf16.msra.mxu0 0
  %605 = vmatprep.subr.bf16.mxu0 0
  %606 = vmatpush1.bf16.msra.mxu0 0
  %607 = vmatprep.subr.bf16.mxu0 0
  %608 = vmatpush1.bf16.msra.mxu0 0
  %609 = vmatprep.subr.bf16.mxu0 0
  %610 = vmatpush1.bf16.msra.mxu0 %v89
  %611 = vmatprep.subr.bf16.mxu0 0
  %612 = vmatpush1.bf16.msra.mxu0 %v88
  %613 = vmatprep.subr.bf16.mxu0 0
  %614 = vmatpush2.bf16.msra.mxu0 0
  %615 = vmatprep.subr.bf16.mxu0 0
  %616 = vmatpush2.bf16.msra.mxu0 0
  %617 = vmatprep.subr.bf16.mxu0 0
  %618 = vmatpush2.bf16.msra.mxu0 0
  %619 = vmatprep.subr.bf16.mxu0 0
  %620 = vmatpush2.bf16.msra.mxu0 0
  %621 = vmatprep.subr.bf16.mxu0 0
  %622 = vmatpush2.bf16.msra.mxu0 0
  %623 = vmatprep.subr.bf16.mxu0 0
  %624 = vmatpush2.bf16.msra.mxu0 0
  %625 = vmatprep.subr.bf16.mxu0 0
  %626 = vmatpush2.bf16.msra.mxu0 0
  %627 = vmatprep.subr.bf16.mxu0 0
  %628 = vmatpush2.bf16.msra.mxu0 0
  %629 = vmatprep.mubr.bf16.mxu0 0
  %630 = vmatmul.mubr.bf16.gmra.mxu0 %v574
  %v631 = vpop.f32.mrf.mxu0
  %v632 = vadd.f32 0.0, %v631
  %v633 = vpop.f32.mrf.mxu0
  %v634 = vpop.f32.mrf.mxu0
  %v635 = vadd.f32 0.0, %v634
  %v636 = vpop.f32.mrf.mxu0
  %637 = vmatprep.mubr.bf16.mxu0 0
  %638 = vmatmul.mubr.bf16.gmra.mxu0 %v577
  %v639 = vpop.f32.mrf.mxu0
  %v640 = vadd.f32 0.0, %v639
  %v641 = vpop.f32.mrf.mxu0
  %v642 = vpop.f32.mrf.mxu0
  %v643 = vadd.f32 0.0, %v642
  %v644 = vpop.f32.mrf.mxu0
  %645 = vmatprep.mubr.bf16.mxu0 0
  %646 = vmatmul.mubr.bf16.gmra.mxu0 %v580
  %v647 = vpop.f32.mrf.mxu0
  %v648 = vadd.f32 0.0, %v647
  %v649 = vpop.f32.mrf.mxu0
  %v650 = vpop.f32.mrf.mxu0
  %v651 = vadd.f32 0.0, %v650
  %v652 = vpop.f32.mrf.mxu0
  %653 = vmatprep.mubr.bf16.mxu0 0
  %654 = vmatmul.mubr.bf16.gmra.mxu0 %v583
  %v655 = vpop.f32.mrf.mxu0
  %v656 = vadd.f32 0.0, %v655
  %v657 = vpop.f32.mrf.mxu0
  %v658 = vpop.f32.mrf.mxu0
  %v659 = vadd.f32 0.0, %v658
  %v660 = vpop.f32.mrf.mxu0
  %661 = vmatprep.mubr.bf16.mxu0 0
  %662 = vmatmul.mubr.bf16.gmra.mxu0 %v586
  %v663 = vpop.f32.mrf.mxu0
  %v664 = vadd.f32 0.0, %v663
  %v665 = vpop.f32.mrf.mxu0
  %v666 = vpop.f32.mrf.mxu0
  %v667 = vadd.f32 0.0, %v666
  %v668 = vpop.f32.mrf.mxu0
  %669 = vmatprep.mubr.bf16.mxu0 0
  %670 = vmatmul.mubr.bf16.gmra.mxu0 %v589
  %v671 = vpop.f32.mrf.mxu0
  %v672 = vadd.f32 0.0, %v671
  %v673 = vpop.f32.mrf.mxu0
  %v674 = vpop.f32.mrf.mxu0
  %v675 = vadd.f32 0.0, %v674
  %v676 = vpop.f32.mrf.mxu0
  %677 = vmatprep.mubr.bf16.mxu0 0
  %678 = vmatmul.mubr.bf16.gmra.mxu0 %v592
  %v679 = vpop.f32.mrf.mxu0
  %v680 = vadd.f32 0.0, %v679
  %v681 = vpop.f32.mrf.mxu0
  %v682 = vpop.f32.mrf.mxu0
  %v683 = vadd.f32 0.0, %v682
  %v684 = vpop.f32.mrf.mxu0
  %685 = vmatprep.mubr.bf16.mxu0 0
  %686 = vmatmul.mubr.bf16.gmra.mxu0 %v595
  %v687 = vpop.f32.mrf.mxu0
  %v688 = vadd.f32 0.0, %v687
  %v689 = vpop.f32.mrf.mxu0
  %v690 = vpop.f32.mrf.mxu0
  %v691 = vadd.f32 0.0, %v690
  %v692 = vpop.f32.mrf.mxu0
  %693 = vdwg.mxu0
  %v694 = vmul.f32 %v632, %v218
  %v695 = vmul.f32 %v635, %v218
  %v696 = vmul.f32 %v640, %v218
  %v697 = vmul.f32 %v643, %v218
  %v698 = vmul.f32 %v648, %v218
  %v699 = vmul.f32 %v651, %v218
  %v700 = vmul.f32 %v656, %v218
  %v701 = vmul.f32 %v659, %v218
  %v702 = vmul.f32 %v664, %v218
  %v703 = vmul.f32 %v667, %v218
  %v704 = vmul.f32 %v672, %v218
  %v705 = vmul.f32 %v675, %v218
  %v706 = vmul.f32 %v680, %v218
  %v707 = vmul.f32 %v683, %v218
  %v708 = vmul.f32 %v688, %v218
  %v709 = vmul.f32 %v691, %v218
  %v710 = vadd.f32 %v694, %v240
  %v711 = vadd.f32 %v695, %v240
  %v712 = vadd.f32 %v696, %v240
  %v713 = vadd.f32 %v697, %v240
  %v714 = vadd.f32 %v698, %v240
  %v715 = vadd.f32 %v699, %v240
  %v716 = vadd.f32 %v700, %v240
  %v717 = vadd.f32 %v701, %v240
  %v718 = vadd.f32 %v702, %v240
  %v719 = vadd.f32 %v703, %v240
  %v720 = vadd.f32 %v704, %v240
  %v721 = vadd.f32 %v705, %v240
  %v722 = vadd.f32 %v706, %v240
  %v723 = vadd.f32 %v707, %v240
  %v724 = vadd.f32 %v708, %v240
  %v725 = vadd.f32 %v709, %v240
  %v726 = vmax.f32 %v710, 0.0
  %v727 = vmax.f32 %v711, 0.0
  %v728 = vmax.f32 %v712, 0.0
  %v729 = vmax.f32 %v713, 0.0
  %v730 = vmax.f32 %v714, 0.0
  %v731 = vmax.f32 %v715, 0.0
  %v732 = vmax.f32 %v716, 0.0
  %v733 = vmax.f32 %v717, 0.0
  %v734 = vmax.f32 %v718, 0.0
  %v735 = vmax.f32 %v719, 0.0
  %v736 = vmax.f32 %v720, 0.0
  %v737 = vmax.f32 %v721, 0.0
  %v738 = vmax.f32 %v722, 0.0
  %v739 = vmax.f32 %v723, 0.0
  %v740 = vmax.f32 %v724, 0.0
  %v741 = vmax.f32 %v725, 0.0
  %v742 = vmax.f32 %v500, %v726
  %v743 = vmax.f32 %v501, %v727
  %v744 = vmax.f32 %v502, %v728
  %v745 = vmax.f32 %v503, %v729
  %v746 = vmax.f32 %v504, %v730
  %v747 = vmax.f32 %v505, %v731
  %v748 = vmax.f32 %v506, %v732
  %v749 = vmax.f32 %v507, %v733
  %v750 = vmax.f32 %v508, %v734
  %v751 = vmax.f32 %v509, %v735
  %v752 = vmax.f32 %v510, %v736
  %v753 = vmax.f32 %v511, %v737
  %v754 = vmax.f32 %v512, %v738
  %v755 = vmax.f32 %v513, %v739
  %v756 = vmax.f32 %v514, %v740
  %v757 = vmax.f32 %v515, %v741
  %s758 = scalar_lea.vmem %s0, 192
  %v759 = vld [vmem:[%s758] sm:$0xf]
  %v760 = vld [vmem:[%s758 + $0x4] sm:$0xf]
  %v761 = vld [vmem:[%s758 + $0x8] sm:$0xf]
  %v762 = vld [vmem:[%s758 + $0xc] sm:$0xf]
  %v763 = vld [vmem:[%s758 + $0x10] sm:$0xf]
  %v764 = vld [vmem:[%s758 + $0x14] sm:$0xf]
  %v765 = vld [vmem:[%s758 + $0x18] sm:$0xf]
  %v766 = vld [vmem:[%s758 + $0x1c] sm:$0xf]
  %v767 = vld [vmem:[%s758 + $0x20] sm:$0xf]
  %v768 = vld [vmem:[%s758 + $0x24] sm:$0xf]
  %v769 = vld [vmem:[%s758 + $0x28] sm:$0xf]
  %v770 = vld [vmem:[%s758 + $0x2c] sm:$0xf]
  %v771 = vld [vmem:[%s758 + $0x30] sm:$0xf]
  %v772 = vld [vmem:[%s758 + $0x34] sm:$0xf]
  %v773 = vld [vmem:[%s758 + $0x38] sm:$0xf]
  %v774 = vld [vmem:[%s758 + $0x3c] sm:$0xf]
  %v791 = vunpack.c.l.b16 %v759
  %v792 = vunpack.c.l.b16 %v760
  %v793 = vunpack.c.l.b16 %v761
  %v794 = vunpack.c.l.b16 %v762
  %v795 = vunpack.c.l.b16 %v763
  %v796 = vunpack.c.l.b16 %v764
  %v797 = vunpack.c.l.b16 %v765
  %v798 = vunpack.c.l.b16 %v766
  %v799 = vunpack.c.l.b16 %v767
  %v800 = vunpack.c.l.b16 %v768
  %v801 = vunpack.c.l.b16 %v769
  %v802 = vunpack.c.l.b16 %v770
  %v803 = vunpack.c.l.b16 %v771
  %v804 = vunpack.c.l.b16 %v772
  %v805 = vunpack.c.l.b16 %v773
  %v806 = vunpack.c.l.b16 %v774
  %v807 = vpack.c.b16 %v792, %v791
  %v808 = vpack.c.b16 %v794, %v793
  %v809 = vpack.c.b16 %v796, %v795
  %v810 = vpack.c.b16 %v798, %v797
  %v811 = vpack.c.b16 %v800, %v799
  %v812 = vpack.c.b16 %v802, %v801
  %v813 = vpack.c.b16 %v804, %v803
  %v814 = vpack.c.b16 %v806, %v805
  %v816 = vsel %vm92, %v807, 0
  %v819 = vsel %vm92, %v808, 0
  %v822 = vsel %vm92, %v809, 0
  %v825 = vsel %vm92, %v810, 0
  %v828 = vsel %vm92, %v811, 0
  %v831 = vsel %vm92, %v812, 0
  %v834 = vsel %vm92, %v813, 0
  %v837 = vsel %vm92, %v814, 0
  %839 = vmatprep.subr.bf16.mxu0 0
  %840 = vmatpush1.bf16.msra.mxu0 0
  %841 = vmatprep.subr.bf16.mxu0 0
  %842 = vmatpush1.bf16.msra.mxu0 0
  %843 = vmatprep.subr.bf16.mxu0 0
  %844 = vmatpush1.bf16.msra.mxu0 0
  %845 = vmatprep.subr.bf16.mxu0 0
  %846 = vmatpush1.bf16.msra.mxu0 0
  %847 = vmatprep.subr.bf16.mxu0 0
  %848 = vmatpush1.bf16.msra.mxu0 0
  %849 = vmatprep.subr.bf16.mxu0 0
  %850 = vmatpush1.bf16.msra.mxu0 0
  %851 = vmatprep.subr.bf16.mxu0 0
  %852 = vmatpush1.bf16.msra.mxu0 %v89
  %853 = vmatprep.subr.bf16.mxu0 0
  %854 = vmatpush1.bf16.msra.mxu0 %v88
  %855 = vmatprep.subr.bf16.mxu0 0
  %856 = vmatpush2.bf16.msra.mxu0 0
  %857 = vmatprep.subr.bf16.mxu0 0
  %858 = vmatpush2.bf16.msra.mxu0 0
  %859 = vmatprep.subr.bf16.mxu0 0
  %860 = vmatpush2.bf16.msra.mxu0 0
  %861 = vmatprep.subr.bf16.mxu0 0
  %862 = vmatpush2.bf16.msra.mxu0 0
  %863 = vmatprep.subr.bf16.mxu0 0
  %864 = vmatpush2.bf16.msra.mxu0 0
  %865 = vmatprep.subr.bf16.mxu0 0
  %866 = vmatpush2.bf16.msra.mxu0 0
  %867 = vmatprep.subr.bf16.mxu0 0
  %868 = vmatpush2.bf16.msra.mxu0 0
  %869 = vmatprep.subr.bf16.mxu0 0
  %870 = vmatpush2.bf16.msra.mxu0 0
  %871 = vmatprep.mubr.bf16.mxu0 0
  %872 = vmatmul.mubr.bf16.gmra.mxu0 %v816
  %v873 = vpop.f32.mrf.mxu0
  %v874 = vadd.f32 0.0, %v873
  %v875 = vpop.f32.mrf.mxu0
  %v876 = vpop.f32.mrf.mxu0
  %v877 = vadd.f32 0.0, %v876
  %v878 = vpop.f32.mrf.mxu0
  %879 = vmatprep.mubr.bf16.mxu0 0
  %880 = vmatmul.mubr.bf16.gmra.mxu0 %v819
  %v881 = vpop.f32.mrf.mxu0
  %v882 = vadd.f32 0.0, %v881
  %v883 = vpop.f32.mrf.mxu0
  %v884 = vpop.f32.mrf.mxu0
  %v885 = vadd.f32 0.0, %v884
  %v886 = vpop.f32.mrf.mxu0
  %887 = vmatprep.mubr.bf16.mxu0 0
  %888 = vmatmul.mubr.bf16.gmra.mxu0 %v822
  %v889 = vpop.f32.mrf.mxu0
  %v890 = vadd.f32 0.0, %v889
  %v891 = vpop.f32.mrf.mxu0
  %v892 = vpop.f32.mrf.mxu0
  %v893 = vadd.f32 0.0, %v892
  %v894 = vpop.f32.mrf.mxu0
  %895 = vmatprep.mubr.bf16.mxu0 0
  %896 = vmatmul.mubr.bf16.gmra.mxu0 %v825
  %v897 = vpop.f32.mrf.mxu0
  %v898 = vadd.f32 0.0, %v897
  %v899 = vpop.f32.mrf.mxu0
  %v900 = vpop.f32.mrf.mxu0
  %v901 = vadd.f32 0.0, %v900
  %v902 = vpop.f32.mrf.mxu0
  %903 = vmatprep.mubr.bf16.mxu0 0
  %904 = vmatmul.mubr.bf16.gmra.mxu0 %v828
  %v905 = vpop.f32.mrf.mxu0
  %v906 = vadd.f32 0.0, %v905
  %v907 = vpop.f32.mrf.mxu0
  %v908 = vpop.f32.mrf.mxu0
  %v909 = vadd.f32 0.0, %v908
  %v910 = vpop.f32.mrf.mxu0
  %911 = vmatprep.mubr.bf16.mxu0 0
  %912 = vmatmul.mubr.bf16.gmra.mxu0 %v831
  %v913 = vpop.f32.mrf.mxu0
  %v914 = vadd.f32 0.0, %v913
  %v915 = vpop.f32.mrf.mxu0
  %v916 = vpop.f32.mrf.mxu0
  %v917 = vadd.f32 0.0, %v916
  %v918 = vpop.f32.mrf.mxu0
  %919 = vmatprep.mubr.bf16.mxu0 0
  %920 = vmatmul.mubr.bf16.gmra.mxu0 %v834
  %v921 = vpop.f32.mrf.mxu0
  %v922 = vadd.f32 0.0, %v921
  %v923 = vpop.f32.mrf.mxu0
  %v924 = vpop.f32.mrf.mxu0
  %v925 = vadd.f32 0.0, %v924
  %v926 = vpop.f32.mrf.mxu0
  %927 = vmatprep.mubr.bf16.mxu0 0
  %928 = vmatmul.mubr.bf16.gmra.mxu0 %v837
  %v929 = vpop.f32.mrf.mxu0
  %v930 = vadd.f32 0.0, %v929
  %v931 = vpop.f32.mrf.mxu0
  %v932 = vpop.f32.mrf.mxu0
  %v933 = vadd.f32 0.0, %v932
  %v934 = vpop.f32.mrf.mxu0
  %935 = vdwg.mxu0
  %v936 = vmul.f32 %v874, %v218
  %v937 = vmul.f32 %v877, %v218
  %v938 = vmul.f32 %v882, %v218
  %v939 = vmul.f32 %v885, %v218
  %v940 = vmul.f32 %v890, %v218
  %v941 = vmul.f32 %v893, %v218
  %v942 = vmul.f32 %v898, %v218
  %v943 = vmul.f32 %v901, %v218
  %v944 = vmul.f32 %v906, %v218
  %v945 = vmul.f32 %v909, %v218
  %v946 = vmul.f32 %v914, %v218
  %v947 = vmul.f32 %v917, %v218
  %v948 = vmul.f32 %v922, %v218
  %v949 = vmul.f32 %v925, %v218
  %v950 = vmul.f32 %v930, %v218
  %v951 = vmul.f32 %v933, %v218
  %v952 = vadd.f32 %v936, %v240
  %v953 = vadd.f32 %v937, %v240
  %v954 = vadd.f32 %v938, %v240
  %v955 = vadd.f32 %v939, %v240
  %v956 = vadd.f32 %v940, %v240
  %v957 = vadd.f32 %v941, %v240
  %v958 = vadd.f32 %v942, %v240
  %v959 = vadd.f32 %v943, %v240
  %v960 = vadd.f32 %v944, %v240
  %v961 = vadd.f32 %v945, %v240
  %v962 = vadd.f32 %v946, %v240
  %v963 = vadd.f32 %v947, %v240
  %v964 = vadd.f32 %v948, %v240
  %v965 = vadd.f32 %v949, %v240
  %v966 = vadd.f32 %v950, %v240
  %v967 = vadd.f32 %v951, %v240
  %v968 = vmax.f32 %v952, 0.0
  %v969 = vmax.f32 %v953, 0.0
  %v970 = vmax.f32 %v954, 0.0
  %v971 = vmax.f32 %v955, 0.0
  %v972 = vmax.f32 %v956, 0.0
  %v973 = vmax.f32 %v957, 0.0
  %v974 = vmax.f32 %v958, 0.0
  %v975 = vmax.f32 %v959, 0.0
  %v976 = vmax.f32 %v960, 0.0
  %v977 = vmax.f32 %v961, 0.0
  %v978 = vmax.f32 %v962, 0.0
  %v979 = vmax.f32 %v963, 0.0
  %v980 = vmax.f32 %v964, 0.0
  %v981 = vmax.f32 %v965, 0.0
  %v982 = vmax.f32 %v966, 0.0
  %v983 = vmax.f32 %v967, 0.0
  %v984 = vmax.f32 %v742, %v968
  %v985 = vmax.f32 %v743, %v969
  %v986 = vmax.f32 %v744, %v970
  %v987 = vmax.f32 %v745, %v971
  %v988 = vmax.f32 %v746, %v972
  %v989 = vmax.f32 %v747, %v973
  %v990 = vmax.f32 %v748, %v974
  %v991 = vmax.f32 %v749, %v975
  %v992 = vmax.f32 %v750, %v976
  %v993 = vmax.f32 %v751, %v977
  %v994 = vmax.f32 %v752, %v978
  %v995 = vmax.f32 %v753, %v979
  %v996 = vmax.f32 %v754, %v980
  %v997 = vmax.f32 %v755, %v981
  %v998 = vmax.f32 %v756, %v982
  %v999 = vmax.f32 %v757, %v983
  %1000 = vst [vmem:[%s4] sm:$0xff] %v984
  %1001 = vst [vmem:[%s4 + $0x8] sm:$0xff] %v985
  %1002 = vst [vmem:[%s4 + $0x10] sm:$0xff] %v986
  %1003 = vst [vmem:[%s4 + $0x18] sm:$0xff] %v987
  %1004 = vst [vmem:[%s4 + $0x20] sm:$0xff] %v988
  %1005 = vst [vmem:[%s4 + $0x28] sm:$0xff] %v989
  %1006 = vst [vmem:[%s4 + $0x30] sm:$0xff] %v990
  %1007 = vst [vmem:[%s4 + $0x38] sm:$0xff] %v991
  %1008 = vst [vmem:[%s4 + $0x40] sm:$0xff] %v992
  %1009 = vst [vmem:[%s4 + $0x48] sm:$0xff] %v993
  %1010 = vst [vmem:[%s4 + $0x50] sm:$0xff] %v994
  %1011 = vst [vmem:[%s4 + $0x58] sm:$0xff] %v995
  %1012 = vst [vmem:[%s4 + $0x60] sm:$0xff] %v996
  %1013 = vst [vmem:[%s4 + $0x68] sm:$0xff] %v997
  %1014 = vst [vmem:[%s4 + $0x70] sm:$0xff] %v998
  %1015 = vst [vmem:[%s4 + $0x78] sm:$0xff] %v999
  // Predicated region
  $region18: #{enn_forward.4} parent=0 // pred_check
    _
  $region19: #{enn_forward.4} parent=0 // pred_check_branch
    %1017 = sbr.rel (0) target = $region21
  $region20: #{enn_forward.4} parent=0 // pred_region
    _
  $region21: #{enn_forward.4} parent=0 // pred_fallthru
    _
  // Predicated region
  $region22: #{enn_forward.4} parent=0 // pred_check
    _
  $region23: #{enn_forward.4} parent=0 // pred_check_branch
    %1019 = sbr.rel (0) target = $region25
  $region24: #{enn_forward.4} parent=0 // pred_region
    _
  $region25: #{enn_forward.4} parent=0 // pred_fallthru
    _

// kernel: enn_forward.5
$region0: #{enn_forward.5}
  #allocation0 [shape = 'u32[]', space=smem, size = 0x4, offset = 0x4, fixed_abs, tag = 'smem constant byte address 0x4 - core index']
  #allocation1 [shape = 'u32[144,128]{1,0:T(1,128)}', space=vmem, size = 0x12000, scoped, tag = 'internal scratch']
  %s0 = inlined_call_operand.vmem [shape: bf16[4,32,1152], index: 0, kind: input, shape index: {}]
  %s1 = inlined_call_operand.vmem [shape: bf16[1152,128], index: 1, kind: input, shape index: {}]
  %s2 = inlined_call_operand.vmem [shape: f32[1,128], index: 2, kind: input, shape index: {}]
  %s3 = inlined_call_operand.vmem [shape: f32[1,128], index: 3, kind: input, shape index: {}]
  %s4 = inlined_call_operand.vmem [shape: f32[32,128], index: 4, kind: output, shape index: {}]
  %s5 = sld [smem:[#allocation0]]
  $region26: #{enn_forward.5} parent=0
    _
  %s7 = ssub.s32 1, %s5
  %s8 = scalar_select 0, %s7, %s5
  // Predicated region
  $region2: #{enn_forward.5} parent=0 // pred_check
    _
  $region3: #{enn_forward.5} parent=0 // pred_check_branch
    %10 = sbr.rel (0) target = $region5
  $region4: #{enn_forward.5} parent=0 // pred_region
    _
  $region5: #{enn_forward.5} parent=0 // pred_fallthru
    _
  // Predicated region
  $region6: #{enn_forward.5} parent=0 // pred_check
    _
  $region7: #{enn_forward.5} parent=0 // pred_check_branch
    %12 = sbr.rel (0) target = $region9
  $region8: #{enn_forward.5} parent=0 // pred_region
    _
  $region9: #{enn_forward.5} parent=0 // pred_fallthru
    _
  // Predicated region
  $region10: #{enn_forward.5} parent=0 // pred_check
    _
  $region11: #{enn_forward.5} parent=0 // pred_check_branch
    %14 = sbr.rel (0) target = $region13
  $region12: #{enn_forward.5} parent=0 // pred_region
    _
  $region13: #{enn_forward.5} parent=0 // pred_fallthru
    _
  // Predicated region
  $region14: #{enn_forward.5} parent=0 // pred_check
    _
  $region15: #{enn_forward.5} parent=0 // pred_check_branch
    %16 = sbr.rel (0) target = $region17
  $region16: #{enn_forward.5} parent=0 // pred_region
    _
  $region17: #{enn_forward.5} parent=0 // pred_fallthru
    _
  %v18 = vld [vmem:[%s1] sm:$0xf]
  %v19 = vld [vmem:[%s1 + $0x4] sm:$0xf]
  %v20 = vld [vmem:[%s1 + $0x8] sm:$0xf]
  %v21 = vld [vmem:[%s1 + $0xc] sm:$0xf]
  %v22 = vld [vmem:[%s1 + $0x10] sm:$0xf]
  %v23 = vld [vmem:[%s1 + $0x14] sm:$0xf]
  %v24 = vld [vmem:[%s1 + $0x18] sm:$0xf]
  %v25 = vld [vmem:[%s1 + $0x1c] sm:$0xf]
  %v26 = vld [vmem:[%s1 + $0x20] sm:$0xf]
  %v27 = vld [vmem:[%s1 + $0x24] sm:$0xf]
  %v28 = vld [vmem:[%s1 + $0x28] sm:$0xf]
  %v29 = vld [vmem:[%s1 + $0x2c] sm:$0xf]
  %v30 = vld [vmem:[%s1 + $0x30] sm:$0xf]
  %v31 = vld [vmem:[%s1 + $0x34] sm:$0xf]
  %v32 = vld [vmem:[%s1 + $0x38] sm:$0xf]
  %v33 = vld [vmem:[%s1 + $0x3c] sm:$0xf]
  %v34 = vld [vmem:[%s1 + $0x40] sm:$0xf]
  %v35 = vld [vmem:[%s1 + $0x44] sm:$0xf]
  %v36 = vld [vmem:[%s1 + $0x48] sm:$0xf]
  %v37 = vld [vmem:[%s1 + $0x4c] sm:$0xf]
  %v38 = vld [vmem:[%s1 + $0x50] sm:$0xf]
  %v39 = vld [vmem:[%s1 + $0x54] sm:$0xf]
  %v40 = vld [vmem:[%s1 + $0x58] sm:$0xf]
  %v41 = vld [vmem:[%s1 + $0x5c] sm:$0xf]
  %v42 = vld [vmem:[%s1 + $0x60] sm:$0xf]
  %v43 = vld [vmem:[%s1 + $0x64] sm:$0xf]
  %v44 = vld [vmem:[%s1 + $0x68] sm:$0xf]
  %v45 = vld [vmem:[%s1 + $0x6c] sm:$0xf]
  %v46 = vld [vmem:[%s1 + $0x70] sm:$0xf]
  %v47 = vld [vmem:[%s1 + $0x74] sm:$0xf]
  %v48 = vld [vmem:[%s1 + $0x78] sm:$0xf]
  %v49 = vld [vmem:[%s1 + $0x7c] sm:$0xf]
  %v50 = vld [vmem:[%s1 + $0x80] sm:$0xf]
  %v51 = vld [vmem:[%s1 + $0x84] sm:$0xf]
  %v52 = vld [vmem:[%s1 + $0x88] sm:$0xf]
  %v53 = vld [vmem:[%s1 + $0x8c] sm:$0xf]
  %v54 = vld [vmem:[%s1 + $0x90] sm:$0xf]
  %v55 = vld [vmem:[%s1 + $0x94] sm:$0xf]
  %v56 = vld [vmem:[%s1 + $0x98] sm:$0xf]
  %v57 = vld [vmem:[%s1 + $0x9c] sm:$0xf]
  %v58 = vld [vmem:[%s1 + $0xa0] sm:$0xf]
  %v59 = vld [vmem:[%s1 + $0xa4] sm:$0xf]
  %v60 = vld [vmem:[%s1 + $0xa8] sm:$0xf]
  %v61 = vld [vmem:[%s1 + $0xac] sm:$0xf]
  %v62 = vld [vmem:[%s1 + $0xb0] sm:$0xf]
  %v63 = vld [vmem:[%s1 + $0xb4] sm:$0xf]
  %v64 = vld [vmem:[%s1 + $0xb8] sm:$0xf]
  %v65 = vld [vmem:[%s1 + $0xbc] sm:$0xf]
  %v66 = vld [vmem:[%s1 + $0xc0] sm:$0xf]
  %v67 = vld [vmem:[%s1 + $0xc4] sm:$0xf]
  %v68 = vld [vmem:[%s1 + $0xc8] sm:$0xf]
  %v69 = vld [vmem:[%s1 + $0xcc] sm:$0xf]
  %v70 = vld [vmem:[%s1 + $0xd0] sm:$0xf]
  %v71 = vld [vmem:[%s1 + $0xd4] sm:$0xf]
  %v72 = vld [vmem:[%s1 + $0xd8] sm:$0xf]
  %v73 = vld [vmem:[%s1 + $0xdc] sm:$0xf]
  %v74 = vld [vmem:[%s1 + $0xe0] sm:$0xf]
  %v75 = vld [vmem:[%s1 + $0xe4] sm:$0xf]
  %v76 = vld [vmem:[%s1 + $0xe8] sm:$0xf]
  %v77 = vld [vmem:[%s1 + $0xec] sm:$0xf]
  %v78 = vld [vmem:[%s1 + $0xf0] sm:$0xf]
  %v79 = vld [vmem:[%s1 + $0xf4] sm:$0xf]
  %v80 = vld [vmem:[%s1 + $0xf8] sm:$0xf]
  %v81 = vld [vmem:[%s1 + $0xfc] sm:$0xf]
  %v82 = vld [vmem:[%s1 + $0x100] sm:$0xf]
  %v83 = vld [vmem:[%s1 + $0x104] sm:$0xf]
  %v84 = vld [vmem:[%s1 + $0x108] sm:$0xf]
  %v85 = vld [vmem:[%s1 + $0x10c] sm:$0xf]
  %v86 = vld [vmem:[%s1 + $0x110] sm:$0xf]
  %v87 = vld [vmem:[%s1 + $0x114] sm:$0xf]
  %v88 = vld [vmem:[%s1 + $0x118] sm:$0xf]
  %v89 = vld [vmem:[%s1 + $0x11c] sm:$0xf]
  %v90 = vld [vmem:[%s1 + $0x120] sm:$0xf]
  %v91 = vld [vmem:[%s1 + $0x124] sm:$0xf]
  %v92 = vld [vmem:[%s1 + $0x128] sm:$0xf]
  %v93 = vld [vmem:[%s1 + $0x12c] sm:$0xf]
  %v94 = vld [vmem:[%s1 + $0x130] sm:$0xf]
  %v95 = vld [vmem:[%s1 + $0x134] sm:$0xf]
  %v96 = vld [vmem:[%s1 + $0x138] sm:$0xf]
  %v97 = vld [vmem:[%s1 + $0x13c] sm:$0xf]
  %v98 = vld [vmem:[%s1 + $0x140] sm:$0xf]
  %v99 = vld [vmem:[%s1 + $0x144] sm:$0xf]
  %v100 = vld [vmem:[%s1 + $0x148] sm:$0xf]
  %v101 = vld [vmem:[%s1 + $0x14c] sm:$0xf]
  %v102 = vld [vmem:[%s1 + $0x150] sm:$0xf]
  %v103 = vld [vmem:[%s1 + $0x154] sm:$0xf]
  %v104 = vld [vmem:[%s1 + $0x158] sm:$0xf]
  %v105 = vld [vmem:[%s1 + $0x15c] sm:$0xf]
  %v106 = vld [vmem:[%s1 + $0x160] sm:$0xf]
  %v107 = vld [vmem:[%s1 + $0x164] sm:$0xf]
  %v108 = vld [vmem:[%s1 + $0x168] sm:$0xf]
  %v109 = vld [vmem:[%s1 + $0x16c] sm:$0xf]
  %v110 = vld [vmem:[%s1 + $0x170] sm:$0xf]
  %v111 = vld [vmem:[%s1 + $0x174] sm:$0xf]
  %v112 = vld [vmem:[%s1 + $0x178] sm:$0xf]
  %v113 = vld [vmem:[%s1 + $0x17c] sm:$0xf]
  %v114 = vld [vmem:[%s1 + $0x180] sm:$0xf]
  %v115 = vld [vmem:[%s1 + $0x184] sm:$0xf]
  %v116 = vld [vmem:[%s1 + $0x188] sm:$0xf]
  %v117 = vld [vmem:[%s1 + $0x18c] sm:$0xf]
  %v118 = vld [vmem:[%s1 + $0x190] sm:$0xf]
  %v119 = vld [vmem:[%s1 + $0x194] sm:$0xf]
  %v120 = vld [vmem:[%s1 + $0x198] sm:$0xf]
  %v121 = vld [vmem:[%s1 + $0x19c] sm:$0xf]
  %v122 = vld [vmem:[%s1 + $0x1a0] sm:$0xf]
  %v123 = vld [vmem:[%s1 + $0x1a4] sm:$0xf]
  %v124 = vld [vmem:[%s1 + $0x1a8] sm:$0xf]
  %v125 = vld [vmem:[%s1 + $0x1ac] sm:$0xf]
  %v126 = vld [vmem:[%s1 + $0x1b0] sm:$0xf]
  %v127 = vld [vmem:[%s1 + $0x1b4] sm:$0xf]
  %v128 = vld [vmem:[%s1 + $0x1b8] sm:$0xf]
  %v129 = vld [vmem:[%s1 + $0x1bc] sm:$0xf]
  %v130 = vld [vmem:[%s1 + $0x1c0] sm:$0xf]
  %v131 = vld [vmem:[%s1 + $0x1c4] sm:$0xf]
  %v132 = vld [vmem:[%s1 + $0x1c8] sm:$0xf]
  %v133 = vld [vmem:[%s1 + $0x1cc] sm:$0xf]
  %v134 = vld [vmem:[%s1 + $0x1d0] sm:$0xf]
  %v135 = vld [vmem:[%s1 + $0x1d4] sm:$0xf]
  %v136 = vld [vmem:[%s1 + $0x1d8] sm:$0xf]
  %v137 = vld [vmem:[%s1 + $0x1dc] sm:$0xf]
  %v138 = vld [vmem:[%s1 + $0x1e0] sm:$0xf]
  %v139 = vld [vmem:[%s1 + $0x1e4] sm:$0xf]
  %v140 = vld [vmem:[%s1 + $0x1e8] sm:$0xf]
  %v141 = vld [vmem:[%s1 + $0x1ec] sm:$0xf]
  %v142 = vld [vmem:[%s1 + $0x1f0] sm:$0xf]
  %v143 = vld [vmem:[%s1 + $0x1f4] sm:$0xf]
  %v144 = vld [vmem:[%s1 + $0x1f8] sm:$0xf]
  %v145 = vld [vmem:[%s1 + $0x1fc] sm:$0xf]
  %v146 = vld [vmem:[%s1 + $0x200] sm:$0xf]
  %v147 = vld [vmem:[%s1 + $0x204] sm:$0xf]
  %v148 = vld [vmem:[%s1 + $0x208] sm:$0xf]
  %v149 = vld [vmem:[%s1 + $0x20c] sm:$0xf]
  %v150 = vld [vmem:[%s1 + $0x210] sm:$0xf]
  %v151 = vld [vmem:[%s1 + $0x214] sm:$0xf]
  %v152 = vld [vmem:[%s1 + $0x218] sm:$0xf]
  %v153 = vld [vmem:[%s1 + $0x21c] sm:$0xf]
  %v154 = vld [vmem:[%s1 + $0x220] sm:$0xf]
  %v155 = vld [vmem:[%s1 + $0x224] sm:$0xf]
  %v156 = vld [vmem:[%s1 + $0x228] sm:$0xf]
  %v157 = vld [vmem:[%s1 + $0x22c] sm:$0xf]
  %v158 = vld [vmem:[%s1 + $0x230] sm:$0xf]
  %v159 = vld [vmem:[%s1 + $0x234] sm:$0xf]
  %v160 = vld [vmem:[%s1 + $0x238] sm:$0xf]
  %v161 = vld [vmem:[%s1 + $0x23c] sm:$0xf]
  %v162 = vld [vmem:[%s2] sm:$0x1]
  %v163 = vld [vmem:[%s3] sm:$0x1]
  %v164 = vld [vmem:[%s0] sm:$0xff]
  %v165 = vld [vmem:[%s0 + $0x8] sm:$0xff]
  %v166 = vld [vmem:[%s0 + $0x10] sm:$0xff]
  %v167 = vld [vmem:[%s0 + $0x18] sm:$0xff]
  %v168 = vld [vmem:[%s0 + $0x20] sm:$0xf]
  %v169 = vld [vmem:[%s0 + $0x24] sm:$0xff]
  %v170 = vld [vmem:[%s0 + $0x2c] sm:$0xff]
  %v171 = vld [vmem:[%s0 + $0x34] sm:$0xff]
  %v172 = vld [vmem:[%s0 + $0x3c] sm:$0xff]
  %v173 = vld [vmem:[%s0 + $0x44] sm:$0xf]
  %v174 = vld [vmem:[%s0 + $0x48] sm:$0xff]
  %v175 = vld [vmem:[%s0 + $0x50] sm:$0xff]
  %v176 = vld [vmem:[%s0 + $0x58] sm:$0xff]
  %v177 = vld [vmem:[%s0 + $0x60] sm:$0xff]
  %v178 = vld [vmem:[%s0 + $0x68] sm:$0xf]
  %v179 = vld [vmem:[%s0 + $0x6c] sm:$0xff]
  %v180 = vld [vmem:[%s0 + $0x74] sm:$0xff]
  %v181 = vld [vmem:[%s0 + $0x7c] sm:$0xff]
  %v182 = vld [vmem:[%s0 + $0x84] sm:$0xff]
  %v183 = vld [vmem:[%s0 + $0x8c] sm:$0xf]
  %v204 = vunpack.c.l.b16 %v164
  %v205 = vunpack.c.h.b16 %v164
  %v206 = vunpack.c.l.b16 %v165
  %v207 = vunpack.c.h.b16 %v165
  %v208 = vunpack.c.l.b16 %v166
  %v209 = vunpack.c.h.b16 %v166
  %v210 = vunpack.c.l.b16 %v167
  %v211 = vunpack.c.h.b16 %v167
  %v212 = vunpack.c.l.b16 %v168
  %v213 = vunpack.c.l.b16 %v169
  %v214 = vunpack.c.h.b16 %v169
  %v215 = vunpack.c.l.b16 %v170
  %v216 = vunpack.c.h.b16 %v170
  %v217 = vunpack.c.l.b16 %v171
  %v218 = vunpack.c.h.b16 %v171
  %v219 = vunpack.c.l.b16 %v172
  %v220 = vunpack.c.h.b16 %v172
  %v221 = vunpack.c.l.b16 %v173
  %v222 = vunpack.c.l.b16 %v174
  %v223 = vunpack.c.h.b16 %v174
  %v224 = vunpack.c.l.b16 %v175
  %v225 = vunpack.c.h.b16 %v175
  %v226 = vunpack.c.l.b16 %v176
  %v227 = vunpack.c.h.b16 %v176
  %v228 = vunpack.c.l.b16 %v177
  %v229 = vunpack.c.h.b16 %v177
  %v230 = vunpack.c.l.b16 %v178
  %v231 = vunpack.c.l.b16 %v179
  %v232 = vunpack.c.h.b16 %v179
  %v233 = vunpack.c.l.b16 %v180
  %v234 = vunpack.c.h.b16 %v180
  %v235 = vunpack.c.l.b16 %v181
  %v236 = vunpack.c.h.b16 %v181
  %v237 = vunpack.c.l.b16 %v182
  %v238 = vunpack.c.h.b16 %v182
  %v239 = vunpack.c.l.b16 %v183
  %v240 = vpack.c.b16 %v213, %v204
  %v241 = vpack.c.b16 %v214, %v205
  %v242 = vpack.c.b16 %v215, %v206
  %v243 = vpack.c.b16 %v216, %v207
  %v244 = vpack.c.b16 %v217, %v208
  %v245 = vpack.c.b16 %v218, %v209
  %v246 = vpack.c.b16 %v219, %v210
  %v247 = vpack.c.b16 %v220, %v211
  %v248 = vpack.c.b16 %v221, %v212
  %v249 = vpack.c.b16 %v231, %v222
  %v250 = vpack.c.b16 %v232, %v223
  %v251 = vpack.c.b16 %v233, %v224
  %v252 = vpack.c.b16 %v234, %v225
  %v253 = vpack.c.b16 %v235, %v226
  %v254 = vpack.c.b16 %v236, %v227
  %v255 = vpack.c.b16 %v237, %v228
  %v256 = vpack.c.b16 %v238, %v229
  %v257 = vpack.c.b16 %v239, %v230
  %v420 = vunpack.c.l.b16 %v18
  %v421 = vunpack.c.l.b16 %v19
  %v422 = vunpack.c.l.b16 %v20
  %v423 = vunpack.c.l.b16 %v21
  %v424 = vunpack.c.l.b16 %v22
  %v425 = vunpack.c.l.b16 %v23
  %v426 = vunpack.c.l.b16 %v24
  %v427 = vunpack.c.l.b16 %v25
  %v428 = vunpack.c.l.b16 %v26
  %v429 = vunpack.c.l.b16 %v27
  %v430 = vunpack.c.l.b16 %v28
  %v431 = vunpack.c.l.b16 %v29
  %v432 = vunpack.c.l.b16 %v30
  %v433 = vunpack.c.l.b16 %v31
  %v434 = vunpack.c.l.b16 %v32
  %v435 = vunpack.c.l.b16 %v33
  %v436 = vunpack.c.l.b16 %v34
  %v437 = vunpack.c.l.b16 %v35
  %v438 = vunpack.c.l.b16 %v36
  %v439 = vunpack.c.l.b16 %v37
  %v440 = vunpack.c.l.b16 %v38
  %v441 = vunpack.c.l.b16 %v39
  %v442 = vunpack.c.l.b16 %v40
  %v443 = vunpack.c.l.b16 %v41
  %v444 = vunpack.c.l.b16 %v42
  %v445 = vunpack.c.l.b16 %v43
  %v446 = vunpack.c.l.b16 %v44
  %v447 = vunpack.c.l.b16 %v45
  %v448 = vunpack.c.l.b16 %v46
  %v449 = vunpack.c.l.b16 %v47
  %v450 = vunpack.c.l.b16 %v48
  %v451 = vunpack.c.l.b16 %v49
  %v452 = vunpack.c.l.b16 %v50
  %v453 = vunpack.c.l.b16 %v51
  %v454 = vunpack.c.l.b16 %v52
  %v455 = vunpack.c.l.b16 %v53
  %v456 = vunpack.c.l.b16 %v54
  %v457 = vunpack.c.l.b16 %v55
  %v458 = vunpack.c.l.b16 %v56
  %v459 = vunpack.c.l.b16 %v57
  %v460 = vunpack.c.l.b16 %v58
  %v461 = vunpack.c.l.b16 %v59
  %v462 = vunpack.c.l.b16 %v60
  %v463 = vunpack.c.l.b16 %v61
  %v464 = vunpack.c.l.b16 %v62
  %v465 = vunpack.c.l.b16 %v63
  %v466 = vunpack.c.l.b16 %v64
  %v467 = vunpack.c.l.b16 %v65
  %v468 = vunpack.c.l.b16 %v66
  %v469 = vunpack.c.l.b16 %v67
  %v470 = vunpack.c.l.b16 %v68
  %v471 = vunpack.c.l.b16 %v69
  %v472 = vunpack.c.l.b16 %v70
  %v473 = vunpack.c.l.b16 %v71
  %v474 = vunpack.c.l.b16 %v72
  %v475 = vunpack.c.l.b16 %v73
  %v476 = vunpack.c.l.b16 %v74
  %v477 = vunpack.c.l.b16 %v75
  %v478 = vunpack.c.l.b16 %v76
  %v479 = vunpack.c.l.b16 %v77
  %v480 = vunpack.c.l.b16 %v78
  %v481 = vunpack.c.l.b16 %v79
  %v482 = vunpack.c.l.b16 %v80
  %v483 = vunpack.c.l.b16 %v81
  %v484 = vunpack.c.l.b16 %v82
  %v485 = vunpack.c.l.b16 %v83
  %v486 = vunpack.c.l.b16 %v84
  %v487 = vunpack.c.l.b16 %v85
  %v488 = vunpack.c.l.b16 %v86
  %v489 = vunpack.c.l.b16 %v87
  %v490 = vunpack.c.l.b16 %v88
  %v491 = vunpack.c.l.b16 %v89
  %v492 = vunpack.c.l.b16 %v90
  %v493 = vunpack.c.l.b16 %v91
  %v494 = vunpack.c.l.b16 %v92
  %v495 = vunpack.c.l.b16 %v93
  %v496 = vunpack.c.l.b16 %v94
  %v497 = vunpack.c.l.b16 %v95
  %v498 = vunpack.c.l.b16 %v96
  %v499 = vunpack.c.l.b16 %v97
  %v500 = vunpack.c.l.b16 %v98
  %v501 = vunpack.c.l.b16 %v99
  %v502 = vunpack.c.l.b16 %v100
  %v503 = vunpack.c.l.b16 %v101
  %v504 = vunpack.c.l.b16 %v102
  %v505 = vunpack.c.l.b16 %v103
  %v506 = vunpack.c.l.b16 %v104
  %v507 = vunpack.c.l.b16 %v105
  %v508 = vunpack.c.l.b16 %v106
  %v509 = vunpack.c.l.b16 %v107
  %v510 = vunpack.c.l.b16 %v108
  %v511 = vunpack.c.l.b16 %v109
  %v512 = vunpack.c.l.b16 %v110
  %v513 = vunpack.c.l.b16 %v111
  %v514 = vunpack.c.l.b16 %v112
  %v515 = vunpack.c.l.b16 %v113
  %v516 = vunpack.c.l.b16 %v114
  %v517 = vunpack.c.l.b16 %v115
  %v518 = vunpack.c.l.b16 %v116
  %v519 = vunpack.c.l.b16 %v117
  %v520 = vunpack.c.l.b16 %v118
  %v521 = vunpack.c.l.b16 %v119
  %v522 = vunpack.c.l.b16 %v120
  %v523 = vunpack.c.l.b16 %v121
  %v524 = vunpack.c.l.b16 %v122
  %v525 = vunpack.c.l.b16 %v123
  %v526 = vunpack.c.l.b16 %v124
  %v527 = vunpack.c.l.b16 %v125
  %v528 = vunpack.c.l.b16 %v126
  %v529 = vunpack.c.l.b16 %v127
  %v530 = vunpack.c.l.b16 %v128
  %v531 = vunpack.c.l.b16 %v129
  %v532 = vunpack.c.l.b16 %v130
  %v533 = vunpack.c.l.b16 %v131
  %v534 = vunpack.c.l.b16 %v132
  %v535 = vunpack.c.l.b16 %v133
  %v536 = vunpack.c.l.b16 %v134
  %v537 = vunpack.c.l.b16 %v135
  %v538 = vunpack.c.l.b16 %v136
  %v539 = vunpack.c.l.b16 %v137
  %v540 = vunpack.c.l.b16 %v138
  %v541 = vunpack.c.l.b16 %v139
  %v542 = vunpack.c.l.b16 %v140
  %v543 = vunpack.c.l.b16 %v141
  %v544 = vunpack.c.l.b16 %v142
  %v545 = vunpack.c.l.b16 %v143
  %v546 = vunpack.c.l.b16 %v144
  %v547 = vunpack.c.l.b16 %v145
  %v548 = vunpack.c.l.b16 %v146
  %v549 = vunpack.c.l.b16 %v147
  %v550 = vunpack.c.l.b16 %v148
  %v551 = vunpack.c.l.b16 %v149
  %v552 = vunpack.c.l.b16 %v150
  %v553 = vunpack.c.l.b16 %v151
  %v554 = vunpack.c.l.b16 %v152
  %v555 = vunpack.c.l.b16 %v153
  %v556 = vunpack.c.l.b16 %v154
  %v557 = vunpack.c.l.b16 %v155
  %v558 = vunpack.c.l.b16 %v156
  %v559 = vunpack.c.l.b16 %v157
  %v560 = vunpack.c.l.b16 %v158
  %v561 = vunpack.c.l.b16 %v159
  %v562 = vunpack.c.l.b16 %v160
  %v563 = vunpack.c.l.b16 %v161
  %v564 = vpack.c.b16 %v421, %v420
  %v565 = vpack.c.b16 %v423, %v422
  %v566 = vpack.c.b16 %v425, %v424
  %v567 = vpack.c.b16 %v427, %v426
  %v568 = vpack.c.b16 %v429, %v428
  %v569 = vpack.c.b16 %v431, %v430
  %v570 = vpack.c.b16 %v433, %v432
  %v571 = vpack.c.b16 %v435, %v434
  %v572 = vpack.c.b16 %v437, %v436
  %v573 = vpack.c.b16 %v439, %v438
  %v574 = vpack.c.b16 %v441, %v440
  %v575 = vpack.c.b16 %v443, %v442
  %v576 = vpack.c.b16 %v445, %v444
  %v577 = vpack.c.b16 %v447, %v446
  %v578 = vpack.c.b16 %v449, %v448
  %v579 = vpack.c.b16 %v451, %v450
  %v580 = vpack.c.b16 %v453, %v452
  %v581 = vpack.c.b16 %v455, %v454
  %v582 = vpack.c.b16 %v457, %v456
  %v583 = vpack.c.b16 %v459, %v458
  %v584 = vpack.c.b16 %v461, %v460
  %v585 = vpack.c.b16 %v463, %v462
  %v586 = vpack.c.b16 %v465, %v464
  %v587 = vpack.c.b16 %v467, %v466
  %v588 = vpack.c.b16 %v469, %v468
  %v589 = vpack.c.b16 %v471, %v470
  %v590 = vpack.c.b16 %v473, %v472
  %v591 = vpack.c.b16 %v475, %v474
  %v592 = vpack.c.b16 %v477, %v476
  %v593 = vpack.c.b16 %v479, %v478
  %v594 = vpack.c.b16 %v481, %v480
  %v595 = vpack.c.b16 %v483, %v482
  %v596 = vpack.c.b16 %v485, %v484
  %v597 = vpack.c.b16 %v487, %v486
  %v598 = vpack.c.b16 %v489, %v488
  %v599 = vpack.c.b16 %v491, %v490
  %v600 = vpack.c.b16 %v493, %v492
  %v601 = vpack.c.b16 %v495, %v494
  %v602 = vpack.c.b16 %v497, %v496
  %v603 = vpack.c.b16 %v499, %v498
  %v604 = vpack.c.b16 %v501, %v500
  %v605 = vpack.c.b16 %v503, %v502
  %v606 = vpack.c.b16 %v505, %v504
  %v607 = vpack.c.b16 %v507, %v506
  %v608 = vpack.c.b16 %v509, %v508
  %v609 = vpack.c.b16 %v511, %v510
  %v610 = vpack.c.b16 %v513, %v512
  %v611 = vpack.c.b16 %v515, %v514
  %v612 = vpack.c.b16 %v517, %v516
  %v613 = vpack.c.b16 %v519, %v518
  %v614 = vpack.c.b16 %v521, %v520
  %v615 = vpack.c.b16 %v523, %v522
  %v616 = vpack.c.b16 %v525, %v524
  %v617 = vpack.c.b16 %v527, %v526
  %v618 = vpack.c.b16 %v529, %v528
  %v619 = vpack.c.b16 %v531, %v530
  %v620 = vpack.c.b16 %v533, %v532
  %v621 = vpack.c.b16 %v535, %v534
  %v622 = vpack.c.b16 %v537, %v536
  %v623 = vpack.c.b16 %v539, %v538
  %v624 = vpack.c.b16 %v541, %v540
  %v625 = vpack.c.b16 %v543, %v542
  %v626 = vpack.c.b16 %v545, %v544
  %v627 = vpack.c.b16 %v547, %v546
  %v628 = vpack.c.b16 %v549, %v548
  %v629 = vpack.c.b16 %v551, %v550
  %v630 = vpack.c.b16 %v553, %v552
  %v631 = vpack.c.b16 %v555, %v554
  %v632 = vpack.c.b16 %v557, %v556
  %v633 = vpack.c.b16 %v559, %v558
  %v634 = vpack.c.b16 %v561, %v560
  %v635 = vpack.c.b16 %v563, %v562
  %708 = vmatprep.subr.bf16.mxu0 0
  %709 = vmatpush1.bf16.msra.mxu0 %v571
  %710 = vmatprep.subr.bf16.mxu0 0
  %711 = vmatpush1.bf16.msra.mxu0 %v570
  %712 = vmatprep.subr.bf16.mxu0 0
  %713 = vmatpush1.bf16.msra.mxu0 %v569
  %714 = vmatprep.subr.bf16.mxu0 0
  %715 = vmatpush1.bf16.msra.mxu0 %v568
  %716 = vmatprep.subr.bf16.mxu0 0
  %717 = vmatpush1.bf16.msra.mxu0 %v567
  %718 = vmatprep.subr.bf16.mxu0 0
  %719 = vmatpush1.bf16.msra.mxu0 %v566
  %720 = vmatprep.subr.bf16.mxu0 0
  %721 = vmatpush1.bf16.msra.mxu0 %v565
  %722 = vmatprep.subr.bf16.mxu0 0
  %723 = vmatpush1.bf16.msra.mxu0 %v564
  %724 = vmatprep.subr.bf16.mxu0 0
  %725 = vmatpush2.bf16.msra.mxu0 %v579
  %726 = vmatprep.subr.bf16.mxu0 0
  %727 = vmatpush2.bf16.msra.mxu0 %v578
  %728 = vmatprep.subr.bf16.mxu0 0
  %729 = vmatpush2.bf16.msra.mxu0 %v577
  %730 = vmatprep.subr.bf16.mxu0 0
  %731 = vmatpush2.bf16.msra.mxu0 %v576
  %732 = vmatprep.subr.bf16.mxu0 0
  %733 = vmatpush2.bf16.msra.mxu0 %v575
  %734 = vmatprep.subr.bf16.mxu0 0
  %735 = vmatpush2.bf16.msra.mxu0 %v574
  %736 = vmatprep.subr.bf16.mxu0 0
  %737 = vmatpush2.bf16.msra.mxu0 %v573
  %738 = vmatprep.subr.bf16.mxu0 0
  %739 = vmatpush2.bf16.msra.mxu0 %v572
  %740 = vmatprep.mubr.bf16.mxu0 %v241
  %741 = vmatmul.mubr.bf16.gmra.mxu0 %v240
  %v742 = vpop.f32.mrf.mxu0
  %v743 = vadd.f32 0.0, %v742
  %v744 = vpop.f32.mrf.mxu0
  %v745 = vpop.f32.mrf.mxu0
  %v746 = vadd.f32 0.0, %v745
  %v747 = vpop.f32.mrf.mxu0
  %748 = vmatprep.mubr.bf16.mxu0 %v250
  %749 = vmatmul.mubr.bf16.gmra.mxu0 %v249
  %v750 = vpop.f32.mrf.mxu0
  %v751 = vadd.f32 0.0, %v750
  %v752 = vpop.f32.mrf.mxu0
  %v753 = vpop.f32.mrf.mxu0
  %v754 = vadd.f32 0.0, %v753
  %v755 = vpop.f32.mrf.mxu0
  %756 = vdwg.mxu0
  %757 = vmatprep.subr.bf16.mxu0 0
  %758 = vmatpush1.bf16.msra.mxu0 %v587
  %759 = vmatprep.subr.bf16.mxu0 0
  %760 = vmatpush1.bf16.msra.mxu0 %v586
  %761 = vmatprep.subr.bf16.mxu0 0
  %762 = vmatpush1.bf16.msra.mxu0 %v585
  %763 = vmatprep.subr.bf16.mxu0 0
  %764 = vmatpush1.bf16.msra.mxu0 %v584
  %765 = vmatprep.subr.bf16.mxu0 0
  %766 = vmatpush1.bf16.msra.mxu0 %v583
  %767 = vmatprep.subr.bf16.mxu0 0
  %768 = vmatpush1.bf16.msra.mxu0 %v582
  %769 = vmatprep.subr.bf16.mxu0 0
  %770 = vmatpush1.bf16.msra.mxu0 %v581
  %771 = vmatprep.subr.bf16.mxu0 0
  %772 = vmatpush1.bf16.msra.mxu0 %v580
  %773 = vmatprep.subr.bf16.mxu0 0
  %774 = vmatpush2.bf16.msra.mxu0 %v595
  %775 = vmatprep.subr.bf16.mxu0 0
  %776 = vmatpush2.bf16.msra.mxu0 %v594
  %777 = vmatprep.subr.bf16.mxu0 0
  %778 = vmatpush2.bf16.msra.mxu0 %v593
  %779 = vmatprep.subr.bf16.mxu0 0
  %780 = vmatpush2.bf16.msra.mxu0 %v592
  %781 = vmatprep.subr.bf16.mxu0 0
  %782 = vmatpush2.bf16.msra.mxu0 %v591
  %783 = vmatprep.subr.bf16.mxu0 0
  %784 = vmatpush2.bf16.msra.mxu0 %v590
  %785 = vmatprep.subr.bf16.mxu0 0
  %786 = vmatpush2.bf16.msra.mxu0 %v589
  %787 = vmatprep.subr.bf16.mxu0 0
  %788 = vmatpush2.bf16.msra.mxu0 %v588
  %789 = vmatprep.mubr.bf16.mxu0 %v243
  %790 = vmatmul.mubr.bf16.gmra.mxu0 %v242
  %v791 = vpop.f32.mrf.mxu0
  %v792 = vadd.f32 %v743, %v791
  %v793 = vpop.f32.mrf.mxu0
  %v794 = vpop.f32.mrf.mxu0
  %v795 = vadd.f32 %v746, %v794
  %v796 = vpop.f32.mrf.mxu0
  %797 = vmatprep.mubr.bf16.mxu0 %v252
  %798 = vmatmul.mubr.bf16.gmra.mxu0 %v251
  %v799 = vpop.f32.mrf.mxu0
  %v800 = vadd.f32 %v751, %v799
  %v801 = vpop.f32.mrf.mxu0
  %v802 = vpop.f32.mrf.mxu0
  %v803 = vadd.f32 %v754, %v802
  %v804 = vpop.f32.mrf.mxu0
  %805 = vdwg.mxu0
  %806 = vmatprep.subr.bf16.mxu0 0
  %807 = vmatpush1.bf16.msra.mxu0 %v603
  %808 = vmatprep.subr.bf16.mxu0 0
  %809 = vmatpush1.bf16.msra.mxu0 %v602
  %810 = vmatprep.subr.bf16.mxu0 0
  %811 = vmatpush1.bf16.msra.mxu0 %v601
  %812 = vmatprep.subr.bf16.mxu0 0
  %813 = vmatpush1.bf16.msra.mxu0 %v600
  %814 = vmatprep.subr.bf16.mxu0 0
  %815 = vmatpush1.bf16.msra.mxu0 %v599
  %816 = vmatprep.subr.bf16.mxu0 0
  %817 = vmatpush1.bf16.msra.mxu0 %v598
  %818 = vmatprep.subr.bf16.mxu0 0
  %819 = vmatpush1.bf16.msra.mxu0 %v597
  %820 = vmatprep.subr.bf16.mxu0 0
  %821 = vmatpush1.bf16.msra.mxu0 %v596
  %822 = vmatprep.subr.bf16.mxu0 0
  %823 = vmatpush2.bf16.msra.mxu0 %v611
  %824 = vmatprep.subr.bf16.mxu0 0
  %825 = vmatpush2.bf16.msra.mxu0 %v610
  %826 = vmatprep.subr.bf16.mxu0 0
  %827 = vmatpush2.bf16.msra.mxu0 %v609
  %828 = vmatprep.subr.bf16.mxu0 0
  %829 = vmatpush2.bf16.msra.mxu0 %v608
  %830 = vmatprep.subr.bf16.mxu0 0
  %831 = vmatpush2.bf16.msra.mxu0 %v607
  %832 = vmatprep.subr.bf16.mxu0 0
  %833 = vmatpush2.bf16.msra.mxu0 %v606
  %834 = vmatprep.subr.bf16.mxu0 0
  %835 = vmatpush2.bf16.msra.mxu0 %v605
  %836 = vmatprep.subr.bf16.mxu0 0
  %837 = vmatpush2.bf16.msra.mxu0 %v604
  %838 = vmatprep.mubr.bf16.mxu0 %v245
  %839 = vmatmul.mubr.bf16.gmra.mxu0 %v244
  %v840 = vpop.f32.mrf.mxu0
  %v841 = vadd.f32 %v792, %v840
  %v842 = vpop.f32.mrf.mxu0
  %v843 = vpop.f32.mrf.mxu0
  %v844 = vadd.f32 %v795, %v843
  %v845 = vpop.f32.mrf.mxu0
  %846 = vmatprep.mubr.bf16.mxu0 %v254
  %847 = vmatmul.mubr.bf16.gmra.mxu0 %v253
  %v848 = vpop.f32.mrf.mxu0
  %v849 = vadd.f32 %v800, %v848
  %v850 = vpop.f32.mrf.mxu0
  %v851 = vpop.f32.mrf.mxu0
  %v852 = vadd.f32 %v803, %v851
  %v853 = vpop.f32.mrf.mxu0
  %854 = vdwg.mxu0
  %855 = vmatprep.subr.bf16.mxu0 0
  %856 = vmatpush1.bf16.msra.mxu0 %v619
  %857 = vmatprep.subr.bf16.mxu0 0
  %858 = vmatpush1.bf16.msra.mxu0 %v618
  %859 = vmatprep.subr.bf16.mxu0 0
  %860 = vmatpush1.bf16.msra.mxu0 %v617
  %861 = vmatprep.subr.bf16.mxu0 0
  %862 = vmatpush1.bf16.msra.mxu0 %v616
  %863 = vmatprep.subr.bf16.mxu0 0
  %864 = vmatpush1.bf16.msra.mxu0 %v615
  %865 = vmatprep.subr.bf16.mxu0 0
  %866 = vmatpush1.bf16.msra.mxu0 %v614
  %867 = vmatprep.subr.bf16.mxu0 0
  %868 = vmatpush1.bf16.msra.mxu0 %v613
  %869 = vmatprep.subr.bf16.mxu0 0
  %870 = vmatpush1.bf16.msra.mxu0 %v612
  %871 = vmatprep.subr.bf16.mxu0 0
  %872 = vmatpush2.bf16.msra.mxu0 %v627
  %873 = vmatprep.subr.bf16.mxu0 0
  %874 = vmatpush2.bf16.msra.mxu0 %v626
  %875 = vmatprep.subr.bf16.mxu0 0
  %876 = vmatpush2.bf16.msra.mxu0 %v625
  %877 = vmatprep.subr.bf16.mxu0 0
  %878 = vmatpush2.bf16.msra.mxu0 %v624
  %879 = vmatprep.subr.bf16.mxu0 0
  %880 = vmatpush2.bf16.msra.mxu0 %v623
  %881 = vmatprep.subr.bf16.mxu0 0
  %882 = vmatpush2.bf16.msra.mxu0 %v622
  %883 = vmatprep.subr.bf16.mxu0 0
  %884 = vmatpush2.bf16.msra.mxu0 %v621
  %885 = vmatprep.subr.bf16.mxu0 0
  %886 = vmatpush2.bf16.msra.mxu0 %v620
  %887 = vmatprep.mubr.bf16.mxu0 %v247
  %888 = vmatmul.mubr.bf16.gmra.mxu0 %v246
  %v889 = vpop.f32.mrf.mxu0
  %v890 = vadd.f32 %v841, %v889
  %v891 = vpop.f32.mrf.mxu0
  %v892 = vpop.f32.mrf.mxu0
  %v893 = vadd.f32 %v844, %v892
  %v894 = vpop.f32.mrf.mxu0
  %895 = vmatprep.mubr.bf16.mxu0 %v256
  %896 = vmatmul.mubr.bf16.gmra.mxu0 %v255
  %v897 = vpop.f32.mrf.mxu0
  %v898 = vadd.f32 %v849, %v897
  %v899 = vpop.f32.mrf.mxu0
  %v900 = vpop.f32.mrf.mxu0
  %v901 = vadd.f32 %v852, %v900
  %v902 = vpop.f32.mrf.mxu0
  %903 = vdwg.mxu0
  %904 = vmatprep.subr.bf16.mxu0 0
  %905 = vmatpush1.bf16.msra.mxu0 %v635
  %906 = vmatprep.subr.bf16.mxu0 0
  %907 = vmatpush1.bf16.msra.mxu0 %v634
  %908 = vmatprep.subr.bf16.mxu0 0
  %909 = vmatpush1.bf16.msra.mxu0 %v633
  %910 = vmatprep.subr.bf16.mxu0 0
  %911 = vmatpush1.bf16.msra.mxu0 %v632
  %912 = vmatprep.subr.bf16.mxu0 0
  %913 = vmatpush1.bf16.msra.mxu0 %v631
  %914 = vmatprep.subr.bf16.mxu0 0
  %915 = vmatpush1.bf16.msra.mxu0 %v630
  %916 = vmatprep.subr.bf16.mxu0 0
  %917 = vmatpush1.bf16.msra.mxu0 %v629
  %918 = vmatprep.subr.bf16.mxu0 0
  %919 = vmatpush1.bf16.msra.mxu0 %v628
  %920 = vmatprep.subr.bf16.mxu0 0
  %921 = vmatpush2.bf16.msra.mxu0 0
  %922 = vmatprep.subr.bf16.mxu0 0
  %923 = vmatpush2.bf16.msra.mxu0 0
  %924 = vmatprep.subr.bf16.mxu0 0
  %925 = vmatpush2.bf16.msra.mxu0 0
  %926 = vmatprep.subr.bf16.mxu0 0
  %927 = vmatpush2.bf16.msra.mxu0 0
  %928 = vmatprep.subr.bf16.mxu0 0
  %929 = vmatpush2.bf16.msra.mxu0 0
  %930 = vmatprep.subr.bf16.mxu0 0
  %931 = vmatpush2.bf16.msra.mxu0 0
  %932 = vmatprep.subr.bf16.mxu0 0
  %933 = vmatpush2.bf16.msra.mxu0 0
  %934 = vmatprep.subr.bf16.mxu0 0
  %935 = vmatpush2.bf16.msra.mxu0 0
  %936 = vmatprep.mubr.bf16.mxu0 0
  %937 = vmatmul.mubr.bf16.gmra.mxu0 %v248
  %v938 = vpop.f32.mrf.mxu0
  %v939 = vadd.f32 %v890, %v938
  %v940 = vpop.f32.mrf.mxu0
  %v941 = vpop.f32.mrf.mxu0
  %v942 = vadd.f32 %v893, %v941
  %v943 = vpop.f32.mrf.mxu0
  %944 = vmatprep.mubr.bf16.mxu0 0
  %945 = vmatmul.mubr.bf16.gmra.mxu0 %v257
  %v946 = vpop.f32.mrf.mxu0
  %v947 = vadd.f32 %v898, %v946
  %v948 = vpop.f32.mrf.mxu0
  %v949 = vpop.f32.mrf.mxu0
  %v950 = vadd.f32 %v901, %v949
  %v951 = vpop.f32.mrf.mxu0
  %952 = vdwg.mxu0
  %v954 = vlaneseq
  %v955 = vshrl.u32 %v954, 7
  %v956 = vsub.s32 0, %v955
  %v957 = vrot.slane %v162, %v956
  %v959 = vmul.f32 %v939, %v957
  %v960 = vmul.f32 %v942, %v957
  %v961 = vmul.f32 %v947, %v957
  %v962 = vmul.f32 %v950, %v957
  %v964 = vlaneseq
  %v965 = vshrl.u32 %v964, 7
  %v966 = vsub.s32 0, %v965
  %v967 = vrot.slane %v163, %v966
  %v969 = vadd.f32 %v959, %v967
  %v970 = vadd.f32 %v960, %v967
  %v971 = vadd.f32 %v961, %v967
  %v972 = vadd.f32 %v962, %v967
  %v973 = vmax.f32 %v969, 0.0
  %v974 = vmax.f32 %v970, 0.0
  %v975 = vmax.f32 %v971, 0.0
  %v976 = vmax.f32 %v972, 0.0
  %s977 = scalar_lea.vmem %s0, 144
  %v978 = vld [vmem:[%s977] sm:$0xff]
  %v979 = vld [vmem:[%s977 + $0x8] sm:$0xff]
  %v980 = vld [vmem:[%s977 + $0x10] sm:$0xff]
  %v981 = vld [vmem:[%s977 + $0x18] sm:$0xff]
  %v982 = vld [vmem:[%s977 + $0x20] sm:$0xf]
  %v983 = vld [vmem:[%s977 + $0x24] sm:$0xff]
  %v984 = vld [vmem:[%s977 + $0x2c] sm:$0xff]
  %v985 = vld [vmem:[%s977 + $0x34] sm:$0xff]
  %v986 = vld [vmem:[%s977 + $0x3c] sm:$0xff]
  %v987 = vld [vmem:[%s977 + $0x44] sm:$0xf]
  %v988 = vld [vmem:[%s977 + $0x48] sm:$0xff]
  %v989 = vld [vmem:[%s977 + $0x50] sm:$0xff]
  %v990 = vld [vmem:[%s977 + $0x58] sm:$0xff]
  %v991 = vld [vmem:[%s977 + $0x60] sm:$0xff]
  %v992 = vld [vmem:[%s977 + $0x68] sm:$0xf]
  %v993 = vld [vmem:[%s977 + $0x6c] sm:$0xff]
  %v994 = vld [vmem:[%s977 + $0x74] sm:$0xff]
  %v995 = vld [vmem:[%s977 + $0x7c] sm:$0xff]
  %v996 = vld [vmem:[%s977 + $0x84] sm:$0xff]
  %v997 = vld [vmem:[%s977 + $0x8c] sm:$0xf]
  %v1018 = vunpack.c.l.b16 %v978
  %v1019 = vunpack.c.h.b16 %v978
  %v1020 = vunpack.c.l.b16 %v979
  %v1021 = vunpack.c.h.b16 %v979
  %v1022 = vunpack.c.l.b16 %v980
  %v1023 = vunpack.c.h.b16 %v980
  %v1024 = vunpack.c.l.b16 %v981
  %v1025 = vunpack.c.h.b16 %v981
  %v1026 = vunpack.c.l.b16 %v982
  %v1027 = vunpack.c.l.b16 %v983
  %v1028 = vunpack.c.h.b16 %v983
  %v1029 = vunpack.c.l.b16 %v984
  %v1030 = vunpack.c.h.b16 %v984
  %v1031 = vunpack.c.l.b16 %v985
  %v1032 = vunpack.c.h.b16 %v985
  %v1033 = vunpack.c.l.b16 %v986
  %v1034 = vunpack.c.h.b16 %v986
  %v1035 = vunpack.c.l.b16 %v987
  %v1036 = vunpack.c.l.b16 %v988
  %v1037 = vunpack.c.h.b16 %v988
  %v1038 = vunpack.c.l.b16 %v989
  %v1039 = vunpack.c.h.b16 %v989
  %v1040 = vunpack.c.l.b16 %v990
  %v1041 = vunpack.c.h.b16 %v990
  %v1042 = vunpack.c.l.b16 %v991
  %v1043 = vunpack.c.h.b16 %v991
  %v1044 = vunpack.c.l.b16 %v992
  %v1045 = vunpack.c.l.b16 %v993
  %v1046 = vunpack.c.h.b16 %v993
  %v1047 = vunpack.c.l.b16 %v994
  %v1048 = vunpack.c.h.b16 %v994
  %v1049 = vunpack.c.l.b16 %v995
  %v1050 = vunpack.c.h.b16 %v995
  %v1051 = vunpack.c.l.b16 %v996
  %v1052 = vunpack.c.h.b16 %v996
  %v1053 = vunpack.c.l.b16 %v997
  %v1054 = vpack.c.b16 %v1027, %v1018
  %v1055 = vpack.c.b16 %v1028, %v1019
  %v1056 = vpack.c.b16 %v1029, %v1020
  %v1057 = vpack.c.b16 %v1030, %v1021
  %v1058 = vpack.c.b16 %v1031, %v1022
  %v1059 = vpack.c.b16 %v1032, %v1023
  %v1060 = vpack.c.b16 %v1033, %v1024
  %v1061 = vpack.c.b16 %v1034, %v1025
  %v1062 = vpack.c.b16 %v1035, %v1026
  %v1063 = vpack.c.b16 %v1045, %v1036
  %v1064 = vpack.c.b16 %v1046, %v1037
  %v1065 = vpack.c.b16 %v1047, %v1038
  %v1066 = vpack.c.b16 %v1048, %v1039
  %v1067 = vpack.c.b16 %v1049, %v1040
  %v1068 = vpack.c.b16 %v1050, %v1041
  %v1069 = vpack.c.b16 %v1051, %v1042
  %v1070 = vpack.c.b16 %v1052, %v1043
  %v1071 = vpack.c.b16 %v1053, %v1044
  %1090 = vmatprep.subr.bf16.mxu0 0
  %1091 = vmatpush1.bf16.msra.mxu0 %v571
  %1092 = vmatprep.subr.bf16.mxu0 0
  %1093 = vmatpush1.bf16.msra.mxu0 %v570
  %1094 = vmatprep.subr.bf16.mxu0 0
  %1095 = vmatpush1.bf16.msra.mxu0 %v569
  %1096 = vmatprep.subr.bf16.mxu0 0
  %1097 = vmatpush1.bf16.msra.mxu0 %v568
  %1098 = vmatprep.subr.bf16.mxu0 0
  %1099 = vmatpush1.bf16.msra.mxu0 %v567
  %1100 = vmatprep.subr.bf16.mxu0 0
  %1101 = vmatpush1.bf16.msra.mxu0 %v566
  %1102 = vmatprep.subr.bf16.mxu0 0
  %1103 = vmatpush1.bf16.msra.mxu0 %v565
  %1104 = vmatprep.subr.bf16.mxu0 0
  %1105 = vmatpush1.bf16.msra.mxu0 %v564
  %1106 = vmatprep.subr.bf16.mxu0 0
  %1107 = vmatpush2.bf16.msra.mxu0 %v579
  %1108 = vmatprep.subr.bf16.mxu0 0
  %1109 = vmatpush2.bf16.msra.mxu0 %v578
  %1110 = vmatprep.subr.bf16.mxu0 0
  %1111 = vmatpush2.bf16.msra.mxu0 %v577
  %1112 = vmatprep.subr.bf16.mxu0 0
  %1113 = vmatpush2.bf16.msra.mxu0 %v576
  %1114 = vmatprep.subr.bf16.mxu0 0
  %1115 = vmatpush2.bf16.msra.mxu0 %v575
  %1116 = vmatprep.subr.bf16.mxu0 0
  %1117 = vmatpush2.bf16.msra.mxu0 %v574
  %1118 = vmatprep.subr.bf16.mxu0 0
  %1119 = vmatpush2.bf16.msra.mxu0 %v573
  %1120 = vmatprep.subr.bf16.mxu0 0
  %1121 = vmatpush2.bf16.msra.mxu0 %v572
  %1122 = vmatprep.mubr.bf16.mxu0 %v1055
  %1123 = vmatmul.mubr.bf16.gmra.mxu0 %v1054
  %v1124 = vpop.f32.mrf.mxu0
  %v1125 = vadd.f32 0.0, %v1124
  %v1126 = vpop.f32.mrf.mxu0
  %v1127 = vpop.f32.mrf.mxu0
  %v1128 = vadd.f32 0.0, %v1127
  %v1129 = vpop.f32.mrf.mxu0
  %1130 = vmatprep.mubr.bf16.mxu0 %v1064
  %1131 = vmatmul.mubr.bf16.gmra.mxu0 %v1063
  %v1132 = vpop.f32.mrf.mxu0
  %v1133 = vadd.f32 0.0, %v1132
  %v1134 = vpop.f32.mrf.mxu0
  %v1135 = vpop.f32.mrf.mxu0
  %v1136 = vadd.f32 0.0, %v1135
  %v1137 = vpop.f32.mrf.mxu0
  %1138 = vdwg.mxu0
  %1139 = vmatprep.subr.bf16.mxu0 0
  %1140 = vmatpush1.bf16.msra.mxu0 %v587
  %1141 = vmatprep.subr.bf16.mxu0 0
  %1142 = vmatpush1.bf16.msra.mxu0 %v586
  %1143 = vmatprep.subr.bf16.mxu0 0
  %1144 = vmatpush1.bf16.msra.mxu0 %v585
  %1145 = vmatprep.subr.bf16.mxu0 0
  %1146 = vmatpush1.bf16.msra.mxu0 %v584
  %1147 = vmatprep.subr.bf16.mxu0 0
  %1148 = vmatpush1.bf16.msra.mxu0 %v583
  %1149 = vmatprep.subr.bf16.mxu0 0
  %1150 = vmatpush1.bf16.msra.mxu0 %v582
  %1151 = vmatprep.subr.bf16.mxu0 0
  %1152 = vmatpush1.bf16.msra.mxu0 %v581
  %1153 = vmatprep.subr.bf16.mxu0 0
  %1154 = vmatpush1.bf16.msra.mxu0 %v580
  %1155 = vmatprep.subr.bf16.mxu0 0
  %1156 = vmatpush2.bf16.msra.mxu0 %v595
  %1157 = vmatprep.subr.bf16.mxu0 0
  %1158 = vmatpush2.bf16.msra.mxu0 %v594
  %1159 = vmatprep.subr.bf16.mxu0 0
  %1160 = vmatpush2.bf16.msra.mxu0 %v593
  %1161 = vmatprep.subr.bf16.mxu0 0
  %1162 = vmatpush2.bf16.msra.mxu0 %v592
  %1163 = vmatprep.subr.bf16.mxu0 0
  %1164 = vmatpush2.bf16.msra.mxu0 %v591
  %1165 = vmatprep.subr.bf16.mxu0 0
  %1166 = vmatpush2.bf16.msra.mxu0 %v590
  %1167 = vmatprep.subr.bf16.mxu0 0
  %1168 = vmatpush2.bf16.msra.mxu0 %v589
  %1169 = vmatprep.subr.bf16.mxu0 0
  %1170 = vmatpush2.bf16.msra.mxu0 %v588
  %1171 = vmatprep.mubr.bf16.mxu0 %v1057
  %1172 = vmatmul.mubr.bf16.gmra.mxu0 %v1056
  %v1173 = vpop.f32.mrf.mxu0
  %v1174 = vadd.f32 %v1125, %v1173
  %v1175 = vpop.f32.mrf.mxu0
  %v1176 = vpop.f32.mrf.mxu0
  %v1177 = vadd.f32 %v1128, %v1176
  %v1178 = vpop.f32.mrf.mxu0
  %1179 = vmatprep.mubr.bf16.mxu0 %v1066
  %1180 = vmatmul.mubr.bf16.gmra.mxu0 %v1065
  %v1181 = vpop.f32.mrf.mxu0
  %v1182 = vadd.f32 %v1133, %v1181
  %v1183 = vpop.f32.mrf.mxu0
  %v1184 = vpop.f32.mrf.mxu0
  %v1185 = vadd.f32 %v1136, %v1184
  %v1186 = vpop.f32.mrf.mxu0
  %1187 = vdwg.mxu0
  %1188 = vmatprep.subr.bf16.mxu0 0
  %1189 = vmatpush1.bf16.msra.mxu0 %v603
  %1190 = vmatprep.subr.bf16.mxu0 0
  %1191 = vmatpush1.bf16.msra.mxu0 %v602
  %1192 = vmatprep.subr.bf16.mxu0 0
  %1193 = vmatpush1.bf16.msra.mxu0 %v601
  %1194 = vmatprep.subr.bf16.mxu0 0
  %1195 = vmatpush1.bf16.msra.mxu0 %v600
  %1196 = vmatprep.subr.bf16.mxu0 0
  %1197 = vmatpush1.bf16.msra.mxu0 %v599
  %1198 = vmatprep.subr.bf16.mxu0 0
  %1199 = vmatpush1.bf16.msra.mxu0 %v598
  %1200 = vmatprep.subr.bf16.mxu0 0
  %1201 = vmatpush1.bf16.msra.mxu0 %v597
  %1202 = vmatprep.subr.bf16.mxu0 0
  %1203 = vmatpush1.bf16.msra.mxu0 %v596
  %1204 = vmatprep.subr.bf16.mxu0 0
  %1205 = vmatpush2.bf16.msra.mxu0 %v611
  %1206 = vmatprep.subr.bf16.mxu0 0
  %1207 = vmatpush2.bf16.msra.mxu0 %v610
  %1208 = vmatprep.subr.bf16.mxu0 0
  %1209 = vmatpush2.bf16.msra.mxu0 %v609
  %1210 = vmatprep.subr.bf16.mxu0 0
  %1211 = vmatpush2.bf16.msra.mxu0 %v608
  %1212 = vmatprep.subr.bf16.mxu0 0
  %1213 = vmatpush2.bf16.msra.mxu0 %v607
  %1214 = vmatprep.subr.bf16.mxu0 0
  %1215 = vmatpush2.bf16.msra.mxu0 %v606
  %1216 = vmatprep.subr.bf16.mxu0 0
  %1217 = vmatpush2.bf16.msra.mxu0 %v605
  %1218 = vmatprep.subr.bf16.mxu0 0
  %1219 = vmatpush2.bf16.msra.mxu0 %v604
  %1220 = vmatprep.mubr.bf16.mxu0 %v1059
  %1221 = vmatmul.mubr.bf16.gmra.mxu0 %v1058
  %v1222 = vpop.f32.mrf.mxu0
  %v1223 = vadd.f32 %v1174, %v1222
  %v1224 = vpop.f32.mrf.mxu0
  %v1225 = vpop.f32.mrf.mxu0
  %v1226 = vadd.f32 %v1177, %v1225
  %v1227 = vpop.f32.mrf.mxu0
  %1228 = vmatprep.mubr.bf16.mxu0 %v1068
  %1229 = vmatmul.mubr.bf16.gmra.mxu0 %v1067
  %v1230 = vpop.f32.mrf.mxu0
  %v1231 = vadd.f32 %v1182, %v1230
  %v1232 = vpop.f32.mrf.mxu0
  %v1233 = vpop.f32.mrf.mxu0
  %v1234 = vadd.f32 %v1185, %v1233
  %v1235 = vpop.f32.mrf.mxu0
  %1236 = vdwg.mxu0
  %1237 = vmatprep.subr.bf16.mxu0 0
  %1238 = vmatpush1.bf16.msra.mxu0 %v619
  %1239 = vmatprep.subr.bf16.mxu0 0
  %1240 = vmatpush1.bf16.msra.mxu0 %v618
  %1241 = vmatprep.subr.bf16.mxu0 0
  %1242 = vmatpush1.bf16.msra.mxu0 %v617
  %1243 = vmatprep.subr.bf16.mxu0 0
  %1244 = vmatpush1.bf16.msra.mxu0 %v616
  %1245 = vmatprep.subr.bf16.mxu0 0
  %1246 = vmatpush1.bf16.msra.mxu0 %v615
  %1247 = vmatprep.subr.bf16.mxu0 0
  %1248 = vmatpush1.bf16.msra.mxu0 %v614
  %1249 = vmatprep.subr.bf16.mxu0 0
  %1250 = vmatpush1.bf16.msra.mxu0 %v613
  %1251 = vmatprep.subr.bf16.mxu0 0
  %1252 = vmatpush1.bf16.msra.mxu0 %v612
  %1253 = vmatprep.subr.bf16.mxu0 0
  %1254 = vmatpush2.bf16.msra.mxu0 %v627
  %1255 = vmatprep.subr.bf16.mxu0 0
  %1256 = vmatpush2.bf16.msra.mxu0 %v626
  %1257 = vmatprep.subr.bf16.mxu0 0
  %1258 = vmatpush2.bf16.msra.mxu0 %v625
  %1259 = vmatprep.subr.bf16.mxu0 0
  %1260 = vmatpush2.bf16.msra.mxu0 %v624
  %1261 = vmatprep.subr.bf16.mxu0 0
  %1262 = vmatpush2.bf16.msra.mxu0 %v623
  %1263 = vmatprep.subr.bf16.mxu0 0
  %1264 = vmatpush2.bf16.msra.mxu0 %v622
  %1265 = vmatprep.subr.bf16.mxu0 0
  %1266 = vmatpush2.bf16.msra.mxu0 %v621
  %1267 = vmatprep.subr.bf16.mxu0 0
  %1268 = vmatpush2.bf16.msra.mxu0 %v620
  %1269 = vmatprep.mubr.bf16.mxu0 %v1061
  %1270 = vmatmul.mubr.bf16.gmra.mxu0 %v1060
  %v1271 = vpop.f32.mrf.mxu0
  %v1272 = vadd.f32 %v1223, %v1271
  %v1273 = vpop.f32.mrf.mxu0
  %v1274 = vpop.f32.mrf.mxu0
  %v1275 = vadd.f32 %v1226, %v1274
  %v1276 = vpop.f32.mrf.mxu0
  %1277 = vmatprep.mubr.bf16.mxu0 %v1070
  %1278 = vmatmul.mubr.bf16.gmra.mxu0 %v1069
  %v1279 = vpop.f32.mrf.mxu0
  %v1280 = vadd.f32 %v1231, %v1279
  %v1281 = vpop.f32.mrf.mxu0
  %v1282 = vpop.f32.mrf.mxu0
  %v1283 = vadd.f32 %v1234, %v1282
  %v1284 = vpop.f32.mrf.mxu0
  %1285 = vdwg.mxu0
  %1286 = vmatprep.subr.bf16.mxu0 0
  %1287 = vmatpush1.bf16.msra.mxu0 %v635
  %1288 = vmatprep.subr.bf16.mxu0 0
  %1289 = vmatpush1.bf16.msra.mxu0 %v634
  %1290 = vmatprep.subr.bf16.mxu0 0
  %1291 = vmatpush1.bf16.msra.mxu0 %v633
  %1292 = vmatprep.subr.bf16.mxu0 0
  %1293 = vmatpush1.bf16.msra.mxu0 %v632
  %1294 = vmatprep.subr.bf16.mxu0 0
  %1295 = vmatpush1.bf16.msra.mxu0 %v631
  %1296 = vmatprep.subr.bf16.mxu0 0
  %1297 = vmatpush1.bf16.msra.mxu0 %v630
  %1298 = vmatprep.subr.bf16.mxu0 0
  %1299 = vmatpush1.bf16.msra.mxu0 %v629
  %1300 = vmatprep.subr.bf16.mxu0 0
  %1301 = vmatpush1.bf16.msra.mxu0 %v628
  %1302 = vmatprep.subr.bf16.mxu0 0
  %1303 = vmatpush2.bf16.msra.mxu0 0
  %1304 = vmatprep.subr.bf16.mxu0 0
  %1305 = vmatpush2.bf16.msra.mxu0 0
  %1306 = vmatprep.subr.bf16.mxu0 0
  %1307 = vmatpush2.bf16.msra.mxu0 0
  %1308 = vmatprep.subr.bf16.mxu0 0
  %1309 = vmatpush2.bf16.msra.mxu0 0
  %1310 = vmatprep.subr.bf16.mxu0 0
  %1311 = vmatpush2.bf16.msra.mxu0 0
  %1312 = vmatprep.subr.bf16.mxu0 0
  %1313 = vmatpush2.bf16.msra.mxu0 0
  %1314 = vmatprep.subr.bf16.mxu0 0
  %1315 = vmatpush2.bf16.msra.mxu0 0
  %1316 = vmatprep.subr.bf16.mxu0 0
  %1317 = vmatpush2.bf16.msra.mxu0 0
  %1318 = vmatprep.mubr.bf16.mxu0 0
  %1319 = vmatmul.mubr.bf16.gmra.mxu0 %v1062
  %v1320 = vpop.f32.mrf.mxu0
  %v1321 = vadd.f32 %v1272, %v1320
  %v1322 = vpop.f32.mrf.mxu0
  %v1323 = vpop.f32.mrf.mxu0
  %v1324 = vadd.f32 %v1275, %v1323
  %v1325 = vpop.f32.mrf.mxu0
  %1326 = vmatprep.mubr.bf16.mxu0 0
  %1327 = vmatmul.mubr.bf16.gmra.mxu0 %v1071
  %v1328 = vpop.f32.mrf.mxu0
  %v1329 = vadd.f32 %v1280, %v1328
  %v1330 = vpop.f32.mrf.mxu0
  %v1331 = vpop.f32.mrf.mxu0
  %v1332 = vadd.f32 %v1283, %v1331
  %v1333 = vpop.f32.mrf.mxu0
  %1334 = vdwg.mxu0
  %v1335 = vmul.f32 %v1321, %v957
  %v1336 = vmul.f32 %v1324, %v957
  %v1337 = vmul.f32 %v1329, %v957
  %v1338 = vmul.f32 %v1332, %v957
  %v1339 = vadd.f32 %v1335, %v967
  %v1340 = vadd.f32 %v1336, %v967
  %v1341 = vadd.f32 %v1337, %v967
  %v1342 = vadd.f32 %v1338, %v967
  %v1343 = vmax.f32 %v1339, 0.0
  %v1344 = vmax.f32 %v1340, 0.0
  %v1345 = vmax.f32 %v1341, 0.0
  %v1346 = vmax.f32 %v1342, 0.0
  %v1347 = vmax.f32 %v973, %v1343
  %v1348 = vmax.f32 %v974, %v1344
  %v1349 = vmax.f32 %v975, %v1345
  %v1350 = vmax.f32 %v976, %v1346
  %s1351 = scalar_lea.vmem %s0, 288
  %v1352 = vld [vmem:[%s1351] sm:$0xff]
  %v1353 = vld [vmem:[%s1351 + $0x8] sm:$0xff]
  %v1354 = vld [vmem:[%s1351 + $0x10] sm:$0xff]
  %v1355 = vld [vmem:[%s1351 + $0x18] sm:$0xff]
  %v1356 = vld [vmem:[%s1351 + $0x20] sm:$0xf]
  %v1357 = vld [vmem:[%s1351 + $0x24] sm:$0xff]
  %v1358 = vld [vmem:[%s1351 + $0x2c] sm:$0xff]
  %v1359 = vld [vmem:[%s1351 + $0x34] sm:$0xff]
  %v1360 = vld [vmem:[%s1351 + $0x3c] sm:$0xff]
  %v1361 = vld [vmem:[%s1351 + $0x44] sm:$0xf]
  %v1362 = vld [vmem:[%s1351 + $0x48] sm:$0xff]
  %v1363 = vld [vmem:[%s1351 + $0x50] sm:$0xff]
  %v1364 = vld [vmem:[%s1351 + $0x58] sm:$0xff]
  %v1365 = vld [vmem:[%s1351 + $0x60] sm:$0xff]
  %v1366 = vld [vmem:[%s1351 + $0x68] sm:$0xf]
  %v1367 = vld [vmem:[%s1351 + $0x6c] sm:$0xff]
  %v1368 = vld [vmem:[%s1351 + $0x74] sm:$0xff]
  %v1369 = vld [vmem:[%s1351 + $0x7c] sm:$0xff]
  %v1370 = vld [vmem:[%s1351 + $0x84] sm:$0xff]
  %v1371 = vld [vmem:[%s1351 + $0x8c] sm:$0xf]
  %v1392 = vunpack.c.l.b16 %v1352
  %v1393 = vunpack.c.h.b16 %v1352
  %v1394 = vunpack.c.l.b16 %v1353
  %v1395 = vunpack.c.h.b16 %v1353
  %v1396 = vunpack.c.l.b16 %v1354
  %v1397 = vunpack.c.h.b16 %v1354
  %v1398 = vunpack.c.l.b16 %v1355
  %v1399 = vunpack.c.h.b16 %v1355
  %v1400 = vunpack.c.l.b16 %v1356
  %v1401 = vunpack.c.l.b16 %v1357
  %v1402 = vunpack.c.h.b16 %v1357
  %v1403 = vunpack.c.l.b16 %v1358
  %v1404 = vunpack.c.h.b16 %v1358
  %v1405 = vunpack.c.l.b16 %v1359
  %v1406 = vunpack.c.h.b16 %v1359
  %v1407 = vunpack.c.l.b16 %v1360
  %v1408 = vunpack.c.h.b16 %v1360
  %v1409 = vunpack.c.l.b16 %v1361
  %v1410 = vunpack.c.l.b16 %v1362
  %v1411 = vunpack.c.h.b16 %v1362
  %v1412 = vunpack.c.l.b16 %v1363
  %v1413 = vunpack.c.h.b16 %v1363
  %v1414 = vunpack.c.l.b16 %v1364
  %v1415 = vunpack.c.h.b16 %v1364
  %v1416 = vunpack.c.l.b16 %v1365
  %v1417 = vunpack.c.h.b16 %v1365
  %v1418 = vunpack.c.l.b16 %v1366
  %v1419 = vunpack.c.l.b16 %v1367
  %v1420 = vunpack.c.h.b16 %v1367
  %v1421 = vunpack.c.l.b16 %v1368
  %v1422 = vunpack.c.h.b16 %v1368
  %v1423 = vunpack.c.l.b16 %v1369
  %v1424 = vunpack.c.h.b16 %v1369
  %v1425 = vunpack.c.l.b16 %v1370
  %v1426 = vunpack.c.h.b16 %v1370
  %v1427 = vunpack.c.l.b16 %v1371
  %v1428 = vpack.c.b16 %v1401, %v1392
  %v1429 = vpack.c.b16 %v1402, %v1393
  %v1430 = vpack.c.b16 %v1403, %v1394
  %v1431 = vpack.c.b16 %v1404, %v1395
  %v1432 = vpack.c.b16 %v1405, %v1396
  %v1433 = vpack.c.b16 %v1406, %v1397
  %v1434 = vpack.c.b16 %v1407, %v1398
  %v1435 = vpack.c.b16 %v1408, %v1399
  %v1436 = vpack.c.b16 %v1409, %v1400
  %v1437 = vpack.c.b16 %v1419, %v1410
  %v1438 = vpack.c.b16 %v1420, %v1411
  %v1439 = vpack.c.b16 %v1421, %v1412
  %v1440 = vpack.c.b16 %v1422, %v1413
  %v1441 = vpack.c.b16 %v1423, %v1414
  %v1442 = vpack.c.b16 %v1424, %v1415
  %v1443 = vpack.c.b16 %v1425, %v1416
  %v1444 = vpack.c.b16 %v1426, %v1417
  %v1445 = vpack.c.b16 %v1427, %v1418
  %1464 = vmatprep.subr.bf16.mxu0 0
  %1465 = vmatpush1.bf16.msra.mxu0 %v571
  %1466 = vmatprep.subr.bf16.mxu0 0
  %1467 = vmatpush1.bf16.msra.mxu0 %v570
  %1468 = vmatprep.subr.bf16.mxu0 0
  %1469 = vmatpush1.bf16.msra.mxu0 %v569
  %1470 = vmatprep.subr.bf16.mxu0 0
  %1471 = vmatpush1.bf16.msra.mxu0 %v568
  %1472 = vmatprep.subr.bf16.mxu0 0
  %1473 = vmatpush1.bf16.msra.mxu0 %v567
  %1474 = vmatprep.subr.bf16.mxu0 0
  %1475 = vmatpush1.bf16.msra.mxu0 %v566
  %1476 = vmatprep.subr.bf16.mxu0 0
  %1477 = vmatpush1.bf16.msra.mxu0 %v565
  %1478 = vmatprep.subr.bf16.mxu0 0
  %1479 = vmatpush1.bf16.msra.mxu0 %v564
  %1480 = vmatprep.subr.bf16.mxu0 0
  %1481 = vmatpush2.bf16.msra.mxu0 %v579
  %1482 = vmatprep.subr.bf16.mxu0 0
  %1483 = vmatpush2.bf16.msra.mxu0 %v578
  %1484 = vmatprep.subr.bf16.mxu0 0
  %1485 = vmatpush2.bf16.msra.mxu0 %v577
  %1486 = vmatprep.subr.bf16.mxu0 0
  %1487 = vmatpush2.bf16.msra.mxu0 %v576
  %1488 = vmatprep.subr.bf16.mxu0 0
  %1489 = vmatpush2.bf16.msra.mxu0 %v575
  %1490 = vmatprep.subr.bf16.mxu0 0
  %1491 = vmatpush2.bf16.msra.mxu0 %v574
  %1492 = vmatprep.subr.bf16.mxu0 0
  %1493 = vmatpush2.bf16.msra.mxu0 %v573
  %1494 = vmatprep.subr.bf16.mxu0 0
  %1495 = vmatpush2.bf16.msra.mxu0 %v572
  %1496 = vmatprep.mubr.bf16.mxu0 %v1429
  %1497 = vmatmul.mubr.bf16.gmra.mxu0 %v1428
  %v1498 = vpop.f32.mrf.mxu0
  %v1499 = vadd.f32 0.0, %v1498
  %v1500 = vpop.f32.mrf.mxu0
  %v1501 = vpop.f32.mrf.mxu0
  %v1502 = vadd.f32 0.0, %v1501
  %v1503 = vpop.f32.mrf.mxu0
  %1504 = vmatprep.mubr.bf16.mxu0 %v1438
  %1505 = vmatmul.mubr.bf16.gmra.mxu0 %v1437
  %v1506 = vpop.f32.mrf.mxu0
  %v1507 = vadd.f32 0.0, %v1506
  %v1508 = vpop.f32.mrf.mxu0
  %v1509 = vpop.f32.mrf.mxu0
  %v1510 = vadd.f32 0.0, %v1509
  %v1511 = vpop.f32.mrf.mxu0
  %1512 = vdwg.mxu0
  %1513 = vmatprep.subr.bf16.mxu0 0
  %1514 = vmatpush1.bf16.msra.mxu0 %v587
  %1515 = vmatprep.subr.bf16.mxu0 0
  %1516 = vmatpush1.bf16.msra.mxu0 %v586
  %1517 = vmatprep.subr.bf16.mxu0 0
  %1518 = vmatpush1.bf16.msra.mxu0 %v585
  %1519 = vmatprep.subr.bf16.mxu0 0
  %1520 = vmatpush1.bf16.msra.mxu0 %v584
  %1521 = vmatprep.subr.bf16.mxu0 0
  %1522 = vmatpush1.bf16.msra.mxu0 %v583
  %1523 = vmatprep.subr.bf16.mxu0 0
  %1524 = vmatpush1.bf16.msra.mxu0 %v582
  %1525 = vmatprep.subr.bf16.mxu0 0
  %1526 = vmatpush1.bf16.msra.mxu0 %v581
  %1527 = vmatprep.subr.bf16.mxu0 0
  %1528 = vmatpush1.bf16.msra.mxu0 %v580
  %1529 = vmatprep.subr.bf16.mxu0 0
  %1530 = vmatpush2.bf16.msra.mxu0 %v595
  %1531 = vmatprep.subr.bf16.mxu0 0
  %1532 = vmatpush2.bf16.msra.mxu0 %v594
  %1533 = vmatprep.subr.bf16.mxu0 0
  %1534 = vmatpush2.bf16.msra.mxu0 %v593
  %1535 = vmatprep.subr.bf16.mxu0 0
  %1536 = vmatpush2.bf16.msra.mxu0 %v592
  %1537 = vmatprep.subr.bf16.mxu0 0
  %1538 = vmatpush2.bf16.msra.mxu0 %v591
  %1539 = vmatprep.subr.bf16.mxu0 0
  %1540 = vmatpush2.bf16.msra.mxu0 %v590
  %1541 = vmatprep.subr.bf16.mxu0 0
  %1542 = vmatpush2.bf16.msra.mxu0 %v589
  %1543 = vmatprep.subr.bf16.mxu0 0
  %1544 = vmatpush2.bf16.msra.mxu0 %v588
  %1545 = vmatprep.mubr.bf16.mxu0 %v1431
  %1546 = vmatmul.mubr.bf16.gmra.mxu0 %v1430
  %v1547 = vpop.f32.mrf.mxu0
  %v1548 = vadd.f32 %v1499, %v1547
  %v1549 = vpop.f32.mrf.mxu0
  %v1550 = vpop.f32.mrf.mxu0
  %v1551 = vadd.f32 %v1502, %v1550
  %v1552 = vpop.f32.mrf.mxu0
  %1553 = vmatprep.mubr.bf16.mxu0 %v1440
  %1554 = vmatmul.mubr.bf16.gmra.mxu0 %v1439
  %v1555 = vpop.f32.mrf.mxu0
  %v1556 = vadd.f32 %v1507, %v1555
  %v1557 = vpop.f32.mrf.mxu0
  %v1558 = vpop.f32.mrf.mxu0
  %v1559 = vadd.f32 %v1510, %v1558
  %v1560 = vpop.f32.mrf.mxu0
  %1561 = vdwg.mxu0
  %1562 = vmatprep.subr.bf16.mxu0 0
  %1563 = vmatpush1.bf16.msra.mxu0 %v603
  %1564 = vmatprep.subr.bf16.mxu0 0
  %1565 = vmatpush1.bf16.msra.mxu0 %v602
  %1566 = vmatprep.subr.bf16.mxu0 0
  %1567 = vmatpush1.bf16.msra.mxu0 %v601
  %1568 = vmatprep.subr.bf16.mxu0 0
  %1569 = vmatpush1.bf16.msra.mxu0 %v600
  %1570 = vmatprep.subr.bf16.mxu0 0
  %1571 = vmatpush1.bf16.msra.mxu0 %v599
  %1572 = vmatprep.subr.bf16.mxu0 0
  %1573 = vmatpush1.bf16.msra.mxu0 %v598
  %1574 = vmatprep.subr.bf16.mxu0 0
  %1575 = vmatpush1.bf16.msra.mxu0 %v597
  %1576 = vmatprep.subr.bf16.mxu0 0
  %1577 = vmatpush1.bf16.msra.mxu0 %v596
  %1578 = vmatprep.subr.bf16.mxu0 0
  %1579 = vmatpush2.bf16.msra.mxu0 %v611
  %1580 = vmatprep.subr.bf16.mxu0 0
  %1581 = vmatpush2.bf16.msra.mxu0 %v610
  %1582 = vmatprep.subr.bf16.mxu0 0
  %1583 = vmatpush2.bf16.msra.mxu0 %v609
  %1584 = vmatprep.subr.bf16.mxu0 0
  %1585 = vmatpush2.bf16.msra.mxu0 %v608
  %1586 = vmatprep.subr.bf16.mxu0 0
  %1587 = vmatpush2.bf16.msra.mxu0 %v607
  %1588 = vmatprep.subr.bf16.mxu0 0
  %1589 = vmatpush2.bf16.msra.mxu0 %v606
  %1590 = vmatprep.subr.bf16.mxu0 0
  %1591 = vmatpush2.bf16.msra.mxu0 %v605
  %1592 = vmatprep.subr.bf16.mxu0 0
  %1593 = vmatpush2.bf16.msra.mxu0 %v604
  %1594 = vmatprep.mubr.bf16.mxu0 %v1433
  %1595 = vmatmul.mubr.bf16.gmra.mxu0 %v1432
  %v1596 = vpop.f32.mrf.mxu0
  %v1597 = vadd.f32 %v1548, %v1596
  %v1598 = vpop.f32.mrf.mxu0
  %v1599 = vpop.f32.mrf.mxu0
  %v1600 = vadd.f32 %v1551, %v1599
  %v1601 = vpop.f32.mrf.mxu0
  %1602 = vmatprep.mubr.bf16.mxu0 %v1442
  %1603 = vmatmul.mubr.bf16.gmra.mxu0 %v1441
  %v1604 = vpop.f32.mrf.mxu0
  %v1605 = vadd.f32 %v1556, %v1604
  %v1606 = vpop.f32.mrf.mxu0
  %v1607 = vpop.f32.mrf.mxu0
  %v1608 = vadd.f32 %v1559, %v1607
  %v1609 = vpop.f32.mrf.mxu0
  %1610 = vdwg.mxu0
  %1611 = vmatprep.subr.bf16.mxu0 0
  %1612 = vmatpush1.bf16.msra.mxu0 %v619
  %1613 = vmatprep.subr.bf16.mxu0 0
  %1614 = vmatpush1.bf16.msra.mxu0 %v618
  %1615 = vmatprep.subr.bf16.mxu0 0
  %1616 = vmatpush1.bf16.msra.mxu0 %v617
  %1617 = vmatprep.subr.bf16.mxu0 0
  %1618 = vmatpush1.bf16.msra.mxu0 %v616
  %1619 = vmatprep.subr.bf16.mxu0 0
  %1620 = vmatpush1.bf16.msra.mxu0 %v615
  %1621 = vmatprep.subr.bf16.mxu0 0
  %1622 = vmatpush1.bf16.msra.mxu0 %v614
  %1623 = vmatprep.subr.bf16.mxu0 0
  %1624 = vmatpush1.bf16.msra.mxu0 %v613
  %1625 = vmatprep.subr.bf16.mxu0 0
  %1626 = vmatpush1.bf16.msra.mxu0 %v612
  %1627 = vmatprep.subr.bf16.mxu0 0
  %1628 = vmatpush2.bf16.msra.mxu0 %v627
  %1629 = vmatprep.subr.bf16.mxu0 0
  %1630 = vmatpush2.bf16.msra.mxu0 %v626
  %1631 = vmatprep.subr.bf16.mxu0 0
  %1632 = vmatpush2.bf16.msra.mxu0 %v625
  %1633 = vmatprep.subr.bf16.mxu0 0
  %1634 = vmatpush2.bf16.msra.mxu0 %v624
  %1635 = vmatprep.subr.bf16.mxu0 0
  %1636 = vmatpush2.bf16.msra.mxu0 %v623
  %1637 = vmatprep.subr.bf16.mxu0 0
  %1638 = vmatpush2.bf16.msra.mxu0 %v622
  %1639 = vmatprep.subr.bf16.mxu0 0
  %1640 = vmatpush2.bf16.msra.mxu0 %v621
  %1641 = vmatprep.subr.bf16.mxu0 0
  %1642 = vmatpush2.bf16.msra.mxu0 %v620
  %1643 = vmatprep.mubr.bf16.mxu0 %v1435
  %1644 = vmatmul.mubr.bf16.gmra.mxu0 %v1434
  %v1645 = vpop.f32.mrf.mxu0
  %v1646 = vadd.f32 %v1597, %v1645
  %v1647 = vpop.f32.mrf.mxu0
  %v1648 = vpop.f32.mrf.mxu0
  %v1649 = vadd.f32 %v1600, %v1648
  %v1650 = vpop.f32.mrf.mxu0
  %1651 = vmatprep.mubr.bf16.mxu0 %v1444
  %1652 = vmatmul.mubr.bf16.gmra.mxu0 %v1443
  %v1653 = vpop.f32.mrf.mxu0
  %v1654 = vadd.f32 %v1605, %v1653
  %v1655 = vpop.f32.mrf.mxu0
  %v1656 = vpop.f32.mrf.mxu0
  %v1657 = vadd.f32 %v1608, %v1656
  %v1658 = vpop.f32.mrf.mxu0
  %1659 = vdwg.mxu0
  %1660 = vmatprep.subr.bf16.mxu0 0
  %1661 = vmatpush1.bf16.msra.mxu0 %v635
  %1662 = vmatprep.subr.bf16.mxu0 0
  %1663 = vmatpush1.bf16.msra.mxu0 %v634
  %1664 = vmatprep.subr.bf16.mxu0 0
  %1665 = vmatpush1.bf16.msra.mxu0 %v633
  %1666 = vmatprep.subr.bf16.mxu0 0
  %1667 = vmatpush1.bf16.msra.mxu0 %v632
  %1668 = vmatprep.subr.bf16.mxu0 0
  %1669 = vmatpush1.bf16.msra.mxu0 %v631
  %1670 = vmatprep.subr.bf16.mxu0 0
  %1671 = vmatpush1.bf16.msra.mxu0 %v630
  %1672 = vmatprep.subr.bf16.mxu0 0
  %1673 = vmatpush1.bf16.msra.mxu0 %v629
  %1674 = vmatprep.subr.bf16.mxu0 0
  %1675 = vmatpush1.bf16.msra.mxu0 %v628
  %1676 = vmatprep.subr.bf16.mxu0 0
  %1677 = vmatpush2.bf16.msra.mxu0 0
  %1678 = vmatprep.subr.bf16.mxu0 0
  %1679 = vmatpush2.bf16.msra.mxu0 0
  %1680 = vmatprep.subr.bf16.mxu0 0
  %1681 = vmatpush2.bf16.msra.mxu0 0
  %1682 = vmatprep.subr.bf16.mxu0 0
  %1683 = vmatpush2.bf16.msra.mxu0 0
  %1684 = vmatprep.subr.bf16.mxu0 0
  %1685 = vmatpush2.bf16.msra.mxu0 0
  %1686 = vmatprep.subr.bf16.mxu0 0
  %1687 = vmatpush2.bf16.msra.mxu0 0
  %1688 = vmatprep.subr.bf16.mxu0 0
  %1689 = vmatpush2.bf16.msra.mxu0 0
  %1690 = vmatprep.subr.bf16.mxu0 0
  %1691 = vmatpush2.bf16.msra.mxu0 0
  %1692 = vmatprep.mubr.bf16.mxu0 0
  %1693 = vmatmul.mubr.bf16.gmra.mxu0 %v1436
  %v1694 = vpop.f32.mrf.mxu0
  %v1695 = vadd.f32 %v1646, %v1694
  %v1696 = vpop.f32.mrf.mxu0
  %v1697 = vpop.f32.mrf.mxu0
  %v1698 = vadd.f32 %v1649, %v1697
  %v1699 = vpop.f32.mrf.mxu0
  %1700 = vmatprep.mubr.bf16.mxu0 0
  %1701 = vmatmul.mubr.bf16.gmra.mxu0 %v1445
  %v1702 = vpop.f32.mrf.mxu0
  %v1703 = vadd.f32 %v1654, %v1702
  %v1704 = vpop.f32.mrf.mxu0
  %v1705 = vpop.f32.mrf.mxu0
  %v1706 = vadd.f32 %v1657, %v1705
  %v1707 = vpop.f32.mrf.mxu0
  %1708 = vdwg.mxu0
  %v1709 = vmul.f32 %v1695, %v957
  %v1710 = vmul.f32 %v1698, %v957
  %v1711 = vmul.f32 %v1703, %v957
  %v1712 = vmul.f32 %v1706, %v957
  %v1713 = vadd.f32 %v1709, %v967
  %v1714 = vadd.f32 %v1710, %v967
  %v1715 = vadd.f32 %v1711, %v967
  %v1716 = vadd.f32 %v1712, %v967
  %v1717 = vmax.f32 %v1713, 0.0
  %v1718 = vmax.f32 %v1714, 0.0
  %v1719 = vmax.f32 %v1715, 0.0
  %v1720 = vmax.f32 %v1716, 0.0
  %v1721 = vmax.f32 %v1347, %v1717
  %v1722 = vmax.f32 %v1348, %v1718
  %v1723 = vmax.f32 %v1349, %v1719
  %v1724 = vmax.f32 %v1350, %v1720
  %s1725 = scalar_lea.vmem %s0, 432
  %v1726 = vld [vmem:[%s1725] sm:$0xff]
  %v1727 = vld [vmem:[%s1725 + $0x8] sm:$0xff]
  %v1728 = vld [vmem:[%s1725 + $0x10] sm:$0xff]
  %v1729 = vld [vmem:[%s1725 + $0x18] sm:$0xff]
  %v1730 = vld [vmem:[%s1725 + $0x20] sm:$0xf]
  %v1731 = vld [vmem:[%s1725 + $0x24] sm:$0xff]
  %v1732 = vld [vmem:[%s1725 + $0x2c] sm:$0xff]
  %v1733 = vld [vmem:[%s1725 + $0x34] sm:$0xff]
  %v1734 = vld [vmem:[%s1725 + $0x3c] sm:$0xff]
  %v1735 = vld [vmem:[%s1725 + $0x44] sm:$0xf]
  %v1736 = vld [vmem:[%s1725 + $0x48] sm:$0xff]
  %v1737 = vld [vmem:[%s1725 + $0x50] sm:$0xff]
  %v1738 = vld [vmem:[%s1725 + $0x58] sm:$0xff]
  %v1739 = vld [vmem:[%s1725 + $0x60] sm:$0xff]
  %v1740 = vld [vmem:[%s1725 + $0x68] sm:$0xf]
  %v1741 = vld [vmem:[%s1725 + $0x6c] sm:$0xff]
  %v1742 = vld [vmem:[%s1725 + $0x74] sm:$0xff]
  %v1743 = vld [vmem:[%s1725 + $0x7c] sm:$0xff]
  %v1744 = vld [vmem:[%s1725 + $0x84] sm:$0xff]
  %v1745 = vld [vmem:[%s1725 + $0x8c] sm:$0xf]
  %v1766 = vunpack.c.l.b16 %v1726
  %v1767 = vunpack.c.h.b16 %v1726
  %v1768 = vunpack.c.l.b16 %v1727
  %v1769 = vunpack.c.h.b16 %v1727
  %v1770 = vunpack.c.l.b16 %v1728
  %v1771 = vunpack.c.h.b16 %v1728
  %v1772 = vunpack.c.l.b16 %v1729
  %v1773 = vunpack.c.h.b16 %v1729
  %v1774 = vunpack.c.l.b16 %v1730
  %v1775 = vunpack.c.l.b16 %v1731
  %v1776 = vunpack.c.h.b16 %v1731
  %v1777 = vunpack.c.l.b16 %v1732
  %v1778 = vunpack.c.h.b16 %v1732
  %v1779 = vunpack.c.l.b16 %v1733
  %v1780 = vunpack.c.h.b16 %v1733
  %v1781 = vunpack.c.l.b16 %v1734
  %v1782 = vunpack.c.h.b16 %v1734
  %v1783 = vunpack.c.l.b16 %v1735
  %v1784 = vunpack.c.l.b16 %v1736
  %v1785 = vunpack.c.h.b16 %v1736
  %v1786 = vunpack.c.l.b16 %v1737
  %v1787 = vunpack.c.h.b16 %v1737
  %v1788 = vunpack.c.l.b16 %v1738
  %v1789 = vunpack.c.h.b16 %v1738
  %v1790 = vunpack.c.l.b16 %v1739
  %v1791 = vunpack.c.h.b16 %v1739
  %v1792 = vunpack.c.l.b16 %v1740
  %v1793 = vunpack.c.l.b16 %v1741
  %v1794 = vunpack.c.h.b16 %v1741
  %v1795 = vunpack.c.l.b16 %v1742
  %v1796 = vunpack.c.h.b16 %v1742
  %v1797 = vunpack.c.l.b16 %v1743
  %v1798 = vunpack.c.h.b16 %v1743
  %v1799 = vunpack.c.l.b16 %v1744
  %v1800 = vunpack.c.h.b16 %v1744
  %v1801 = vunpack.c.l.b16 %v1745
  %v1802 = vpack.c.b16 %v1775, %v1766
  %v1803 = vpack.c.b16 %v1776, %v1767
  %v1804 = vpack.c.b16 %v1777, %v1768
  %v1805 = vpack.c.b16 %v1778, %v1769
  %v1806 = vpack.c.b16 %v1779, %v1770
  %v1807 = vpack.c.b16 %v1780, %v1771
  %v1808 = vpack.c.b16 %v1781, %v1772
  %v1809 = vpack.c.b16 %v1782, %v1773
  %v1810 = vpack.c.b16 %v1783, %v1774
  %v1811 = vpack.c.b16 %v1793, %v1784
  %v1812 = vpack.c.b16 %v1794, %v1785
  %v1813 = vpack.c.b16 %v1795, %v1786
  %v1814 = vpack.c.b16 %v1796, %v1787
  %v1815 = vpack.c.b16 %v1797, %v1788
  %v1816 = vpack.c.b16 %v1798, %v1789
  %v1817 = vpack.c.b16 %v1799, %v1790
  %v1818 = vpack.c.b16 %v1800, %v1791
  %v1819 = vpack.c.b16 %v1801, %v1792
  %1838 = vmatprep.subr.bf16.mxu0 0
  %1839 = vmatpush1.bf16.msra.mxu0 %v571
  %1840 = vmatprep.subr.bf16.mxu0 0
  %1841 = vmatpush1.bf16.msra.mxu0 %v570
  %1842 = vmatprep.subr.bf16.mxu0 0
  %1843 = vmatpush1.bf16.msra.mxu0 %v569
  %1844 = vmatprep.subr.bf16.mxu0 0
  %1845 = vmatpush1.bf16.msra.mxu0 %v568
  %1846 = vmatprep.subr.bf16.mxu0 0
  %1847 = vmatpush1.bf16.msra.mxu0 %v567
  %1848 = vmatprep.subr.bf16.mxu0 0
  %1849 = vmatpush1.bf16.msra.mxu0 %v566
  %1850 = vmatprep.subr.bf16.mxu0 0
  %1851 = vmatpush1.bf16.msra.mxu0 %v565
  %1852 = vmatprep.subr.bf16.mxu0 0
  %1853 = vmatpush1.bf16.msra.mxu0 %v564
  %1854 = vmatprep.subr.bf16.mxu0 0
  %1855 = vmatpush2.bf16.msra.mxu0 %v579
  %1856 = vmatprep.subr.bf16.mxu0 0
  %1857 = vmatpush2.bf16.msra.mxu0 %v578
  %1858 = vmatprep.subr.bf16.mxu0 0
  %1859 = vmatpush2.bf16.msra.mxu0 %v577
  %1860 = vmatprep.subr.bf16.mxu0 0
  %1861 = vmatpush2.bf16.msra.mxu0 %v576
  %1862 = vmatprep.subr.bf16.mxu0 0
  %1863 = vmatpush2.bf16.msra.mxu0 %v575
  %1864 = vmatprep.subr.bf16.mxu0 0
  %1865 = vmatpush2.bf16.msra.mxu0 %v574
  %1866 = vmatprep.subr.bf16.mxu0 0
  %1867 = vmatpush2.bf16.msra.mxu0 %v573
  %1868 = vmatprep.subr.bf16.mxu0 0
  %1869 = vmatpush2.bf16.msra.mxu0 %v572
  %1870 = vmatprep.mubr.bf16.mxu0 %v1803
  %1871 = vmatmul.mubr.bf16.gmra.mxu0 %v1802
  %v1872 = vpop.f32.mrf.mxu0
  %v1873 = vadd.f32 0.0, %v1872
  %v1874 = vpop.f32.mrf.mxu0
  %v1875 = vpop.f32.mrf.mxu0
  %v1876 = vadd.f32 0.0, %v1875
  %v1877 = vpop.f32.mrf.mxu0
  %1878 = vmatprep.mubr.bf16.mxu0 %v1812
  %1879 = vmatmul.mubr.bf16.gmra.mxu0 %v1811
  %v1880 = vpop.f32.mrf.mxu0
  %v1881 = vadd.f32 0.0, %v1880
  %v1882 = vpop.f32.mrf.mxu0
  %v1883 = vpop.f32.mrf.mxu0
  %v1884 = vadd.f32 0.0, %v1883
  %v1885 = vpop.f32.mrf.mxu0
  %1886 = vdwg.mxu0
  %1887 = vmatprep.subr.bf16.mxu0 0
  %1888 = vmatpush1.bf16.msra.mxu0 %v587
  %1889 = vmatprep.subr.bf16.mxu0 0
  %1890 = vmatpush1.bf16.msra.mxu0 %v586
  %1891 = vmatprep.subr.bf16.mxu0 0
  %1892 = vmatpush1.bf16.msra.mxu0 %v585
  %1893 = vmatprep.subr.bf16.mxu0 0
  %1894 = vmatpush1.bf16.msra.mxu0 %v584
  %1895 = vmatprep.subr.bf16.mxu0 0
  %1896 = vmatpush1.bf16.msra.mxu0 %v583
  %1897 = vmatprep.subr.bf16.mxu0 0
  %1898 = vmatpush1.bf16.msra.mxu0 %v582
  %1899 = vmatprep.subr.bf16.mxu0 0
  %1900 = vmatpush1.bf16.msra.mxu0 %v581
  %1901 = vmatprep.subr.bf16.mxu0 0
  %1902 = vmatpush1.bf16.msra.mxu0 %v580
  %1903 = vmatprep.subr.bf16.mxu0 0
  %1904 = vmatpush2.bf16.msra.mxu0 %v595
  %1905 = vmatprep.subr.bf16.mxu0 0
  %1906 = vmatpush2.bf16.msra.mxu0 %v594
  %1907 = vmatprep.subr.bf16.mxu0 0
  %1908 = vmatpush2.bf16.msra.mxu0 %v593
  %1909 = vmatprep.subr.bf16.mxu0 0
  %1910 = vmatpush2.bf16.msra.mxu0 %v592
  %1911 = vmatprep.subr.bf16.mxu0 0
  %1912 = vmatpush2.bf16.msra.mxu0 %v591
  %1913 = vmatprep.subr.bf16.mxu0 0
  %1914 = vmatpush2.bf16.msra.mxu0 %v590
  %1915 = vmatprep.subr.bf16.mxu0 0
  %1916 = vmatpush2.bf16.msra.mxu0 %v589
  %1917 = vmatprep.subr.bf16.mxu0 0
  %1918 = vmatpush2.bf16.msra.mxu0 %v588
  %1919 = vmatprep.mubr.bf16.mxu0 %v1805
  %1920 = vmatmul.mubr.bf16.gmra.mxu0 %v1804
  %v1921 = vpop.f32.mrf.mxu0
  %v1922 = vadd.f32 %v1873, %v1921
  %v1923 = vpop.f32.mrf.mxu0
  %v1924 = vpop.f32.mrf.mxu0
  %v1925 = vadd.f32 %v1876, %v1924
  %v1926 = vpop.f32.mrf.mxu0
  %1927 = vmatprep.mubr.bf16.mxu0 %v1814
  %1928 = vmatmul.mubr.bf16.gmra.mxu0 %v1813
  %v1929 = vpop.f32.mrf.mxu0
  %v1930 = vadd.f32 %v1881, %v1929
  %v1931 = vpop.f32.mrf.mxu0
  %v1932 = vpop.f32.mrf.mxu0
  %v1933 = vadd.f32 %v1884, %v1932
  %v1934 = vpop.f32.mrf.mxu0
  %1935 = vdwg.mxu0
  %1936 = vmatprep.subr.bf16.mxu0 0
  %1937 = vmatpush1.bf16.msra.mxu0 %v603
  %1938 = vmatprep.subr.bf16.mxu0 0
  %1939 = vmatpush1.bf16.msra.mxu0 %v602
  %1940 = vmatprep.subr.bf16.mxu0 0
  %1941 = vmatpush1.bf16.msra.mxu0 %v601
  %1942 = vmatprep.subr.bf16.mxu0 0
  %1943 = vmatpush1.bf16.msra.mxu0 %v600
  %1944 = vmatprep.subr.bf16.mxu0 0
  %1945 = vmatpush1.bf16.msra.mxu0 %v599
  %1946 = vmatprep.subr.bf16.mxu0 0
  %1947 = vmatpush1.bf16.msra.mxu0 %v598
  %1948 = vmatprep.subr.bf16.mxu0 0
  %1949 = vmatpush1.bf16.msra.mxu0 %v597
  %1950 = vmatprep.subr.bf16.mxu0 0
  %1951 = vmatpush1.bf16.msra.mxu0 %v596
  %1952 = vmatprep.subr.bf16.mxu0 0
  %1953 = vmatpush2.bf16.msra.mxu0 %v611
  %1954 = vmatprep.subr.bf16.mxu0 0
  %1955 = vmatpush2.bf16.msra.mxu0 %v610
  %1956 = vmatprep.subr.bf16.mxu0 0
  %1957 = vmatpush2.bf16.msra.mxu0 %v609
  %1958 = vmatprep.subr.bf16.mxu0 0
  %1959 = vmatpush2.bf16.msra.mxu0 %v608
  %1960 = vmatprep.subr.bf16.mxu0 0
  %1961 = vmatpush2.bf16.msra.mxu0 %v607
  %1962 = vmatprep.subr.bf16.mxu0 0
  %1963 = vmatpush2.bf16.msra.mxu0 %v606
  %1964 = vmatprep.subr.bf16.mxu0 0
  %1965 = vmatpush2.bf16.msra.mxu0 %v605
  %1966 = vmatprep.subr.bf16.mxu0 0
  %1967 = vmatpush2.bf16.msra.mxu0 %v604
  %1968 = vmatprep.mubr.bf16.mxu0 %v1807
  %1969 = vmatmul.mubr.bf16.gmra.mxu0 %v1806
  %v1970 = vpop.f32.mrf.mxu0
  %v1971 = vadd.f32 %v1922, %v1970
  %v1972 = vpop.f32.mrf.mxu0
  %v1973 = vpop.f32.mrf.mxu0
  %v1974 = vadd.f32 %v1925, %v1973
  %v1975 = vpop.f32.mrf.mxu0
  %1976 = vmatprep.mubr.bf16.mxu0 %v1816
  %1977 = vmatmul.mubr.bf16.gmra.mxu0 %v1815
  %v1978 = vpop.f32.mrf.mxu0
  %v1979 = vadd.f32 %v1930, %v1978
  %v1980 = vpop.f32.mrf.mxu0
  %v1981 = vpop.f32.mrf.mxu0
  %v1982 = vadd.f32 %v1933, %v1981
  %v1983 = vpop.f32.mrf.mxu0
  %1984 = vdwg.mxu0
  %1985 = vmatprep.subr.bf16.mxu0 0
  %1986 = vmatpush1.bf16.msra.mxu0 %v619
  %1987 = vmatprep.subr.bf16.mxu0 0
  %1988 = vmatpush1.bf16.msra.mxu0 %v618
  %1989 = vmatprep.subr.bf16.mxu0 0
  %1990 = vmatpush1.bf16.msra.mxu0 %v617
  %1991 = vmatprep.subr.bf16.mxu0 0
  %1992 = vmatpush1.bf16.msra.mxu0 %v616
  %1993 = vmatprep.subr.bf16.mxu0 0
  %1994 = vmatpush1.bf16.msra.mxu0 %v615
  %1995 = vmatprep.subr.bf16.mxu0 0
  %1996 = vmatpush1.bf16.msra.mxu0 %v614
  %1997 = vmatprep.subr.bf16.mxu0 0
  %1998 = vmatpush1.bf16.msra.mxu0 %v613
  %1999 = vmatprep.subr.bf16.mxu0 0
  %2000 = vmatpush1.bf16.msra.mxu0 %v612
  %2001 = vmatprep.subr.bf16.mxu0 0
  %2002 = vmatpush2.bf16.msra.mxu0 %v627
  %2003 = vmatprep.subr.bf16.mxu0 0
  %2004 = vmatpush2.bf16.msra.mxu0 %v626
  %2005 = vmatprep.subr.bf16.mxu0 0
  %2006 = vmatpush2.bf16.msra.mxu0 %v625
  %2007 = vmatprep.subr.bf16.mxu0 0
  %2008 = vmatpush2.bf16.msra.mxu0 %v624
  %2009 = vmatprep.subr.bf16.mxu0 0
  %2010 = vmatpush2.bf16.msra.mxu0 %v623
  %2011 = vmatprep.subr.bf16.mxu0 0
  %2012 = vmatpush2.bf16.msra.mxu0 %v622
  %2013 = vmatprep.subr.bf16.mxu0 0
  %2014 = vmatpush2.bf16.msra.mxu0 %v621
  %2015 = vmatprep.subr.bf16.mxu0 0
  %2016 = vmatpush2.bf16.msra.mxu0 %v620
  %2017 = vmatprep.mubr.bf16.mxu0 %v1809
  %2018 = vmatmul.mubr.bf16.gmra.mxu0 %v1808
  %v2019 = vpop.f32.mrf.mxu0
  %v2020 = vadd.f32 %v1971, %v2019
  %v2021 = vpop.f32.mrf.mxu0
  %v2022 = vpop.f32.mrf.mxu0
  %v2023 = vadd.f32 %v1974, %v2022
  %v2024 = vpop.f32.mrf.mxu0
  %2025 = vmatprep.mubr.bf16.mxu0 %v1818
  %2026 = vmatmul.mubr.bf16.gmra.mxu0 %v1817
  %v2027 = vpop.f32.mrf.mxu0
  %v2028 = vadd.f32 %v1979, %v2027
  %v2029 = vpop.f32.mrf.mxu0
  %v2030 = vpop.f32.mrf.mxu0
  %v2031 = vadd.f32 %v1982, %v2030
  %v2032 = vpop.f32.mrf.mxu0
  %2033 = vdwg.mxu0
  %2034 = vmatprep.subr.bf16.mxu0 0
  %2035 = vmatpush1.bf16.msra.mxu0 %v635
  %2036 = vmatprep.subr.bf16.mxu0 0
  %2037 = vmatpush1.bf16.msra.mxu0 %v634
  %2038 = vmatprep.subr.bf16.mxu0 0
  %2039 = vmatpush1.bf16.msra.mxu0 %v633
  %2040 = vmatprep.subr.bf16.mxu0 0
  %2041 = vmatpush1.bf16.msra.mxu0 %v632
  %2042 = vmatprep.subr.bf16.mxu0 0
  %2043 = vmatpush1.bf16.msra.mxu0 %v631
  %2044 = vmatprep.subr.bf16.mxu0 0
  %2045 = vmatpush1.bf16.msra.mxu0 %v630
  %2046 = vmatprep.subr.bf16.mxu0 0
  %2047 = vmatpush1.bf16.msra.mxu0 %v629
  %2048 = vmatprep.subr.bf16.mxu0 0
  %2049 = vmatpush1.bf16.msra.mxu0 %v628
  %2050 = vmatprep.subr.bf16.mxu0 0
  %2051 = vmatpush2.bf16.msra.mxu0 0
  %2052 = vmatprep.subr.bf16.mxu0 0
  %2053 = vmatpush2.bf16.msra.mxu0 0
  %2054 = vmatprep.subr.bf16.mxu0 0
  %2055 = vmatpush2.bf16.msra.mxu0 0
  %2056 = vmatprep.subr.bf16.mxu0 0
  %2057 = vmatpush2.bf16.msra.mxu0 0
  %2058 = vmatprep.subr.bf16.mxu0 0
  %2059 = vmatpush2.bf16.msra.mxu0 0
  %2060 = vmatprep.subr.bf16.mxu0 0
  %2061 = vmatpush2.bf16.msra.mxu0 0
  %2062 = vmatprep.subr.bf16.mxu0 0
  %2063 = vmatpush2.bf16.msra.mxu0 0
  %2064 = vmatprep.subr.bf16.mxu0 0
  %2065 = vmatpush2.bf16.msra.mxu0 0
  %2066 = vmatprep.mubr.bf16.mxu0 0
  %2067 = vmatmul.mubr.bf16.gmra.mxu0 %v1810
  %v2068 = vpop.f32.mrf.mxu0
  %v2069 = vadd.f32 %v2020, %v2068
  %v2070 = vpop.f32.mrf.mxu0
  %v2071 = vpop.f32.mrf.mxu0
  %v2072 = vadd.f32 %v2023, %v2071
  %v2073 = vpop.f32.mrf.mxu0
  %2074 = vmatprep.mubr.bf16.mxu0 0
  %2075 = vmatmul.mubr.bf16.gmra.mxu0 %v1819
  %v2076 = vpop.f32.mrf.mxu0
  %v2077 = vadd.f32 %v2028, %v2076
  %v2078 = vpop.f32.mrf.mxu0
  %v2079 = vpop.f32.mrf.mxu0
  %v2080 = vadd.f32 %v2031, %v2079
  %v2081 = vpop.f32.mrf.mxu0
  %2082 = vdwg.mxu0
  %v2083 = vmul.f32 %v2069, %v957
  %v2084 = vmul.f32 %v2072, %v957
  %v2085 = vmul.f32 %v2077, %v957
  %v2086 = vmul.f32 %v2080, %v957
  %v2087 = vadd.f32 %v2083, %v967
  %v2088 = vadd.f32 %v2084, %v967
  %v2089 = vadd.f32 %v2085, %v967
  %v2090 = vadd.f32 %v2086, %v967
  %v2091 = vmax.f32 %v2087, 0.0
  %v2092 = vmax.f32 %v2088, 0.0
  %v2093 = vmax.f32 %v2089, 0.0
  %v2094 = vmax.f32 %v2090, 0.0
  %v2095 = vmax.f32 %v1721, %v2091
  %v2096 = vmax.f32 %v1722, %v2092
  %v2097 = vmax.f32 %v1723, %v2093
  %v2098 = vmax.f32 %v1724, %v2094
  %2099 = vst [vmem:[%s4] sm:$0xff] %v2095
  %2100 = vst [vmem:[%s4 + $0x8] sm:$0xff] %v2096
  %2101 = vst [vmem:[%s4 + $0x10] sm:$0xff] %v2097
  %2102 = vst [vmem:[%s4 + $0x18] sm:$0xff] %v2098
  // Predicated region
  $region18: #{enn_forward.5} parent=0 // pred_check
    _
  $region19: #{enn_forward.5} parent=0 // pred_check_branch
    %2104 = sbr.rel (0) target = $region21
  $region20: #{enn_forward.5} parent=0 // pred_region
    _
  $region21: #{enn_forward.5} parent=0 // pred_fallthru
    _
  // Predicated region
  $region22: #{enn_forward.5} parent=0 // pred_check
    _
  $region23: #{enn_forward.5} parent=0 // pred_check_branch
    %2106 = sbr.rel (0) target = $region25
  $region24: #{enn_forward.5} parent=0 // pred_region
    _
  $region25: #{enn_forward.5} parent=0 // pred_fallthru
    _

// kernel: enn_forward.6
$region0: #{enn_forward.6}
  #allocation0 [shape = 'u32[]', space=smem, size = 0x4, offset = 0x4, fixed_abs, tag = 'smem constant byte address 0x4 - core index']
  #allocation1 [shape = 'u32[144,128]{1,0:T(1,128)}', space=vmem, size = 0x12000, scoped, tag = 'internal scratch']
  %s0 = inlined_call_operand.vmem [shape: bf16[4,8,1152], index: 0, kind: input, shape index: {}]
  %s1 = inlined_call_operand.vmem [shape: bf16[1152,256], index: 1, kind: input, shape index: {}]
  %s2 = inlined_call_operand.vmem [shape: f32[1,256], index: 2, kind: input, shape index: {}]
  %s3 = inlined_call_operand.vmem [shape: f32[1,256], index: 3, kind: input, shape index: {}]
  %s4 = inlined_call_operand.vmem [shape: f32[8,256], index: 4, kind: output, shape index: {}]
  %s5 = sld [smem:[#allocation0]]
  $region26: #{enn_forward.6} parent=0
    _
  %s7 = ssub.s32 1, %s5
  %s8 = scalar_select 0, %s7, %s5
  // Predicated region
  $region2: #{enn_forward.6} parent=0 // pred_check
    _
  $region3: #{enn_forward.6} parent=0 // pred_check_branch
    %10 = sbr.rel (0) target = $region5
  $region4: #{enn_forward.6} parent=0 // pred_region
    _
  $region5: #{enn_forward.6} parent=0 // pred_fallthru
    _
  // Predicated region
  $region6: #{enn_forward.6} parent=0 // pred_check
    _
  $region7: #{enn_forward.6} parent=0 // pred_check_branch
    %12 = sbr.rel (0) target = $region9
  $region8: #{enn_forward.6} parent=0 // pred_region
    _
  $region9: #{enn_forward.6} parent=0 // pred_fallthru
    _
  // Predicated region
  $region10: #{enn_forward.6} parent=0 // pred_check
    _
  $region11: #{enn_forward.6} parent=0 // pred_check_branch
    %14 = sbr.rel (0) target = $region13
  $region12: #{enn_forward.6} parent=0 // pred_region
    _
  $region13: #{enn_forward.6} parent=0 // pred_fallthru
    _
  // Predicated region
  $region14: #{enn_forward.6} parent=0 // pred_check
    _
  $region15: #{enn_forward.6} parent=0 // pred_check_branch
    %16 = sbr.rel (0) target = $region17
  $region16: #{enn_forward.6} parent=0 // pred_region
    _
  $region17: #{enn_forward.6} parent=0 // pred_fallthru
    _
  %v18 = vld [vmem:[%s1] sm:$0xff]
  %v19 = vld [vmem:[%s1 + $0x8] sm:$0xff]
  %v20 = vld [vmem:[%s1 + $0x10] sm:$0xff]
  %v21 = vld [vmem:[%s1 + $0x18] sm:$0xff]
  %v22 = vld [vmem:[%s1 + $0x20] sm:$0xff]
  %v23 = vld [vmem:[%s1 + $0x28] sm:$0xff]
  %v24 = vld [vmem:[%s1 + $0x30] sm:$0xff]
  %v25 = vld [vmem:[%s1 + $0x38] sm:$0xff]
  %v26 = vld [vmem:[%s1 + $0x40] sm:$0xff]
  %v27 = vld [vmem:[%s1 + $0x48] sm:$0xff]
  %v28 = vld [vmem:[%s1 + $0x50] sm:$0xff]
  %v29 = vld [vmem:[%s1 + $0x58] sm:$0xff]
  %v30 = vld [vmem:[%s1 + $0x60] sm:$0xff]
  %v31 = vld [vmem:[%s1 + $0x68] sm:$0xff]
  %v32 = vld [vmem:[%s1 + $0x70] sm:$0xff]
  %v33 = vld [vmem:[%s1 + $0x78] sm:$0xff]
  %v34 = vld [vmem:[%s1 + $0x80] sm:$0xff]
  %v35 = vld [vmem:[%s1 + $0x88] sm:$0xff]
  %v36 = vld [vmem:[%s1 + $0x90] sm:$0xff]
  %v37 = vld [vmem:[%s1 + $0x98] sm:$0xff]
  %v38 = vld [vmem:[%s1 + $0xa0] sm:$0xff]
  %v39 = vld [vmem:[%s1 + $0xa8] sm:$0xff]
  %v40 = vld [vmem:[%s1 + $0xb0] sm:$0xff]
  %v41 = vld [vmem:[%s1 + $0xb8] sm:$0xff]
  %v42 = vld [vmem:[%s1 + $0xc0] sm:$0xff]
  %v43 = vld [vmem:[%s1 + $0xc8] sm:$0xff]
  %v44 = vld [vmem:[%s1 + $0xd0] sm:$0xff]
  %v45 = vld [vmem:[%s1 + $0xd8] sm:$0xff]
  %v46 = vld [vmem:[%s1 + $0xe0] sm:$0xff]
  %v47 = vld [vmem:[%s1 + $0xe8] sm:$0xff]
  %v48 = vld [vmem:[%s1 + $0xf0] sm:$0xff]
  %v49 = vld [vmem:[%s1 + $0xf8] sm:$0xff]
  %v50 = vld [vmem:[%s1 + $0x100] sm:$0xff]
  %v51 = vld [vmem:[%s1 + $0x108] sm:$0xff]
  %v52 = vld [vmem:[%s1 + $0x110] sm:$0xff]
  %v53 = vld [vmem:[%s1 + $0x118] sm:$0xff]
  %v54 = vld [vmem:[%s1 + $0x120] sm:$0xff]
  %v55 = vld [vmem:[%s1 + $0x128] sm:$0xff]
  %v56 = vld [vmem:[%s1 + $0x130] sm:$0xff]
  %v57 = vld [vmem:[%s1 + $0x138] sm:$0xff]
  %v58 = vld [vmem:[%s1 + $0x140] sm:$0xff]
  %v59 = vld [vmem:[%s1 + $0x148] sm:$0xff]
  %v60 = vld [vmem:[%s1 + $0x150] sm:$0xff]
  %v61 = vld [vmem:[%s1 + $0x158] sm:$0xff]
  %v62 = vld [vmem:[%s1 + $0x160] sm:$0xff]
  %v63 = vld [vmem:[%s1 + $0x168] sm:$0xff]
  %v64 = vld [vmem:[%s1 + $0x170] sm:$0xff]
  %v65 = vld [vmem:[%s1 + $0x178] sm:$0xff]
  %v66 = vld [vmem:[%s1 + $0x180] sm:$0xff]
  %v67 = vld [vmem:[%s1 + $0x188] sm:$0xff]
  %v68 = vld [vmem:[%s1 + $0x190] sm:$0xff]
  %v69 = vld [vmem:[%s1 + $0x198] sm:$0xff]
  %v70 = vld [vmem:[%s1 + $0x1a0] sm:$0xff]
  %v71 = vld [vmem:[%s1 + $0x1a8] sm:$0xff]
  %v72 = vld [vmem:[%s1 + $0x1b0] sm:$0xff]
  %v73 = vld [vmem:[%s1 + $0x1b8] sm:$0xff]
  %v74 = vld [vmem:[%s1 + $0x1c0] sm:$0xff]
  %v75 = vld [vmem:[%s1 + $0x1c8] sm:$0xff]
  %v76 = vld [vmem:[%s1 + $0x1d0] sm:$0xff]
  %v77 = vld [vmem:[%s1 + $0x1d8] sm:$0xff]
  %v78 = vld [vmem:[%s1 + $0x1e0] sm:$0xff]
  %v79 = vld [vmem:[%s1 + $0x1e8] sm:$0xff]
  %v80 = vld [vmem:[%s1 + $0x1f0] sm:$0xff]
  %v81 = vld [vmem:[%s1 + $0x1f8] sm:$0xff]
  %v82 = vld [vmem:[%s1 + $0x200] sm:$0xff]
  %v83 = vld [vmem:[%s1 + $0x208] sm:$0xff]
  %v84 = vld [vmem:[%s1 + $0x210] sm:$0xff]
  %v85 = vld [vmem:[%s1 + $0x218] sm:$0xff]
  %v86 = vld [vmem:[%s1 + $0x220] sm:$0xff]
  %v87 = vld [vmem:[%s1 + $0x228] sm:$0xff]
  %v88 = vld [vmem:[%s1 + $0x230] sm:$0xff]
  %v89 = vld [vmem:[%s1 + $0x238] sm:$0xff]
  %v90 = vld [vmem:[%s1 + $0x240] sm:$0xff]
  %v91 = vld [vmem:[%s1 + $0x248] sm:$0xff]
  %v92 = vld [vmem:[%s1 + $0x250] sm:$0xff]
  %v93 = vld [vmem:[%s1 + $0x258] sm:$0xff]
  %v94 = vld [vmem:[%s1 + $0x260] sm:$0xff]
  %v95 = vld [vmem:[%s1 + $0x268] sm:$0xff]
  %v96 = vld [vmem:[%s1 + $0x270] sm:$0xff]
  %v97 = vld [vmem:[%s1 + $0x278] sm:$0xff]
  %v98 = vld [vmem:[%s1 + $0x280] sm:$0xff]
  %v99 = vld [vmem:[%s1 + $0x288] sm:$0xff]
  %v100 = vld [vmem:[%s1 + $0x290] sm:$0xff]
  %v101 = vld [vmem:[%s1 + $0x298] sm:$0xff]
  %v102 = vld [vmem:[%s1 + $0x2a0] sm:$0xff]
  %v103 = vld [vmem:[%s1 + $0x2a8] sm:$0xff]
  %v104 = vld [vmem:[%s1 + $0x2b0] sm:$0xff]
  %v105 = vld [vmem:[%s1 + $0x2b8] sm:$0xff]
  %v106 = vld [vmem:[%s1 + $0x2c0] sm:$0xff]
  %v107 = vld [vmem:[%s1 + $0x2c8] sm:$0xff]
  %v108 = vld [vmem:[%s1 + $0x2d0] sm:$0xff]
  %v109 = vld [vmem:[%s1 + $0x2d8] sm:$0xff]
  %v110 = vld [vmem:[%s1 + $0x2e0] sm:$0xff]
  %v111 = vld [vmem:[%s1 + $0x2e8] sm:$0xff]
  %v112 = vld [vmem:[%s1 + $0x2f0] sm:$0xff]
  %v113 = vld [vmem:[%s1 + $0x2f8] sm:$0xff]
  %v114 = vld [vmem:[%s1 + $0x300] sm:$0xff]
  %v115 = vld [vmem:[%s1 + $0x308] sm:$0xff]
  %v116 = vld [vmem:[%s1 + $0x310] sm:$0xff]
  %v117 = vld [vmem:[%s1 + $0x318] sm:$0xff]
  %v118 = vld [vmem:[%s1 + $0x320] sm:$0xff]
  %v119 = vld [vmem:[%s1 + $0x328] sm:$0xff]
  %v120 = vld [vmem:[%s1 + $0x330] sm:$0xff]
  %v121 = vld [vmem:[%s1 + $0x338] sm:$0xff]
  %v122 = vld [vmem:[%s1 + $0x340] sm:$0xff]
  %v123 = vld [vmem:[%s1 + $0x348] sm:$0xff]
  %v124 = vld [vmem:[%s1 + $0x350] sm:$0xff]
  %v125 = vld [vmem:[%s1 + $0x358] sm:$0xff]
  %v126 = vld [vmem:[%s1 + $0x360] sm:$0xff]
  %v127 = vld [vmem:[%s1 + $0x368] sm:$0xff]
  %v128 = vld [vmem:[%s1 + $0x370] sm:$0xff]
  %v129 = vld [vmem:[%s1 + $0x378] sm:$0xff]
  %v130 = vld [vmem:[%s1 + $0x380] sm:$0xff]
  %v131 = vld [vmem:[%s1 + $0x388] sm:$0xff]
  %v132 = vld [vmem:[%s1 + $0x390] sm:$0xff]
  %v133 = vld [vmem:[%s1 + $0x398] sm:$0xff]
  %v134 = vld [vmem:[%s1 + $0x3a0] sm:$0xff]
  %v135 = vld [vmem:[%s1 + $0x3a8] sm:$0xff]
  %v136 = vld [vmem:[%s1 + $0x3b0] sm:$0xff]
  %v137 = vld [vmem:[%s1 + $0x3b8] sm:$0xff]
  %v138 = vld [vmem:[%s1 + $0x3c0] sm:$0xff]
  %v139 = vld [vmem:[%s1 + $0x3c8] sm:$0xff]
  %v140 = vld [vmem:[%s1 + $0x3d0] sm:$0xff]
  %v141 = vld [vmem:[%s1 + $0x3d8] sm:$0xff]
  %v142 = vld [vmem:[%s1 + $0x3e0] sm:$0xff]
  %v143 = vld [vmem:[%s1 + $0x3e8] sm:$0xff]
  %v144 = vld [vmem:[%s1 + $0x3f0] sm:$0xff]
  %v145 = vld [vmem:[%s1 + $0x3f8] sm:$0xff]
  %v146 = vld [vmem:[%s1 + $0x400] sm:$0xff]
  %v147 = vld [vmem:[%s1 + $0x408] sm:$0xff]
  %v148 = vld [vmem:[%s1 + $0x410] sm:$0xff]
  %v149 = vld [vmem:[%s1 + $0x418] sm:$0xff]
  %v150 = vld [vmem:[%s1 + $0x420] sm:$0xff]
  %v151 = vld [vmem:[%s1 + $0x428] sm:$0xff]
  %v152 = vld [vmem:[%s1 + $0x430] sm:$0xff]
  %v153 = vld [vmem:[%s1 + $0x438] sm:$0xff]
  %v154 = vld [vmem:[%s1 + $0x440] sm:$0xff]
  %v155 = vld [vmem:[%s1 + $0x448] sm:$0xff]
  %v156 = vld [vmem:[%s1 + $0x450] sm:$0xff]
  %v157 = vld [vmem:[%s1 + $0x458] sm:$0xff]
  %v158 = vld [vmem:[%s1 + $0x460] sm:$0xff]
  %v159 = vld [vmem:[%s1 + $0x468] sm:$0xff]
  %v160 = vld [vmem:[%s1 + $0x470] sm:$0xff]
  %v161 = vld [vmem:[%s1 + $0x478] sm:$0xff]
  %v162 = vld [vmem:[%s2] sm:$0x3]
  %v163 = vld [vmem:[%s3] sm:$0x3]
  %v164 = vld [vmem:[%s0] sm:$0xff]
  %v165 = vld [vmem:[%s0 + $0x8] sm:$0xff]
  %v166 = vld [vmem:[%s0 + $0x10] sm:$0xff]
  %v167 = vld [vmem:[%s0 + $0x18] sm:$0xff]
  %v168 = vld [vmem:[%s0 + $0x20] sm:$0xf]
  %v174 = vunpack.c.l.b16 %v164
  %v175 = vunpack.c.h.b16 %v164
  %v176 = vunpack.c.l.b16 %v165
  %v177 = vunpack.c.h.b16 %v165
  %v178 = vunpack.c.l.b16 %v166
  %v179 = vunpack.c.h.b16 %v166
  %v180 = vunpack.c.l.b16 %v167
  %v181 = vunpack.c.h.b16 %v167
  %v182 = vunpack.c.l.b16 %v168
  %v183 = vpack.c.b16 %v174, %v174
  %v184 = vpack.c.b16 %v175, %v175
  %v185 = vpack.c.b16 %v176, %v176
  %v186 = vpack.c.b16 %v177, %v177
  %v187 = vpack.c.b16 %v178, %v178
  %v188 = vpack.c.b16 %v179, %v179
  %v189 = vpack.c.b16 %v180, %v180
  %v190 = vpack.c.b16 %v181, %v181
  %v191 = vpack.c.b16 %v182, %v182
  %v345 = vunpack.c.l.b16 %v18
  %v346 = vunpack.c.h.b16 %v18
  %v347 = vunpack.c.l.b16 %v19
  %v348 = vunpack.c.h.b16 %v19
  %v349 = vunpack.c.l.b16 %v20
  %v350 = vunpack.c.h.b16 %v20
  %v351 = vunpack.c.l.b16 %v21
  %v352 = vunpack.c.h.b16 %v21
  %v353 = vunpack.c.l.b16 %v22
  %v354 = vunpack.c.h.b16 %v22
  %v355 = vunpack.c.l.b16 %v23
  %v356 = vunpack.c.h.b16 %v23
  %v357 = vunpack.c.l.b16 %v24
  %v358 = vunpack.c.h.b16 %v24
  %v359 = vunpack.c.l.b16 %v25
  %v360 = vunpack.c.h.b16 %v25
  %v361 = vunpack.c.l.b16 %v26
  %v362 = vunpack.c.h.b16 %v26
  %v363 = vunpack.c.l.b16 %v27
  %v364 = vunpack.c.h.b16 %v27
  %v365 = vunpack.c.l.b16 %v28
  %v366 = vunpack.c.h.b16 %v28
  %v367 = vunpack.c.l.b16 %v29
  %v368 = vunpack.c.h.b16 %v29
  %v369 = vunpack.c.l.b16 %v30
  %v370 = vunpack.c.h.b16 %v30
  %v371 = vunpack.c.l.b16 %v31
  %v372 = vunpack.c.h.b16 %v31
  %v373 = vunpack.c.l.b16 %v32
  %v374 = vunpack.c.h.b16 %v32
  %v375 = vunpack.c.l.b16 %v33
  %v376 = vunpack.c.h.b16 %v33
  %v377 = vunpack.c.l.b16 %v34
  %v378 = vunpack.c.h.b16 %v34
  %v379 = vunpack.c.l.b16 %v35
  %v380 = vunpack.c.h.b16 %v35
  %v381 = vunpack.c.l.b16 %v36
  %v382 = vunpack.c.h.b16 %v36
  %v383 = vunpack.c.l.b16 %v37
  %v384 = vunpack.c.h.b16 %v37
  %v385 = vunpack.c.l.b16 %v38
  %v386 = vunpack.c.h.b16 %v38
  %v387 = vunpack.c.l.b16 %v39
  %v388 = vunpack.c.h.b16 %v39
  %v389 = vunpack.c.l.b16 %v40
  %v390 = vunpack.c.h.b16 %v40
  %v391 = vunpack.c.l.b16 %v41
  %v392 = vunpack.c.h.b16 %v41
  %v393 = vunpack.c.l.b16 %v42
  %v394 = vunpack.c.h.b16 %v42
  %v395 = vunpack.c.l.b16 %v43
  %v396 = vunpack.c.h.b16 %v43
  %v397 = vunpack.c.l.b16 %v44
  %v398 = vunpack.c.h.b16 %v44
  %v399 = vunpack.c.l.b16 %v45
  %v400 = vunpack.c.h.b16 %v45
  %v401 = vunpack.c.l.b16 %v46
  %v402 = vunpack.c.h.b16 %v46
  %v403 = vunpack.c.l.b16 %v47
  %v404 = vunpack.c.h.b16 %v47
  %v405 = vunpack.c.l.b16 %v48
  %v406 = vunpack.c.h.b16 %v48
  %v407 = vunpack.c.l.b16 %v49
  %v408 = vunpack.c.h.b16 %v49
  %v409 = vunpack.c.l.b16 %v50
  %v410 = vunpack.c.h.b16 %v50
  %v411 = vunpack.c.l.b16 %v51
  %v412 = vunpack.c.h.b16 %v51
  %v413 = vunpack.c.l.b16 %v52
  %v414 = vunpack.c.h.b16 %v52
  %v415 = vunpack.c.l.b16 %v53
  %v416 = vunpack.c.h.b16 %v53
  %v417 = vunpack.c.l.b16 %v54
  %v418 = vunpack.c.h.b16 %v54
  %v419 = vunpack.c.l.b16 %v55
  %v420 = vunpack.c.h.b16 %v55
  %v421 = vunpack.c.l.b16 %v56
  %v422 = vunpack.c.h.b16 %v56
  %v423 = vunpack.c.l.b16 %v57
  %v424 = vunpack.c.h.b16 %v57
  %v425 = vunpack.c.l.b16 %v58
  %v426 = vunpack.c.h.b16 %v58
  %v427 = vunpack.c.l.b16 %v59
  %v428 = vunpack.c.h.b16 %v59
  %v429 = vunpack.c.l.b16 %v60
  %v430 = vunpack.c.h.b16 %v60
  %v431 = vunpack.c.l.b16 %v61
  %v432 = vunpack.c.h.b16 %v61
  %v433 = vunpack.c.l.b16 %v62
  %v434 = vunpack.c.h.b16 %v62
  %v435 = vunpack.c.l.b16 %v63
  %v436 = vunpack.c.h.b16 %v63
  %v437 = vunpack.c.l.b16 %v64
  %v438 = vunpack.c.h.b16 %v64
  %v439 = vunpack.c.l.b16 %v65
  %v440 = vunpack.c.h.b16 %v65
  %v441 = vunpack.c.l.b16 %v66
  %v442 = vunpack.c.h.b16 %v66
  %v443 = vunpack.c.l.b16 %v67
  %v444 = vunpack.c.h.b16 %v67
  %v445 = vunpack.c.l.b16 %v68
  %v446 = vunpack.c.h.b16 %v68
  %v447 = vunpack.c.l.b16 %v69
  %v448 = vunpack.c.h.b16 %v69
  %v449 = vunpack.c.l.b16 %v70
  %v450 = vunpack.c.h.b16 %v70
  %v451 = vunpack.c.l.b16 %v71
  %v452 = vunpack.c.h.b16 %v71
  %v453 = vunpack.c.l.b16 %v72
  %v454 = vunpack.c.h.b16 %v72
  %v455 = vunpack.c.l.b16 %v73
  %v456 = vunpack.c.h.b16 %v73
  %v457 = vunpack.c.l.b16 %v74
  %v458 = vunpack.c.h.b16 %v74
  %v459 = vunpack.c.l.b16 %v75
  %v460 = vunpack.c.h.b16 %v75
  %v461 = vunpack.c.l.b16 %v76
  %v462 = vunpack.c.h.b16 %v76
  %v463 = vunpack.c.l.b16 %v77
  %v464 = vunpack.c.h.b16 %v77
  %v465 = vunpack.c.l.b16 %v78
  %v466 = vunpack.c.h.b16 %v78
  %v467 = vunpack.c.l.b16 %v79
  %v468 = vunpack.c.h.b16 %v79
  %v469 = vunpack.c.l.b16 %v80
  %v470 = vunpack.c.h.b16 %v80
  %v471 = vunpack.c.l.b16 %v81
  %v472 = vunpack.c.h.b16 %v81
  %v473 = vunpack.c.l.b16 %v82
  %v474 = vunpack.c.h.b16 %v82
  %v475 = vunpack.c.l.b16 %v83
  %v476 = vunpack.c.h.b16 %v83
  %v477 = vunpack.c.l.b16 %v84
  %v478 = vunpack.c.h.b16 %v84
  %v479 = vunpack.c.l.b16 %v85
  %v480 = vunpack.c.h.b16 %v85
  %v481 = vunpack.c.l.b16 %v86
  %v482 = vunpack.c.h.b16 %v86
  %v483 = vunpack.c.l.b16 %v87
  %v484 = vunpack.c.h.b16 %v87
  %v485 = vunpack.c.l.b16 %v88
  %v486 = vunpack.c.h.b16 %v88
  %v487 = vunpack.c.l.b16 %v89
  %v488 = vunpack.c.h.b16 %v89
  %v489 = vunpack.c.l.b16 %v90
  %v490 = vunpack.c.h.b16 %v90
  %v491 = vunpack.c.l.b16 %v91
  %v492 = vunpack.c.h.b16 %v91
  %v493 = vunpack.c.l.b16 %v92
  %v494 = vunpack.c.h.b16 %v92
  %v495 = vunpack.c.l.b16 %v93
  %v496 = vunpack.c.h.b16 %v93
  %v497 = vunpack.c.l.b16 %v94
  %v498 = vunpack.c.h.b16 %v94
  %v499 = vunpack.c.l.b16 %v95
  %v500 = vunpack.c.h.b16 %v95
  %v501 = vunpack.c.l.b16 %v96
  %v502 = vunpack.c.h.b16 %v96
  %v503 = vunpack.c.l.b16 %v97
  %v504 = vunpack.c.h.b16 %v97
  %v505 = vunpack.c.l.b16 %v98
  %v506 = vunpack.c.h.b16 %v98
  %v507 = vunpack.c.l.b16 %v99
  %v508 = vunpack.c.h.b16 %v99
  %v509 = vunpack.c.l.b16 %v100
  %v510 = vunpack.c.h.b16 %v100
  %v511 = vunpack.c.l.b16 %v101
  %v512 = vunpack.c.h.b16 %v101
  %v513 = vunpack.c.l.b16 %v102
  %v514 = vunpack.c.h.b16 %v102
  %v515 = vunpack.c.l.b16 %v103
  %v516 = vunpack.c.h.b16 %v103
  %v517 = vunpack.c.l.b16 %v104
  %v518 = vunpack.c.h.b16 %v104
  %v519 = vunpack.c.l.b16 %v105
  %v520 = vunpack.c.h.b16 %v105
  %v521 = vunpack.c.l.b16 %v106
  %v522 = vunpack.c.h.b16 %v106
  %v523 = vunpack.c.l.b16 %v107
  %v524 = vunpack.c.h.b16 %v107
  %v525 = vunpack.c.l.b16 %v108
  %v526 = vunpack.c.h.b16 %v108
  %v527 = vunpack.c.l.b16 %v109
  %v528 = vunpack.c.h.b16 %v109
  %v529 = vunpack.c.l.b16 %v110
  %v530 = vunpack.c.h.b16 %v110
  %v531 = vunpack.c.l.b16 %v111
  %v532 = vunpack.c.h.b16 %v111
  %v533 = vunpack.c.l.b16 %v112
  %v534 = vunpack.c.h.b16 %v112
  %v535 = vunpack.c.l.b16 %v113
  %v536 = vunpack.c.h.b16 %v113
  %v537 = vunpack.c.l.b16 %v114
  %v538 = vunpack.c.h.b16 %v114
  %v539 = vunpack.c.l.b16 %v115
  %v540 = vunpack.c.h.b16 %v115
  %v541 = vunpack.c.l.b16 %v116
  %v542 = vunpack.c.h.b16 %v116
  %v543 = vunpack.c.l.b16 %v117
  %v544 = vunpack.c.h.b16 %v117
  %v545 = vunpack.c.l.b16 %v118
  %v546 = vunpack.c.h.b16 %v118
  %v547 = vunpack.c.l.b16 %v119
  %v548 = vunpack.c.h.b16 %v119
  %v549 = vunpack.c.l.b16 %v120
  %v550 = vunpack.c.h.b16 %v120
  %v551 = vunpack.c.l.b16 %v121
  %v552 = vunpack.c.h.b16 %v121
  %v553 = vunpack.c.l.b16 %v122
  %v554 = vunpack.c.h.b16 %v122
  %v555 = vunpack.c.l.b16 %v123
  %v556 = vunpack.c.h.b16 %v123
  %v557 = vunpack.c.l.b16 %v124
  %v558 = vunpack.c.h.b16 %v124
  %v559 = vunpack.c.l.b16 %v125
  %v560 = vunpack.c.h.b16 %v125
  %v561 = vunpack.c.l.b16 %v126
  %v562 = vunpack.c.h.b16 %v126
  %v563 = vunpack.c.l.b16 %v127
  %v564 = vunpack.c.h.b16 %v127
  %v565 = vunpack.c.l.b16 %v128
  %v566 = vunpack.c.h.b16 %v128
  %v567 = vunpack.c.l.b16 %v129
  %v568 = vunpack.c.h.b16 %v129
  %v569 = vunpack.c.l.b16 %v130
  %v570 = vunpack.c.h.b16 %v130
  %v571 = vunpack.c.l.b16 %v131
  %v572 = vunpack.c.h.b16 %v131
  %v573 = vunpack.c.l.b16 %v132
  %v574 = vunpack.c.h.b16 %v132
  %v575 = vunpack.c.l.b16 %v133
  %v576 = vunpack.c.h.b16 %v133
  %v577 = vunpack.c.l.b16 %v134
  %v578 = vunpack.c.h.b16 %v134
  %v579 = vunpack.c.l.b16 %v135
  %v580 = vunpack.c.h.b16 %v135
  %v581 = vunpack.c.l.b16 %v136
  %v582 = vunpack.c.h.b16 %v136
  %v583 = vunpack.c.l.b16 %v137
  %v584 = vunpack.c.h.b16 %v137
  %v585 = vunpack.c.l.b16 %v138
  %v586 = vunpack.c.h.b16 %v138
  %v587 = vunpack.c.l.b16 %v139
  %v588 = vunpack.c.h.b16 %v139
  %v589 = vunpack.c.l.b16 %v140
  %v590 = vunpack.c.h.b16 %v140
  %v591 = vunpack.c.l.b16 %v141
  %v592 = vunpack.c.h.b16 %v141
  %v593 = vunpack.c.l.b16 %v142
  %v594 = vunpack.c.h.b16 %v142
  %v595 = vunpack.c.l.b16 %v143
  %v596 = vunpack.c.h.b16 %v143
  %v597 = vunpack.c.l.b16 %v144
  %v598 = vunpack.c.h.b16 %v144
  %v599 = vunpack.c.l.b16 %v145
  %v600 = vunpack.c.h.b16 %v145
  %v601 = vunpack.c.l.b16 %v146
  %v602 = vunpack.c.h.b16 %v146
  %v603 = vunpack.c.l.b16 %v147
  %v604 = vunpack.c.h.b16 %v147
  %v605 = vunpack.c.l.b16 %v148
  %v606 = vunpack.c.h.b16 %v148
  %v607 = vunpack.c.l.b16 %v149
  %v608 = vunpack.c.h.b16 %v149
  %v609 = vunpack.c.l.b16 %v150
  %v610 = vunpack.c.h.b16 %v150
  %v611 = vunpack.c.l.b16 %v151
  %v612 = vunpack.c.h.b16 %v151
  %v613 = vunpack.c.l.b16 %v152
  %v614 = vunpack.c.h.b16 %v152
  %v615 = vunpack.c.l.b16 %v153
  %v616 = vunpack.c.h.b16 %v153
  %v617 = vunpack.c.l.b16 %v154
  %v618 = vunpack.c.h.b16 %v154
  %v619 = vunpack.c.l.b16 %v155
  %v620 = vunpack.c.h.b16 %v155
  %v621 = vunpack.c.l.b16 %v156
  %v622 = vunpack.c.h.b16 %v156
  %v623 = vunpack.c.l.b16 %v157
  %v624 = vunpack.c.h.b16 %v157
  %v625 = vunpack.c.l.b16 %v158
  %v626 = vunpack.c.h.b16 %v158
  %v627 = vunpack.c.l.b16 %v159
  %v628 = vunpack.c.h.b16 %v159
  %v629 = vunpack.c.l.b16 %v160
  %v630 = vunpack.c.h.b16 %v160
  %v631 = vunpack.c.l.b16 %v161
  %v632 = vunpack.c.h.b16 %v161
  %v633 = vpack.c.b16 %v347, %v345
  %v634 = vpack.c.b16 %v348, %v346
  %v635 = vpack.c.b16 %v351, %v349
  %v636 = vpack.c.b16 %v352, %v350
  %v637 = vpack.c.b16 %v355, %v353
  %v638 = vpack.c.b16 %v356, %v354
  %v639 = vpack.c.b16 %v359, %v357
  %v640 = vpack.c.b16 %v360, %v358
  %v641 = vpack.c.b16 %v363, %v361
  %v642 = vpack.c.b16 %v364, %v362
  %v643 = vpack.c.b16 %v367, %v365
  %v644 = vpack.c.b16 %v368, %v366
  %v645 = vpack.c.b16 %v371, %v369
  %v646 = vpack.c.b16 %v372, %v370
  %v647 = vpack.c.b16 %v375, %v373
  %v648 = vpack.c.b16 %v376, %v374
  %v649 = vpack.c.b16 %v379, %v377
  %v650 = vpack.c.b16 %v380, %v378
  %v651 = vpack.c.b16 %v383, %v381
  %v652 = vpack.c.b16 %v384, %v382
  %v653 = vpack.c.b16 %v387, %v385
  %v654 = vpack.c.b16 %v388, %v386
  %v655 = vpack.c.b16 %v391, %v389
  %v656 = vpack.c.b16 %v392, %v390
  %v657 = vpack.c.b16 %v395, %v393
  %v658 = vpack.c.b16 %v396, %v394
  %v659 = vpack.c.b16 %v399, %v397
  %v660 = vpack.c.b16 %v400, %v398
  %v661 = vpack.c.b16 %v403, %v401
  %v662 = vpack.c.b16 %v404, %v402
  %v663 = vpack.c.b16 %v407, %v405
  %v664 = vpack.c.b16 %v408, %v406
  %v665 = vpack.c.b16 %v411, %v409
  %v666 = vpack.c.b16 %v412, %v410
  %v667 = vpack.c.b16 %v415, %v413
  %v668 = vpack.c.b16 %v416, %v414
  %v669 = vpack.c.b16 %v419, %v417
  %v670 = vpack.c.b16 %v420, %v418
  %v671 = vpack.c.b16 %v423, %v421
  %v672 = vpack.c.b16 %v424, %v422
  %v673 = vpack.c.b16 %v427, %v425
  %v674 = vpack.c.b16 %v428, %v426
  %v675 = vpack.c.b16 %v431, %v429
  %v676 = vpack.c.b16 %v432, %v430
  %v677 = vpack.c.b16 %v435, %v433
  %v678 = vpack.c.b16 %v436, %v434
  %v679 = vpack.c.b16 %v439, %v437
  %v680 = vpack.c.b16 %v440, %v438
  %v681 = vpack.c.b16 %v443, %v441
  %v682 = vpack.c.b16 %v444, %v442
  %v683 = vpack.c.b16 %v447, %v445
  %v684 = vpack.c.b16 %v448, %v446
  %v685 = vpack.c.b16 %v451, %v449
  %v686 = vpack.c.b16 %v452, %v450
  %v687 = vpack.c.b16 %v455, %v453
  %v688 = vpack.c.b16 %v456, %v454
  %v689 = vpack.c.b16 %v459, %v457
  %v690 = vpack.c.b16 %v460, %v458
  %v691 = vpack.c.b16 %v463, %v461
  %v692 = vpack.c.b16 %v464, %v462
  %v693 = vpack.c.b16 %v467, %v465
  %v694 = vpack.c.b16 %v468, %v466
  %v695 = vpack.c.b16 %v471, %v469
  %v696 = vpack.c.b16 %v472, %v470
  %v697 = vpack.c.b16 %v475, %v473
  %v698 = vpack.c.b16 %v476, %v474
  %v699 = vpack.c.b16 %v479, %v477
  %v700 = vpack.c.b16 %v480, %v478
  %v701 = vpack.c.b16 %v483, %v481
  %v702 = vpack.c.b16 %v484, %v482
  %v703 = vpack.c.b16 %v487, %v485
  %v704 = vpack.c.b16 %v488, %v486
  %v705 = vpack.c.b16 %v491, %v489
  %v706 = vpack.c.b16 %v492, %v490
  %v707 = vpack.c.b16 %v495, %v493
  %v708 = vpack.c.b16 %v496, %v494
  %v709 = vpack.c.b16 %v499, %v497
  %v710 = vpack.c.b16 %v500, %v498
  %v711 = vpack.c.b16 %v503, %v501
  %v712 = vpack.c.b16 %v504, %v502
  %v713 = vpack.c.b16 %v507, %v505
  %v714 = vpack.c.b16 %v508, %v506
  %v715 = vpack.c.b16 %v511, %v509
  %v716 = vpack.c.b16 %v512, %v510
  %v717 = vpack.c.b16 %v515, %v513
  %v718 = vpack.c.b16 %v516, %v514
  %v719 = vpack.c.b16 %v519, %v517
  %v720 = vpack.c.b16 %v520, %v518
  %v721 = vpack.c.b16 %v523, %v521
  %v722 = vpack.c.b16 %v524, %v522
  %v723 = vpack.c.b16 %v527, %v525
  %v724 = vpack.c.b16 %v528, %v526
  %v725 = vpack.c.b16 %v531, %v529
  %v726 = vpack.c.b16 %v532, %v530
  %v727 = vpack.c.b16 %v535, %v533
  %v728 = vpack.c.b16 %v536, %v534
  %v729 = vpack.c.b16 %v539, %v537
  %v730 = vpack.c.b16 %v540, %v538
  %v731 = vpack.c.b16 %v543, %v541
  %v732 = vpack.c.b16 %v544, %v542
  %v733 = vpack.c.b16 %v547, %v545
  %v734 = vpack.c.b16 %v548, %v546
  %v735 = vpack.c.b16 %v551, %v549
  %v736 = vpack.c.b16 %v552, %v550
  %v737 = vpack.c.b16 %v555, %v553
  %v738 = vpack.c.b16 %v556, %v554
  %v739 = vpack.c.b16 %v559, %v557
  %v740 = vpack.c.b16 %v560, %v558
  %v741 = vpack.c.b16 %v563, %v561
  %v742 = vpack.c.b16 %v564, %v562
  %v743 = vpack.c.b16 %v567, %v565
  %v744 = vpack.c.b16 %v568, %v566
  %v745 = vpack.c.b16 %v571, %v569
  %v746 = vpack.c.b16 %v572, %v570
  %v747 = vpack.c.b16 %v575, %v573
  %v748 = vpack.c.b16 %v576, %v574
  %v749 = vpack.c.b16 %v579, %v577
  %v750 = vpack.c.b16 %v580, %v578
  %v751 = vpack.c.b16 %v583, %v581
  %v752 = vpack.c.b16 %v584, %v582
  %v753 = vpack.c.b16 %v587, %v585
  %v754 = vpack.c.b16 %v588, %v586
  %v755 = vpack.c.b16 %v591, %v589
  %v756 = vpack.c.b16 %v592, %v590
  %v757 = vpack.c.b16 %v595, %v593
  %v758 = vpack.c.b16 %v596, %v594
  %v759 = vpack.c.b16 %v599, %v597
  %v760 = vpack.c.b16 %v600, %v598
  %v761 = vpack.c.b16 %v603, %v601
  %v762 = vpack.c.b16 %v604, %v602
  %v763 = vpack.c.b16 %v607, %v605
  %v764 = vpack.c.b16 %v608, %v606
  %v765 = vpack.c.b16 %v611, %v609
  %v766 = vpack.c.b16 %v612, %v610
  %v767 = vpack.c.b16 %v615, %v613
  %v768 = vpack.c.b16 %v616, %v614
  %v769 = vpack.c.b16 %v619, %v617
  %v770 = vpack.c.b16 %v620, %v618
  %v771 = vpack.c.b16 %v623, %v621
  %v772 = vpack.c.b16 %v624, %v622
  %v773 = vpack.c.b16 %v627, %v625
  %v774 = vpack.c.b16 %v628, %v626
  %v775 = vpack.c.b16 %v631, %v629
  %v776 = vpack.c.b16 %v632, %v630
  %921 = vmatprep.subr.bf16.mxu0 %v648
  %922 = vmatpush1.bf16.msra.mxu0 %v647
  %923 = vmatprep.subr.bf16.mxu0 %v646
  %924 = vmatpush1.bf16.msra.mxu0 %v645
  %925 = vmatprep.subr.bf16.mxu0 %v644
  %926 = vmatpush1.bf16.msra.mxu0 %v643
  %927 = vmatprep.subr.bf16.mxu0 %v642
  %928 = vmatpush1.bf16.msra.mxu0 %v641
  %929 = vmatprep.subr.bf16.mxu0 %v640
  %930 = vmatpush1.bf16.msra.mxu0 %v639
  %931 = vmatprep.subr.bf16.mxu0 %v638
  %932 = vmatpush1.bf16.msra.mxu0 %v637
  %933 = vmatprep.subr.bf16.mxu0 %v636
  %934 = vmatpush1.bf16.msra.mxu0 %v635
  %935 = vmatprep.subr.bf16.mxu0 %v634
  %936 = vmatpush1.bf16.msra.mxu0 %v633
  %937 = vmatprep.subr.bf16.mxu0 %v664
  %938 = vmatpush2.bf16.msra.mxu0 %v663
  %939 = vmatprep.subr.bf16.mxu0 %v662
  %940 = vmatpush2.bf16.msra.mxu0 %v661
  %941 = vmatprep.subr.bf16.mxu0 %v660
  %942 = vmatpush2.bf16.msra.mxu0 %v659
  %943 = vmatprep.subr.bf16.mxu0 %v658
  %944 = vmatpush2.bf16.msra.mxu0 %v657
  %945 = vmatprep.subr.bf16.mxu0 %v656
  %946 = vmatpush2.bf16.msra.mxu0 %v655
  %947 = vmatprep.subr.bf16.mxu0 %v654
  %948 = vmatpush2.bf16.msra.mxu0 %v653
  %949 = vmatprep.subr.bf16.mxu0 %v652
  %950 = vmatpush2.bf16.msra.mxu0 %v651
  %951 = vmatprep.subr.bf16.mxu0 %v650
  %952 = vmatpush2.bf16.msra.mxu0 %v649
  %953 = vmatprep.mubr.bf16.mxu0 %v184
  %954 = vmatmul.mubr.bf16.gmra.mxu0 %v183
  %v955 = vpop.f32.mrf.mxu0
  %v956 = vadd.f32 0.0, %v955
  %v957 = vpop.f32.mrf.mxu0
  %v958 = vadd.f32 0.0, %v957
  %v959 = vpop.f32.mrf.mxu0
  %v960 = vpop.f32.mrf.mxu0
  %961 = vdwg.mxu0
  %962 = vmatprep.subr.bf16.mxu0 %v680
  %963 = vmatpush1.bf16.msra.mxu0 %v679
  %964 = vmatprep.subr.bf16.mxu0 %v678
  %965 = vmatpush1.bf16.msra.mxu0 %v677
  %966 = vmatprep.subr.bf16.mxu0 %v676
  %967 = vmatpush1.bf16.msra.mxu0 %v675
  %968 = vmatprep.subr.bf16.mxu0 %v674
  %969 = vmatpush1.bf16.msra.mxu0 %v673
  %970 = vmatprep.subr.bf16.mxu0 %v672
  %971 = vmatpush1.bf16.msra.mxu0 %v671
  %972 = vmatprep.subr.bf16.mxu0 %v670
  %973 = vmatpush1.bf16.msra.mxu0 %v669
  %974 = vmatprep.subr.bf16.mxu0 %v668
  %975 = vmatpush1.bf16.msra.mxu0 %v667
  %976 = vmatprep.subr.bf16.mxu0 %v666
  %977 = vmatpush1.bf16.msra.mxu0 %v665
  %978 = vmatprep.subr.bf16.mxu0 %v696
  %979 = vmatpush2.bf16.msra.mxu0 %v695
  %980 = vmatprep.subr.bf16.mxu0 %v694
  %981 = vmatpush2.bf16.msra.mxu0 %v693
  %982 = vmatprep.subr.bf16.mxu0 %v692
  %983 = vmatpush2.bf16.msra.mxu0 %v691
  %984 = vmatprep.subr.bf16.mxu0 %v690
  %985 = vmatpush2.bf16.msra.mxu0 %v689
  %986 = vmatprep.subr.bf16.mxu0 %v688
  %987 = vmatpush2.bf16.msra.mxu0 %v687
  %988 = vmatprep.subr.bf16.mxu0 %v686
  %989 = vmatpush2.bf16.msra.mxu0 %v685
  %990 = vmatprep.subr.bf16.mxu0 %v684
  %991 = vmatpush2.bf16.msra.mxu0 %v683
  %992 = vmatprep.subr.bf16.mxu0 %v682
  %993 = vmatpush2.bf16.msra.mxu0 %v681
  %994 = vmatprep.mubr.bf16.mxu0 %v186
  %995 = vmatmul.mubr.bf16.gmra.mxu0 %v185
  %v996 = vpop.f32.mrf.mxu0
  %v997 = vadd.f32 %v956, %v996
  %v998 = vpop.f32.mrf.mxu0
  %v999 = vadd.f32 %v958, %v998
  %v1000 = vpop.f32.mrf.mxu0
  %v1001 = vpop.f32.mrf.mxu0
  %1002 = vdwg.mxu0
  %1003 = vmatprep.subr.bf16.mxu0 %v712
  %1004 = vmatpush1.bf16.msra.mxu0 %v711
  %1005 = vmatprep.subr.bf16.mxu0 %v710
  %1006 = vmatpush1.bf16.msra.mxu0 %v709
  %1007 = vmatprep.subr.bf16.mxu0 %v708
  %1008 = vmatpush1.bf16.msra.mxu0 %v707
  %1009 = vmatprep.subr.bf16.mxu0 %v706
  %1010 = vmatpush1.bf16.msra.mxu0 %v705
  %1011 = vmatprep.subr.bf16.mxu0 %v704
  %1012 = vmatpush1.bf16.msra.mxu0 %v703
  %1013 = vmatprep.subr.bf16.mxu0 %v702
  %1014 = vmatpush1.bf16.msra.mxu0 %v701
  %1015 = vmatprep.subr.bf16.mxu0 %v700
  %1016 = vmatpush1.bf16.msra.mxu0 %v699
  %1017 = vmatprep.subr.bf16.mxu0 %v698
  %1018 = vmatpush1.bf16.msra.mxu0 %v697
  %1019 = vmatprep.subr.bf16.mxu0 %v728
  %1020 = vmatpush2.bf16.msra.mxu0 %v727
  %1021 = vmatprep.subr.bf16.mxu0 %v726
  %1022 = vmatpush2.bf16.msra.mxu0 %v725
  %1023 = vmatprep.subr.bf16.mxu0 %v724
  %1024 = vmatpush2.bf16.msra.mxu0 %v723
  %1025 = vmatprep.subr.bf16.mxu0 %v722
  %1026 = vmatpush2.bf16.msra.mxu0 %v721
  %1027 = vmatprep.subr.bf16.mxu0 %v720
  %1028 = vmatpush2.bf16.msra.mxu0 %v719
  %1029 = vmatprep.subr.bf16.mxu0 %v718
  %1030 = vmatpush2.bf16.msra.mxu0 %v717
  %1031 = vmatprep.subr.bf16.mxu0 %v716
  %1032 = vmatpush2.bf16.msra.mxu0 %v715
  %1033 = vmatprep.subr.bf16.mxu0 %v714
  %1034 = vmatpush2.bf16.msra.mxu0 %v713
  %1035 = vmatprep.mubr.bf16.mxu0 %v188
  %1036 = vmatmul.mubr.bf16.gmra.mxu0 %v187
  %v1037 = vpop.f32.mrf.mxu0
  %v1038 = vadd.f32 %v997, %v1037
  %v1039 = vpop.f32.mrf.mxu0
  %v1040 = vadd.f32 %v999, %v1039
  %v1041 = vpop.f32.mrf.mxu0
  %v1042 = vpop.f32.mrf.mxu0
  %1043 = vdwg.mxu0
  %1044 = vmatprep.subr.bf16.mxu0 %v744
  %1045 = vmatpush1.bf16.msra.mxu0 %v743
  %1046 = vmatprep.subr.bf16.mxu0 %v742
  %1047 = vmatpush1.bf16.msra.mxu0 %v741
  %1048 = vmatprep.subr.bf16.mxu0 %v740
  %1049 = vmatpush1.bf16.msra.mxu0 %v739
  %1050 = vmatprep.subr.bf16.mxu0 %v738
  %1051 = vmatpush1.bf16.msra.mxu0 %v737
  %1052 = vmatprep.subr.bf16.mxu0 %v736
  %1053 = vmatpush1.bf16.msra.mxu0 %v735
  %1054 = vmatprep.subr.bf16.mxu0 %v734
  %1055 = vmatpush1.bf16.msra.mxu0 %v733
  %1056 = vmatprep.subr.bf16.mxu0 %v732
  %1057 = vmatpush1.bf16.msra.mxu0 %v731
  %1058 = vmatprep.subr.bf16.mxu0 %v730
  %1059 = vmatpush1.bf16.msra.mxu0 %v729
  %1060 = vmatprep.subr.bf16.mxu0 %v760
  %1061 = vmatpush2.bf16.msra.mxu0 %v759
  %1062 = vmatprep.subr.bf16.mxu0 %v758
  %1063 = vmatpush2.bf16.msra.mxu0 %v757
  %1064 = vmatprep.subr.bf16.mxu0 %v756
  %1065 = vmatpush2.bf16.msra.mxu0 %v755
  %1066 = vmatprep.subr.bf16.mxu0 %v754
  %1067 = vmatpush2.bf16.msra.mxu0 %v753
  %1068 = vmatprep.subr.bf16.mxu0 %v752
  %1069 = vmatpush2.bf16.msra.mxu0 %v751
  %1070 = vmatprep.subr.bf16.mxu0 %v750
  %1071 = vmatpush2.bf16.msra.mxu0 %v749
  %1072 = vmatprep.subr.bf16.mxu0 %v748
  %1073 = vmatpush2.bf16.msra.mxu0 %v747
  %1074 = vmatprep.subr.bf16.mxu0 %v746
  %1075 = vmatpush2.bf16.msra.mxu0 %v745
  %1076 = vmatprep.mubr.bf16.mxu0 %v190
  %1077 = vmatmul.mubr.bf16.gmra.mxu0 %v189
  %v1078 = vpop.f32.mrf.mxu0
  %v1079 = vadd.f32 %v1038, %v1078
  %v1080 = vpop.f32.mrf.mxu0
  %v1081 = vadd.f32 %v1040, %v1080
  %v1082 = vpop.f32.mrf.mxu0
  %v1083 = vpop.f32.mrf.mxu0
  %1084 = vdwg.mxu0
  %1085 = vmatprep.subr.bf16.mxu0 %v776
  %1086 = vmatpush1.bf16.msra.mxu0 %v775
  %1087 = vmatprep.subr.bf16.mxu0 %v774
  %1088 = vmatpush1.bf16.msra.mxu0 %v773
  %1089 = vmatprep.subr.bf16.mxu0 %v772
  %1090 = vmatpush1.bf16.msra.mxu0 %v771
  %1091 = vmatprep.subr.bf16.mxu0 %v770
  %1092 = vmatpush1.bf16.msra.mxu0 %v769
  %1093 = vmatprep.subr.bf16.mxu0 %v768
  %1094 = vmatpush1.bf16.msra.mxu0 %v767
  %1095 = vmatprep.subr.bf16.mxu0 %v766
  %1096 = vmatpush1.bf16.msra.mxu0 %v765
  %1097 = vmatprep.subr.bf16.mxu0 %v764
  %1098 = vmatpush1.bf16.msra.mxu0 %v763
  %1099 = vmatprep.subr.bf16.mxu0 %v762
  %1100 = vmatpush1.bf16.msra.mxu0 %v761
  %1101 = vmatprep.subr.bf16.mxu0 0
  %1102 = vmatpush2.bf16.msra.mxu0 0
  %1103 = vmatprep.subr.bf16.mxu0 0
  %1104 = vmatpush2.bf16.msra.mxu0 0
  %1105 = vmatprep.subr.bf16.mxu0 0
  %1106 = vmatpush2.bf16.msra.mxu0 0
  %1107 = vmatprep.subr.bf16.mxu0 0
  %1108 = vmatpush2.bf16.msra.mxu0 0
  %1109 = vmatprep.subr.bf16.mxu0 0
  %1110 = vmatpush2.bf16.msra.mxu0 0
  %1111 = vmatprep.subr.bf16.mxu0 0
  %1112 = vmatpush2.bf16.msra.mxu0 0
  %1113 = vmatprep.subr.bf16.mxu0 0
  %1114 = vmatpush2.bf16.msra.mxu0 0
  %1115 = vmatprep.subr.bf16.mxu0 0
  %1116 = vmatpush2.bf16.msra.mxu0 0
  %1117 = vmatprep.mubr.bf16.mxu0 0
  %1118 = vmatmul.mubr.bf16.gmra.mxu0 %v191
  %v1119 = vpop.f32.mrf.mxu0
  %v1120 = vadd.f32 %v1079, %v1119
  %v1121 = vpop.f32.mrf.mxu0
  %v1122 = vadd.f32 %v1081, %v1121
  %v1123 = vpop.f32.mrf.mxu0
  %v1124 = vpop.f32.mrf.mxu0
  %1125 = vdwg.mxu0
  %v1127 = vlaneseq
  %v1128 = vshrl.u32 %v1127, 7
  %v1129 = vsub.s32 0, %v1128
  %v1130 = vrot.slane %v162, %v1129
  %v1131 = vlaneseq
  %v1132 = vshrl.u32 %v1131, 7
  %v1133 = vsub.s32 1, %v1132
  %v1134 = vrot.slane %v162, %v1133
  %v1137 = vmul.f32 %v1120, %v1130
  %v1138 = vmul.f32 %v1122, %v1134
  %v1140 = vlaneseq
  %v1141 = vshrl.u32 %v1140, 7
  %v1142 = vsub.s32 0, %v1141
  %v1143 = vrot.slane %v163, %v1142
  %v1144 = vlaneseq
  %v1145 = vshrl.u32 %v1144, 7
  %v1146 = vsub.s32 1, %v1145
  %v1147 = vrot.slane %v163, %v1146
  %v1150 = vadd.f32 %v1137, %v1143
  %v1151 = vadd.f32 %v1138, %v1147
  %v1152 = vmax.f32 %v1150, 0.0
  %v1153 = vmax.f32 %v1151, 0.0
  %s1154 = scalar_lea.vmem %s0, 36
  %v1155 = vld [vmem:[%s1154] sm:$0xff]
  %v1156 = vld [vmem:[%s1154 + $0x8] sm:$0xff]
  %v1157 = vld [vmem:[%s1154 + $0x10] sm:$0xff]
  %v1158 = vld [vmem:[%s1154 + $0x18] sm:$0xff]
  %v1159 = vld [vmem:[%s1154 + $0x20] sm:$0xf]
  %v1165 = vunpack.c.l.b16 %v1155
  %v1166 = vunpack.c.h.b16 %v1155
  %v1167 = vunpack.c.l.b16 %v1156
  %v1168 = vunpack.c.h.b16 %v1156
  %v1169 = vunpack.c.l.b16 %v1157
  %v1170 = vunpack.c.h.b16 %v1157
  %v1171 = vunpack.c.l.b16 %v1158
  %v1172 = vunpack.c.h.b16 %v1158
  %v1173 = vunpack.c.l.b16 %v1159
  %v1174 = vpack.c.b16 %v1165, %v1165
  %v1175 = vpack.c.b16 %v1166, %v1166
  %v1176 = vpack.c.b16 %v1167, %v1167
  %v1177 = vpack.c.b16 %v1168, %v1168
  %v1178 = vpack.c.b16 %v1169, %v1169
  %v1179 = vpack.c.b16 %v1170, %v1170
  %v1180 = vpack.c.b16 %v1171, %v1171
  %v1181 = vpack.c.b16 %v1172, %v1172
  %v1182 = vpack.c.b16 %v1173, %v1173
  %1192 = vmatprep.subr.bf16.mxu0 %v648
  %1193 = vmatpush1.bf16.msra.mxu0 %v647
  %1194 = vmatprep.subr.bf16.mxu0 %v646
  %1195 = vmatpush1.bf16.msra.mxu0 %v645
  %1196 = vmatprep.subr.bf16.mxu0 %v644
  %1197 = vmatpush1.bf16.msra.mxu0 %v643
  %1198 = vmatprep.subr.bf16.mxu0 %v642
  %1199 = vmatpush1.bf16.msra.mxu0 %v641
  %1200 = vmatprep.subr.bf16.mxu0 %v640
  %1201 = vmatpush1.bf16.msra.mxu0 %v639
  %1202 = vmatprep.subr.bf16.mxu0 %v638
  %1203 = vmatpush1.bf16.msra.mxu0 %v637
  %1204 = vmatprep.subr.bf16.mxu0 %v636
  %1205 = vmatpush1.bf16.msra.mxu0 %v635
  %1206 = vmatprep.subr.bf16.mxu0 %v634
  %1207 = vmatpush1.bf16.msra.mxu0 %v633
  %1208 = vmatprep.subr.bf16.mxu0 %v664
  %1209 = vmatpush2.bf16.msra.mxu0 %v663
  %1210 = vmatprep.subr.bf16.mxu0 %v662
  %1211 = vmatpush2.bf16.msra.mxu0 %v661
  %1212 = vmatprep.subr.bf16.mxu0 %v660
  %1213 = vmatpush2.bf16.msra.mxu0 %v659
  %1214 = vmatprep.subr.bf16.mxu0 %v658
  %1215 = vmatpush2.bf16.msra.mxu0 %v657
  %1216 = vmatprep.subr.bf16.mxu0 %v656
  %1217 = vmatpush2.bf16.msra.mxu0 %v655
  %1218 = vmatprep.subr.bf16.mxu0 %v654
  %1219 = vmatpush2.bf16.msra.mxu0 %v653
  %1220 = vmatprep.subr.bf16.mxu0 %v652
  %1221 = vmatpush2.bf16.msra.mxu0 %v651
  %1222 = vmatprep.subr.bf16.mxu0 %v650
  %1223 = vmatpush2.bf16.msra.mxu0 %v649
  %1224 = vmatprep.mubr.bf16.mxu0 %v1175
  %1225 = vmatmul.mubr.bf16.gmra.mxu0 %v1174
  %v1226 = vpop.f32.mrf.mxu0
  %v1227 = vadd.f32 0.0, %v1226
  %v1228 = vpop.f32.mrf.mxu0
  %v1229 = vadd.f32 0.0, %v1228
  %v1230 = vpop.f32.mrf.mxu0
  %v1231 = vpop.f32.mrf.mxu0
  %1232 = vdwg.mxu0
  %1233 = vmatprep.subr.bf16.mxu0 %v680
  %1234 = vmatpush1.bf16.msra.mxu0 %v679
  %1235 = vmatprep.subr.bf16.mxu0 %v678
  %1236 = vmatpush1.bf16.msra.mxu0 %v677
  %1237 = vmatprep.subr.bf16.mxu0 %v676
  %1238 = vmatpush1.bf16.msra.mxu0 %v675
  %1239 = vmatprep.subr.bf16.mxu0 %v674
  %1240 = vmatpush1.bf16.msra.mxu0 %v673
  %1241 = vmatprep.subr.bf16.mxu0 %v672
  %1242 = vmatpush1.bf16.msra.mxu0 %v671
  %1243 = vmatprep.subr.bf16.mxu0 %v670
  %1244 = vmatpush1.bf16.msra.mxu0 %v669
  %1245 = vmatprep.subr.bf16.mxu0 %v668
  %1246 = vmatpush1.bf16.msra.mxu0 %v667
  %1247 = vmatprep.subr.bf16.mxu0 %v666
  %1248 = vmatpush1.bf16.msra.mxu0 %v665
  %1249 = vmatprep.subr.bf16.mxu0 %v696
  %1250 = vmatpush2.bf16.msra.mxu0 %v695
  %1251 = vmatprep.subr.bf16.mxu0 %v694
  %1252 = vmatpush2.bf16.msra.mxu0 %v693
  %1253 = vmatprep.subr.bf16.mxu0 %v692
  %1254 = vmatpush2.bf16.msra.mxu0 %v691
  %1255 = vmatprep.subr.bf16.mxu0 %v690
  %1256 = vmatpush2.bf16.msra.mxu0 %v689
  %1257 = vmatprep.subr.bf16.mxu0 %v688
  %1258 = vmatpush2.bf16.msra.mxu0 %v687
  %1259 = vmatprep.subr.bf16.mxu0 %v686
  %1260 = vmatpush2.bf16.msra.mxu0 %v685
  %1261 = vmatprep.subr.bf16.mxu0 %v684
  %1262 = vmatpush2.bf16.msra.mxu0 %v683
  %1263 = vmatprep.subr.bf16.mxu0 %v682
  %1264 = vmatpush2.bf16.msra.mxu0 %v681
  %1265 = vmatprep.mubr.bf16.mxu0 %v1177
  %1266 = vmatmul.mubr.bf16.gmra.mxu0 %v1176
  %v1267 = vpop.f32.mrf.mxu0
  %v1268 = vadd.f32 %v1227, %v1267
  %v1269 = vpop.f32.mrf.mxu0
  %v1270 = vadd.f32 %v1229, %v1269
  %v1271 = vpop.f32.mrf.mxu0
  %v1272 = vpop.f32.mrf.mxu0
  %1273 = vdwg.mxu0
  %1274 = vmatprep.subr.bf16.mxu0 %v712
  %1275 = vmatpush1.bf16.msra.mxu0 %v711
  %1276 = vmatprep.subr.bf16.mxu0 %v710
  %1277 = vmatpush1.bf16.msra.mxu0 %v709
  %1278 = vmatprep.subr.bf16.mxu0 %v708
  %1279 = vmatpush1.bf16.msra.mxu0 %v707
  %1280 = vmatprep.subr.bf16.mxu0 %v706
  %1281 = vmatpush1.bf16.msra.mxu0 %v705
  %1282 = vmatprep.subr.bf16.mxu0 %v704
  %1283 = vmatpush1.bf16.msra.mxu0 %v703
  %1284 = vmatprep.subr.bf16.mxu0 %v702
  %1285 = vmatpush1.bf16.msra.mxu0 %v701
  %1286 = vmatprep.subr.bf16.mxu0 %v700
  %1287 = vmatpush1.bf16.msra.mxu0 %v699
  %1288 = vmatprep.subr.bf16.mxu0 %v698
  %1289 = vmatpush1.bf16.msra.mxu0 %v697
  %1290 = vmatprep.subr.bf16.mxu0 %v728
  %1291 = vmatpush2.bf16.msra.mxu0 %v727
  %1292 = vmatprep.subr.bf16.mxu0 %v726
  %1293 = vmatpush2.bf16.msra.mxu0 %v725
  %1294 = vmatprep.subr.bf16.mxu0 %v724
  %1295 = vmatpush2.bf16.msra.mxu0 %v723
  %1296 = vmatprep.subr.bf16.mxu0 %v722
  %1297 = vmatpush2.bf16.msra.mxu0 %v721
  %1298 = vmatprep.subr.bf16.mxu0 %v720
  %1299 = vmatpush2.bf16.msra.mxu0 %v719
  %1300 = vmatprep.subr.bf16.mxu0 %v718
  %1301 = vmatpush2.bf16.msra.mxu0 %v717
  %1302 = vmatprep.subr.bf16.mxu0 %v716
  %1303 = vmatpush2.bf16.msra.mxu0 %v715
  %1304 = vmatprep.subr.bf16.mxu0 %v714
  %1305 = vmatpush2.bf16.msra.mxu0 %v713
  %1306 = vmatprep.mubr.bf16.mxu0 %v1179
  %1307 = vmatmul.mubr.bf16.gmra.mxu0 %v1178
  %v1308 = vpop.f32.mrf.mxu0
  %v1309 = vadd.f32 %v1268, %v1308
  %v1310 = vpop.f32.mrf.mxu0
  %v1311 = vadd.f32 %v1270, %v1310
  %v1312 = vpop.f32.mrf.mxu0
  %v1313 = vpop.f32.mrf.mxu0
  %1314 = vdwg.mxu0
  %1315 = vmatprep.subr.bf16.mxu0 %v744
  %1316 = vmatpush1.bf16.msra.mxu0 %v743
  %1317 = vmatprep.subr.bf16.mxu0 %v742
  %1318 = vmatpush1.bf16.msra.mxu0 %v741
  %1319 = vmatprep.subr.bf16.mxu0 %v740
  %1320 = vmatpush1.bf16.msra.mxu0 %v739
  %1321 = vmatprep.subr.bf16.mxu0 %v738
  %1322 = vmatpush1.bf16.msra.mxu0 %v737
  %1323 = vmatprep.subr.bf16.mxu0 %v736
  %1324 = vmatpush1.bf16.msra.mxu0 %v735
  %1325 = vmatprep.subr.bf16.mxu0 %v734
  %1326 = vmatpush1.bf16.msra.mxu0 %v733
  %1327 = vmatprep.subr.bf16.mxu0 %v732
  %1328 = vmatpush1.bf16.msra.mxu0 %v731
  %1329 = vmatprep.subr.bf16.mxu0 %v730
  %1330 = vmatpush1.bf16.msra.mxu0 %v729
  %1331 = vmatprep.subr.bf16.mxu0 %v760
  %1332 = vmatpush2.bf16.msra.mxu0 %v759
  %1333 = vmatprep.subr.bf16.mxu0 %v758
  %1334 = vmatpush2.bf16.msra.mxu0 %v757
  %1335 = vmatprep.subr.bf16.mxu0 %v756
  %1336 = vmatpush2.bf16.msra.mxu0 %v755
  %1337 = vmatprep.subr.bf16.mxu0 %v754
  %1338 = vmatpush2.bf16.msra.mxu0 %v753
  %1339 = vmatprep.subr.bf16.mxu0 %v752
  %1340 = vmatpush2.bf16.msra.mxu0 %v751
  %1341 = vmatprep.subr.bf16.mxu0 %v750
  %1342 = vmatpush2.bf16.msra.mxu0 %v749
  %1343 = vmatprep.subr.bf16.mxu0 %v748
  %1344 = vmatpush2.bf16.msra.mxu0 %v747
  %1345 = vmatprep.subr.bf16.mxu0 %v746
  %1346 = vmatpush2.bf16.msra.mxu0 %v745
  %1347 = vmatprep.mubr.bf16.mxu0 %v1181
  %1348 = vmatmul.mubr.bf16.gmra.mxu0 %v1180
  %v1349 = vpop.f32.mrf.mxu0
  %v1350 = vadd.f32 %v1309, %v1349
  %v1351 = vpop.f32.mrf.mxu0
  %v1352 = vadd.f32 %v1311, %v1351
  %v1353 = vpop.f32.mrf.mxu0
  %v1354 = vpop.f32.mrf.mxu0
  %1355 = vdwg.mxu0
  %1356 = vmatprep.subr.bf16.mxu0 %v776
  %1357 = vmatpush1.bf16.msra.mxu0 %v775
  %1358 = vmatprep.subr.bf16.mxu0 %v774
  %1359 = vmatpush1.bf16.msra.mxu0 %v773
  %1360 = vmatprep.subr.bf16.mxu0 %v772
  %1361 = vmatpush1.bf16.msra.mxu0 %v771
  %1362 = vmatprep.subr.bf16.mxu0 %v770
  %1363 = vmatpush1.bf16.msra.mxu0 %v769
  %1364 = vmatprep.subr.bf16.mxu0 %v768
  %1365 = vmatpush1.bf16.msra.mxu0 %v767
  %1366 = vmatprep.subr.bf16.mxu0 %v766
  %1367 = vmatpush1.bf16.msra.mxu0 %v765
  %1368 = vmatprep.subr.bf16.mxu0 %v764
  %1369 = vmatpush1.bf16.msra.mxu0 %v763
  %1370 = vmatprep.subr.bf16.mxu0 %v762
  %1371 = vmatpush1.bf16.msra.mxu0 %v761
  %1372 = vmatprep.subr.bf16.mxu0 0
  %1373 = vmatpush2.bf16.msra.mxu0 0
  %1374 = vmatprep.subr.bf16.mxu0 0
  %1375 = vmatpush2.bf16.msra.mxu0 0
  %1376 = vmatprep.subr.bf16.mxu0 0
  %1377 = vmatpush2.bf16.msra.mxu0 0
  %1378 = vmatprep.subr.bf16.mxu0 0
  %1379 = vmatpush2.bf16.msra.mxu0 0
  %1380 = vmatprep.subr.bf16.mxu0 0
  %1381 = vmatpush2.bf16.msra.mxu0 0
  %1382 = vmatprep.subr.bf16.mxu0 0
  %1383 = vmatpush2.bf16.msra.mxu0 0
  %1384 = vmatprep.subr.bf16.mxu0 0
  %1385 = vmatpush2.bf16.msra.mxu0 0
  %1386 = vmatprep.subr.bf16.mxu0 0
  %1387 = vmatpush2.bf16.msra.mxu0 0
  %1388 = vmatprep.mubr.bf16.mxu0 0
  %1389 = vmatmul.mubr.bf16.gmra.mxu0 %v1182
  %v1390 = vpop.f32.mrf.mxu0
  %v1391 = vadd.f32 %v1350, %v1390
  %v1392 = vpop.f32.mrf.mxu0
  %v1393 = vadd.f32 %v1352, %v1392
  %v1394 = vpop.f32.mrf.mxu0
  %v1395 = vpop.f32.mrf.mxu0
  %1396 = vdwg.mxu0
  %v1397 = vmul.f32 %v1391, %v1130
  %v1398 = vmul.f32 %v1393, %v1134
  %v1399 = vadd.f32 %v1397, %v1143
  %v1400 = vadd.f32 %v1398, %v1147
  %v1401 = vmax.f32 %v1399, 0.0
  %v1402 = vmax.f32 %v1400, 0.0
  %v1403 = vmax.f32 %v1152, %v1401
  %v1404 = vmax.f32 %v1153, %v1402
  %s1405 = scalar_lea.vmem %s0, 72
  %v1406 = vld [vmem:[%s1405] sm:$0xff]
  %v1407 = vld [vmem:[%s1405 + $0x8] sm:$0xff]
  %v1408 = vld [vmem:[%s1405 + $0x10] sm:$0xff]
  %v1409 = vld [vmem:[%s1405 + $0x18] sm:$0xff]
  %v1410 = vld [vmem:[%s1405 + $0x20] sm:$0xf]
  %v1416 = vunpack.c.l.b16 %v1406
  %v1417 = vunpack.c.h.b16 %v1406
  %v1418 = vunpack.c.l.b16 %v1407
  %v1419 = vunpack.c.h.b16 %v1407
  %v1420 = vunpack.c.l.b16 %v1408
  %v1421 = vunpack.c.h.b16 %v1408
  %v1422 = vunpack.c.l.b16 %v1409
  %v1423 = vunpack.c.h.b16 %v1409
  %v1424 = vunpack.c.l.b16 %v1410
  %v1425 = vpack.c.b16 %v1416, %v1416
  %v1426 = vpack.c.b16 %v1417, %v1417
  %v1427 = vpack.c.b16 %v1418, %v1418
  %v1428 = vpack.c.b16 %v1419, %v1419
  %v1429 = vpack.c.b16 %v1420, %v1420
  %v1430 = vpack.c.b16 %v1421, %v1421
  %v1431 = vpack.c.b16 %v1422, %v1422
  %v1432 = vpack.c.b16 %v1423, %v1423
  %v1433 = vpack.c.b16 %v1424, %v1424
  %1443 = vmatprep.subr.bf16.mxu0 %v648
  %1444 = vmatpush1.bf16.msra.mxu0 %v647
  %1445 = vmatprep.subr.bf16.mxu0 %v646
  %1446 = vmatpush1.bf16.msra.mxu0 %v645
  %1447 = vmatprep.subr.bf16.mxu0 %v644
  %1448 = vmatpush1.bf16.msra.mxu0 %v643
  %1449 = vmatprep.subr.bf16.mxu0 %v642
  %1450 = vmatpush1.bf16.msra.mxu0 %v641
  %1451 = vmatprep.subr.bf16.mxu0 %v640
  %1452 = vmatpush1.bf16.msra.mxu0 %v639
  %1453 = vmatprep.subr.bf16.mxu0 %v638
  %1454 = vmatpush1.bf16.msra.mxu0 %v637
  %1455 = vmatprep.subr.bf16.mxu0 %v636
  %1456 = vmatpush1.bf16.msra.mxu0 %v635
  %1457 = vmatprep.subr.bf16.mxu0 %v634
  %1458 = vmatpush1.bf16.msra.mxu0 %v633
  %1459 = vmatprep.subr.bf16.mxu0 %v664
  %1460 = vmatpush2.bf16.msra.mxu0 %v663
  %1461 = vmatprep.subr.bf16.mxu0 %v662
  %1462 = vmatpush2.bf16.msra.mxu0 %v661
  %1463 = vmatprep.subr.bf16.mxu0 %v660
  %1464 = vmatpush2.bf16.msra.mxu0 %v659
  %1465 = vmatprep.subr.bf16.mxu0 %v658
  %1466 = vmatpush2.bf16.msra.mxu0 %v657
  %1467 = vmatprep.subr.bf16.mxu0 %v656
  %1468 = vmatpush2.bf16.msra.mxu0 %v655
  %1469 = vmatprep.subr.bf16.mxu0 %v654
  %1470 = vmatpush2.bf16.msra.mxu0 %v653
  %1471 = vmatprep.subr.bf16.mxu0 %v652
  %1472 = vmatpush2.bf16.msra.mxu0 %v651
  %1473 = vmatprep.subr.bf16.mxu0 %v650
  %1474 = vmatpush2.bf16.msra.mxu0 %v649
  %1475 = vmatprep.mubr.bf16.mxu0 %v1426
  %1476 = vmatmul.mubr.bf16.gmra.mxu0 %v1425
  %v1477 = vpop.f32.mrf.mxu0
  %v1478 = vadd.f32 0.0, %v1477
  %v1479 = vpop.f32.mrf.mxu0
  %v1480 = vadd.f32 0.0, %v1479
  %v1481 = vpop.f32.mrf.mxu0
  %v1482 = vpop.f32.mrf.mxu0
  %1483 = vdwg.mxu0
  %1484 = vmatprep.subr.bf16.mxu0 %v680
  %1485 = vmatpush1.bf16.msra.mxu0 %v679
  %1486 = vmatprep.subr.bf16.mxu0 %v678
  %1487 = vmatpush1.bf16.msra.mxu0 %v677
  %1488 = vmatprep.subr.bf16.mxu0 %v676
  %1489 = vmatpush1.bf16.msra.mxu0 %v675
  %1490 = vmatprep.subr.bf16.mxu0 %v674
  %1491 = vmatpush1.bf16.msra.mxu0 %v673
  %1492 = vmatprep.subr.bf16.mxu0 %v672
  %1493 = vmatpush1.bf16.msra.mxu0 %v671
  %1494 = vmatprep.subr.bf16.mxu0 %v670
  %1495 = vmatpush1.bf16.msra.mxu0 %v669
  %1496 = vmatprep.subr.bf16.mxu0 %v668
  %1497 = vmatpush1.bf16.msra.mxu0 %v667
  %1498 = vmatprep.subr.bf16.mxu0 %v666
  %1499 = vmatpush1.bf16.msra.mxu0 %v665
  %1500 = vmatprep.subr.bf16.mxu0 %v696
  %1501 = vmatpush2.bf16.msra.mxu0 %v695
  %1502 = vmatprep.subr.bf16.mxu0 %v694
  %1503 = vmatpush2.bf16.msra.mxu0 %v693
  %1504 = vmatprep.subr.bf16.mxu0 %v692
  %1505 = vmatpush2.bf16.msra.mxu0 %v691
  %1506 = vmatprep.subr.bf16.mxu0 %v690
  %1507 = vmatpush2.bf16.msra.mxu0 %v689
  %1508 = vmatprep.subr.bf16.mxu0 %v688
  %1509 = vmatpush2.bf16.msra.mxu0 %v687
  %1510 = vmatprep.subr.bf16.mxu0 %v686
  %1511 = vmatpush2.bf16.msra.mxu0 %v685
  %1512 = vmatprep.subr.bf16.mxu0 %v684
  %1513 = vmatpush2.bf16.msra.mxu0 %v683
  %1514 = vmatprep.subr.bf16.mxu0 %v682
  %1515 = vmatpush2.bf16.msra.mxu0 %v681
  %1516 = vmatprep.mubr.bf16.mxu0 %v1428
  %1517 = vmatmul.mubr.bf16.gmra.mxu0 %v1427
  %v1518 = vpop.f32.mrf.mxu0
  %v1519 = vadd.f32 %v1478, %v1518
  %v1520 = vpop.f32.mrf.mxu0
  %v1521 = vadd.f32 %v1480, %v1520
  %v1522 = vpop.f32.mrf.mxu0
  %v1523 = vpop.f32.mrf.mxu0
  %1524 = vdwg.mxu0
  %1525 = vmatprep.subr.bf16.mxu0 %v712
  %1526 = vmatpush1.bf16.msra.mxu0 %v711
  %1527 = vmatprep.subr.bf16.mxu0 %v710
  %1528 = vmatpush1.bf16.msra.mxu0 %v709
  %1529 = vmatprep.subr.bf16.mxu0 %v708
  %1530 = vmatpush1.bf16.msra.mxu0 %v707
  %1531 = vmatprep.subr.bf16.mxu0 %v706
  %1532 = vmatpush1.bf16.msra.mxu0 %v705
  %1533 = vmatprep.subr.bf16.mxu0 %v704
  %1534 = vmatpush1.bf16.msra.mxu0 %v703
  %1535 = vmatprep.subr.bf16.mxu0 %v702
  %1536 = vmatpush1.bf16.msra.mxu0 %v701
  %1537 = vmatprep.subr.bf16.mxu0 %v700
  %1538 = vmatpush1.bf16.msra.mxu0 %v699
  %1539 = vmatprep.subr.bf16.mxu0 %v698
  %1540 = vmatpush1.bf16.msra.mxu0 %v697
  %1541 = vmatprep.subr.bf16.mxu0 %v728
  %1542 = vmatpush2.bf16.msra.mxu0 %v727
  %1543 = vmatprep.subr.bf16.mxu0 %v726
  %1544 = vmatpush2.bf16.msra.mxu0 %v725
  %1545 = vmatprep.subr.bf16.mxu0 %v724
  %1546 = vmatpush2.bf16.msra.mxu0 %v723
  %1547 = vmatprep.subr.bf16.mxu0 %v722
  %1548 = vmatpush2.bf16.msra.mxu0 %v721
  %1549 = vmatprep.subr.bf16.mxu0 %v720
  %1550 = vmatpush2.bf16.msra.mxu0 %v719
  %1551 = vmatprep.subr.bf16.mxu0 %v718
  %1552 = vmatpush2.bf16.msra.mxu0 %v717
  %1553 = vmatprep.subr.bf16.mxu0 %v716
  %1554 = vmatpush2.bf16.msra.mxu0 %v715
  %1555 = vmatprep.subr.bf16.mxu0 %v714
  %1556 = vmatpush2.bf16.msra.mxu0 %v713
  %1557 = vmatprep.mubr.bf16.mxu0 %v1430
  %1558 = vmatmul.mubr.bf16.gmra.mxu0 %v1429
  %v1559 = vpop.f32.mrf.mxu0
  %v1560 = vadd.f32 %v1519, %v1559
  %v1561 = vpop.f32.mrf.mxu0
  %v1562 = vadd.f32 %v1521, %v1561
  %v1563 = vpop.f32.mrf.mxu0
  %v1564 = vpop.f32.mrf.mxu0
  %1565 = vdwg.mxu0
  %1566 = vmatprep.subr.bf16.mxu0 %v744
  %1567 = vmatpush1.bf16.msra.mxu0 %v743
  %1568 = vmatprep.subr.bf16.mxu0 %v742
  %1569 = vmatpush1.bf16.msra.mxu0 %v741
  %1570 = vmatprep.subr.bf16.mxu0 %v740
  %1571 = vmatpush1.bf16.msra.mxu0 %v739
  %1572 = vmatprep.subr.bf16.mxu0 %v738
  %1573 = vmatpush1.bf16.msra.mxu0 %v737
  %1574 = vmatprep.subr.bf16.mxu0 %v736
  %1575 = vmatpush1.bf16.msra.mxu0 %v735
  %1576 = vmatprep.subr.bf16.mxu0 %v734
  %1577 = vmatpush1.bf16.msra.mxu0 %v733
  %1578 = vmatprep.subr.bf16.mxu0 %v732
  %1579 = vmatpush1.bf16.msra.mxu0 %v731
  %1580 = vmatprep.subr.bf16.mxu0 %v730
  %1581 = vmatpush1.bf16.msra.mxu0 %v729
  %1582 = vmatprep.subr.bf16.mxu0 %v760
  %1583 = vmatpush2.bf16.msra.mxu0 %v759
  %1584 = vmatprep.subr.bf16.mxu0 %v758
  %1585 = vmatpush2.bf16.msra.mxu0 %v757
  %1586 = vmatprep.subr.bf16.mxu0 %v756
  %1587 = vmatpush2.bf16.msra.mxu0 %v755
  %1588 = vmatprep.subr.bf16.mxu0 %v754
  %1589 = vmatpush2.bf16.msra.mxu0 %v753
  %1590 = vmatprep.subr.bf16.mxu0 %v752
  %1591 = vmatpush2.bf16.msra.mxu0 %v751
  %1592 = vmatprep.subr.bf16.mxu0 %v750
  %1593 = vmatpush2.bf16.msra.mxu0 %v749
  %1594 = vmatprep.subr.bf16.mxu0 %v748
  %1595 = vmatpush2.bf16.msra.mxu0 %v747
  %1596 = vmatprep.subr.bf16.mxu0 %v746
  %1597 = vmatpush2.bf16.msra.mxu0 %v745
  %1598 = vmatprep.mubr.bf16.mxu0 %v1432
  %1599 = vmatmul.mubr.bf16.gmra.mxu0 %v1431
  %v1600 = vpop.f32.mrf.mxu0
  %v1601 = vadd.f32 %v1560, %v1600
  %v1602 = vpop.f32.mrf.mxu0
  %v1603 = vadd.f32 %v1562, %v1602
  %v1604 = vpop.f32.mrf.mxu0
  %v1605 = vpop.f32.mrf.mxu0
  %1606 = vdwg.mxu0
  %1607 = vmatprep.subr.bf16.mxu0 %v776
  %1608 = vmatpush1.bf16.msra.mxu0 %v775
  %1609 = vmatprep.subr.bf16.mxu0 %v774
  %1610 = vmatpush1.bf16.msra.mxu0 %v773
  %1611 = vmatprep.subr.bf16.mxu0 %v772
  %1612 = vmatpush1.bf16.msra.mxu0 %v771
  %1613 = vmatprep.subr.bf16.mxu0 %v770
  %1614 = vmatpush1.bf16.msra.mxu0 %v769
  %1615 = vmatprep.subr.bf16.mxu0 %v768
  %1616 = vmatpush1.bf16.msra.mxu0 %v767
  %1617 = vmatprep.subr.bf16.mxu0 %v766
  %1618 = vmatpush1.bf16.msra.mxu0 %v765
  %1619 = vmatprep.subr.bf16.mxu0 %v764
  %1620 = vmatpush1.bf16.msra.mxu0 %v763
  %1621 = vmatprep.subr.bf16.mxu0 %v762
  %1622 = vmatpush1.bf16.msra.mxu0 %v761
  %1623 = vmatprep.subr.bf16.mxu0 0
  %1624 = vmatpush2.bf16.msra.mxu0 0
  %1625 = vmatprep.subr.bf16.mxu0 0
  %1626 = vmatpush2.bf16.msra.mxu0 0
  %1627 = vmatprep.subr.bf16.mxu0 0
  %1628 = vmatpush2.bf16.msra.mxu0 0
  %1629 = vmatprep.subr.bf16.mxu0 0
  %1630 = vmatpush2.bf16.msra.mxu0 0
  %1631 = vmatprep.subr.bf16.mxu0 0
  %1632 = vmatpush2.bf16.msra.mxu0 0
  %1633 = vmatprep.subr.bf16.mxu0 0
  %1634 = vmatpush2.bf16.msra.mxu0 0
  %1635 = vmatprep.subr.bf16.mxu0 0
  %1636 = vmatpush2.bf16.msra.mxu0 0
  %1637 = vmatprep.subr.bf16.mxu0 0
  %1638 = vmatpush2.bf16.msra.mxu0 0
  %1639 = vmatprep.mubr.bf16.mxu0 0
  %1640 = vmatmul.mubr.bf16.gmra.mxu0 %v1433
  %v1641 = vpop.f32.mrf.mxu0
  %v1642 = vadd.f32 %v1601, %v1641
  %v1643 = vpop.f32.mrf.mxu0
  %v1644 = vadd.f32 %v1603, %v1643
  %v1645 = vpop.f32.mrf.mxu0
  %v1646 = vpop.f32.mrf.mxu0
  %1647 = vdwg.mxu0
  %v1648 = vmul.f32 %v1642, %v1130
  %v1649 = vmul.f32 %v1644, %v1134
  %v1650 = vadd.f32 %v1648, %v1143
  %v1651 = vadd.f32 %v1649, %v1147
  %v1652 = vmax.f32 %v1650, 0.0
  %v1653 = vmax.f32 %v1651, 0.0
  %v1654 = vmax.f32 %v1403, %v1652
  %v1655 = vmax.f32 %v1404, %v1653
  %s1656 = scalar_lea.vmem %s0, 108
  %v1657 = vld [vmem:[%s1656] sm:$0xff]
  %v1658 = vld [vmem:[%s1656 + $0x8] sm:$0xff]
  %v1659 = vld [vmem:[%s1656 + $0x10] sm:$0xff]
  %v1660 = vld [vmem:[%s1656 + $0x18] sm:$0xff]
  %v1661 = vld [vmem:[%s1656 + $0x20] sm:$0xf]
  %v1667 = vunpack.c.l.b16 %v1657
  %v1668 = vunpack.c.h.b16 %v1657
  %v1669 = vunpack.c.l.b16 %v1658
  %v1670 = vunpack.c.h.b16 %v1658
  %v1671 = vunpack.c.l.b16 %v1659
  %v1672 = vunpack.c.h.b16 %v1659
  %v1673 = vunpack.c.l.b16 %v1660
  %v1674 = vunpack.c.h.b16 %v1660
  %v1675 = vunpack.c.l.b16 %v1661
  %v1676 = vpack.c.b16 %v1667, %v1667
  %v1677 = vpack.c.b16 %v1668, %v1668
  %v1678 = vpack.c.b16 %v1669, %v1669
  %v1679 = vpack.c.b16 %v1670, %v1670
  %v1680 = vpack.c.b16 %v1671, %v1671
  %v1681 = vpack.c.b16 %v1672, %v1672
  %v1682 = vpack.c.b16 %v1673, %v1673
  %v1683 = vpack.c.b16 %v1674, %v1674
  %v1684 = vpack.c.b16 %v1675, %v1675
  %1694 = vmatprep.subr.bf16.mxu0 %v648
  %1695 = vmatpush1.bf16.msra.mxu0 %v647
  %1696 = vmatprep.subr.bf16.mxu0 %v646
  %1697 = vmatpush1.bf16.msra.mxu0 %v645
  %1698 = vmatprep.subr.bf16.mxu0 %v644
  %1699 = vmatpush1.bf16.msra.mxu0 %v643
  %1700 = vmatprep.subr.bf16.mxu0 %v642
  %1701 = vmatpush1.bf16.msra.mxu0 %v641
  %1702 = vmatprep.subr.bf16.mxu0 %v640
  %1703 = vmatpush1.bf16.msra.mxu0 %v639
  %1704 = vmatprep.subr.bf16.mxu0 %v638
  %1705 = vmatpush1.bf16.msra.mxu0 %v637
  %1706 = vmatprep.subr.bf16.mxu0 %v636
  %1707 = vmatpush1.bf16.msra.mxu0 %v635
  %1708 = vmatprep.subr.bf16.mxu0 %v634
  %1709 = vmatpush1.bf16.msra.mxu0 %v633
  %1710 = vmatprep.subr.bf16.mxu0 %v664
  %1711 = vmatpush2.bf16.msra.mxu0 %v663
  %1712 = vmatprep.subr.bf16.mxu0 %v662
  %1713 = vmatpush2.bf16.msra.mxu0 %v661
  %1714 = vmatprep.subr.bf16.mxu0 %v660
  %1715 = vmatpush2.bf16.msra.mxu0 %v659
  %1716 = vmatprep.subr.bf16.mxu0 %v658
  %1717 = vmatpush2.bf16.msra.mxu0 %v657
  %1718 = vmatprep.subr.bf16.mxu0 %v656
  %1719 = vmatpush2.bf16.msra.mxu0 %v655
  %1720 = vmatprep.subr.bf16.mxu0 %v654
  %1721 = vmatpush2.bf16.msra.mxu0 %v653
  %1722 = vmatprep.subr.bf16.mxu0 %v652
  %1723 = vmatpush2.bf16.msra.mxu0 %v651
  %1724 = vmatprep.subr.bf16.mxu0 %v650
  %1725 = vmatpush2.bf16.msra.mxu0 %v649
  %1726 = vmatprep.mubr.bf16.mxu0 %v1677
  %1727 = vmatmul.mubr.bf16.gmra.mxu0 %v1676
  %v1728 = vpop.f32.mrf.mxu0
  %v1729 = vadd.f32 0.0, %v1728
  %v1730 = vpop.f32.mrf.mxu0
  %v1731 = vadd.f32 0.0, %v1730
  %v1732 = vpop.f32.mrf.mxu0
  %v1733 = vpop.f32.mrf.mxu0
  %1734 = vdwg.mxu0
  %1735 = vmatprep.subr.bf16.mxu0 %v680
  %1736 = vmatpush1.bf16.msra.mxu0 %v679
  %1737 = vmatprep.subr.bf16.mxu0 %v678
  %1738 = vmatpush1.bf16.msra.mxu0 %v677
  %1739 = vmatprep.subr.bf16.mxu0 %v676
  %1740 = vmatpush1.bf16.msra.mxu0 %v675
  %1741 = vmatprep.subr.bf16.mxu0 %v674
  %1742 = vmatpush1.bf16.msra.mxu0 %v673
  %1743 = vmatprep.subr.bf16.mxu0 %v672
  %1744 = vmatpush1.bf16.msra.mxu0 %v671
  %1745 = vmatprep.subr.bf16.mxu0 %v670
  %1746 = vmatpush1.bf16.msra.mxu0 %v669
  %1747 = vmatprep.subr.bf16.mxu0 %v668
  %1748 = vmatpush1.bf16.msra.mxu0 %v667
  %1749 = vmatprep.subr.bf16.mxu0 %v666
  %1750 = vmatpush1.bf16.msra.mxu0 %v665
  %1751 = vmatprep.subr.bf16.mxu0 %v696
  %1752 = vmatpush2.bf16.msra.mxu0 %v695
  %1753 = vmatprep.subr.bf16.mxu0 %v694
  %1754 = vmatpush2.bf16.msra.mxu0 %v693
  %1755 = vmatprep.subr.bf16.mxu0 %v692
  %1756 = vmatpush2.bf16.msra.mxu0 %v691
  %1757 = vmatprep.subr.bf16.mxu0 %v690
  %1758 = vmatpush2.bf16.msra.mxu0 %v689
  %1759 = vmatprep.subr.bf16.mxu0 %v688
  %1760 = vmatpush2.bf16.msra.mxu0 %v687
  %1761 = vmatprep.subr.bf16.mxu0 %v686
  %1762 = vmatpush2.bf16.msra.mxu0 %v685
  %1763 = vmatprep.subr.bf16.mxu0 %v684
  %1764 = vmatpush2.bf16.msra.mxu0 %v683
  %1765 = vmatprep.subr.bf16.mxu0 %v682
  %1766 = vmatpush2.bf16.msra.mxu0 %v681
  %1767 = vmatprep.mubr.bf16.mxu0 %v1679
  %1768 = vmatmul.mubr.bf16.gmra.mxu0 %v1678
  %v1769 = vpop.f32.mrf.mxu0
  %v1770 = vadd.f32 %v1729, %v1769
  %v1771 = vpop.f32.mrf.mxu0
  %v1772 = vadd.f32 %v1731, %v1771
  %v1773 = vpop.f32.mrf.mxu0
  %v1774 = vpop.f32.mrf.mxu0
  %1775 = vdwg.mxu0
  %1776 = vmatprep.subr.bf16.mxu0 %v712
  %1777 = vmatpush1.bf16.msra.mxu0 %v711
  %1778 = vmatprep.subr.bf16.mxu0 %v710
  %1779 = vmatpush1.bf16.msra.mxu0 %v709
  %1780 = vmatprep.subr.bf16.mxu0 %v708
  %1781 = vmatpush1.bf16.msra.mxu0 %v707
  %1782 = vmatprep.subr.bf16.mxu0 %v706
  %1783 = vmatpush1.bf16.msra.mxu0 %v705
  %1784 = vmatprep.subr.bf16.mxu0 %v704
  %1785 = vmatpush1.bf16.msra.mxu0 %v703
  %1786 = vmatprep.subr.bf16.mxu0 %v702
  %1787 = vmatpush1.bf16.msra.mxu0 %v701
  %1788 = vmatprep.subr.bf16.mxu0 %v700
  %1789 = vmatpush1.bf16.msra.mxu0 %v699
  %1790 = vmatprep.subr.bf16.mxu0 %v698
  %1791 = vmatpush1.bf16.msra.mxu0 %v697
  %1792 = vmatprep.subr.bf16.mxu0 %v728
  %1793 = vmatpush2.bf16.msra.mxu0 %v727
  %1794 = vmatprep.subr.bf16.mxu0 %v726
  %1795 = vmatpush2.bf16.msra.mxu0 %v725
  %1796 = vmatprep.subr.bf16.mxu0 %v724
  %1797 = vmatpush2.bf16.msra.mxu0 %v723
  %1798 = vmatprep.subr.bf16.mxu0 %v722
  %1799 = vmatpush2.bf16.msra.mxu0 %v721
  %1800 = vmatprep.subr.bf16.mxu0 %v720
  %1801 = vmatpush2.bf16.msra.mxu0 %v719
  %1802 = vmatprep.subr.bf16.mxu0 %v718
  %1803 = vmatpush2.bf16.msra.mxu0 %v717
  %1804 = vmatprep.subr.bf16.mxu0 %v716
  %1805 = vmatpush2.bf16.msra.mxu0 %v715
  %1806 = vmatprep.subr.bf16.mxu0 %v714
  %1807 = vmatpush2.bf16.msra.mxu0 %v713
  %1808 = vmatprep.mubr.bf16.mxu0 %v1681
  %1809 = vmatmul.mubr.bf16.gmra.mxu0 %v1680
  %v1810 = vpop.f32.mrf.mxu0
  %v1811 = vadd.f32 %v1770, %v1810
  %v1812 = vpop.f32.mrf.mxu0
  %v1813 = vadd.f32 %v1772, %v1812
  %v1814 = vpop.f32.mrf.mxu0
  %v1815 = vpop.f32.mrf.mxu0
  %1816 = vdwg.mxu0
  %1817 = vmatprep.subr.bf16.mxu0 %v744
  %1818 = vmatpush1.bf16.msra.mxu0 %v743
  %1819 = vmatprep.subr.bf16.mxu0 %v742
  %1820 = vmatpush1.bf16.msra.mxu0 %v741
  %1821 = vmatprep.subr.bf16.mxu0 %v740
  %1822 = vmatpush1.bf16.msra.mxu0 %v739
  %1823 = vmatprep.subr.bf16.mxu0 %v738
  %1824 = vmatpush1.bf16.msra.mxu0 %v737
  %1825 = vmatprep.subr.bf16.mxu0 %v736
  %1826 = vmatpush1.bf16.msra.mxu0 %v735
  %1827 = vmatprep.subr.bf16.mxu0 %v734
  %1828 = vmatpush1.bf16.msra.mxu0 %v733
  %1829 = vmatprep.subr.bf16.mxu0 %v732
  %1830 = vmatpush1.bf16.msra.mxu0 %v731
  %1831 = vmatprep.subr.bf16.mxu0 %v730
  %1832 = vmatpush1.bf16.msra.mxu0 %v729
  %1833 = vmatprep.subr.bf16.mxu0 %v760
  %1834 = vmatpush2.bf16.msra.mxu0 %v759
  %1835 = vmatprep.subr.bf16.mxu0 %v758
  %1836 = vmatpush2.bf16.msra.mxu0 %v757
  %1837 = vmatprep.subr.bf16.mxu0 %v756
  %1838 = vmatpush2.bf16.msra.mxu0 %v755
  %1839 = vmatprep.subr.bf16.mxu0 %v754
  %1840 = vmatpush2.bf16.msra.mxu0 %v753
  %1841 = vmatprep.subr.bf16.mxu0 %v752
  %1842 = vmatpush2.bf16.msra.mxu0 %v751
  %1843 = vmatprep.subr.bf16.mxu0 %v750
  %1844 = vmatpush2.bf16.msra.mxu0 %v749
  %1845 = vmatprep.subr.bf16.mxu0 %v748
  %1846 = vmatpush2.bf16.msra.mxu0 %v747
  %1847 = vmatprep.subr.bf16.mxu0 %v746
  %1848 = vmatpush2.bf16.msra.mxu0 %v745
  %1849 = vmatprep.mubr.bf16.mxu0 %v1683
  %1850 = vmatmul.mubr.bf16.gmra.mxu0 %v1682
  %v1851 = vpop.f32.mrf.mxu0
  %v1852 = vadd.f32 %v1811, %v1851
  %v1853 = vpop.f32.mrf.mxu0
  %v1854 = vadd.f32 %v1813, %v1853
  %v1855 = vpop.f32.mrf.mxu0
  %v1856 = vpop.f32.mrf.mxu0
  %1857 = vdwg.mxu0
  %1858 = vmatprep.subr.bf16.mxu0 %v776
  %1859 = vmatpush1.bf16.msra.mxu0 %v775
  %1860 = vmatprep.subr.bf16.mxu0 %v774
  %1861 = vmatpush1.bf16.msra.mxu0 %v773
  %1862 = vmatprep.subr.bf16.mxu0 %v772
  %1863 = vmatpush1.bf16.msra.mxu0 %v771
  %1864 = vmatprep.subr.bf16.mxu0 %v770
  %1865 = vmatpush1.bf16.msra.mxu0 %v769
  %1866 = vmatprep.subr.bf16.mxu0 %v768
  %1867 = vmatpush1.bf16.msra.mxu0 %v767
  %1868 = vmatprep.subr.bf16.mxu0 %v766
  %1869 = vmatpush1.bf16.msra.mxu0 %v765
  %1870 = vmatprep.subr.bf16.mxu0 %v764
  %1871 = vmatpush1.bf16.msra.mxu0 %v763
  %1872 = vmatprep.subr.bf16.mxu0 %v762
  %1873 = vmatpush1.bf16.msra.mxu0 %v761
  %1874 = vmatprep.subr.bf16.mxu0 0
  %1875 = vmatpush2.bf16.msra.mxu0 0
  %1876 = vmatprep.subr.bf16.mxu0 0
  %1877 = vmatpush2.bf16.msra.mxu0 0
  %1878 = vmatprep.subr.bf16.mxu0 0
  %1879 = vmatpush2.bf16.msra.mxu0 0
  %1880 = vmatprep.subr.bf16.mxu0 0
  %1881 = vmatpush2.bf16.msra.mxu0 0
  %1882 = vmatprep.subr.bf16.mxu0 0
  %1883 = vmatpush2.bf16.msra.mxu0 0
  %1884 = vmatprep.subr.bf16.mxu0 0
  %1885 = vmatpush2.bf16.msra.mxu0 0
  %1886 = vmatprep.subr.bf16.mxu0 0
  %1887 = vmatpush2.bf16.msra.mxu0 0
  %1888 = vmatprep.subr.bf16.mxu0 0
  %1889 = vmatpush2.bf16.msra.mxu0 0
  %1890 = vmatprep.mubr.bf16.mxu0 0
  %1891 = vmatmul.mubr.bf16.gmra.mxu0 %v1684
  %v1892 = vpop.f32.mrf.mxu0
  %v1893 = vadd.f32 %v1852, %v1892
  %v1894 = vpop.f32.mrf.mxu0
  %v1895 = vadd.f32 %v1854, %v1894
  %v1896 = vpop.f32.mrf.mxu0
  %v1897 = vpop.f32.mrf.mxu0
  %1898 = vdwg.mxu0
  %v1899 = vmul.f32 %v1893, %v1130
  %v1900 = vmul.f32 %v1895, %v1134
  %v1901 = vadd.f32 %v1899, %v1143
  %v1902 = vadd.f32 %v1900, %v1147
  %v1903 = vmax.f32 %v1901, 0.0
  %v1904 = vmax.f32 %v1902, 0.0
  %v1905 = vmax.f32 %v1654, %v1903
  %v1906 = vmax.f32 %v1655, %v1904
  %1907 = vst [vmem:[%s4] sm:$0xff] %v1905
  %1908 = vst [vmem:[%s4 + $0x8] sm:$0xff] %v1906
  // Predicated region
  $region18: #{enn_forward.6} parent=0 // pred_check
    _
  $region19: #{enn_forward.6} parent=0 // pred_check_branch
    %1910 = sbr.rel (0) target = $region21
  $region20: #{enn_forward.6} parent=0 // pred_region
    _
  $region21: #{enn_forward.6} parent=0 // pred_fallthru
    _
  // Predicated region
  $region22: #{enn_forward.6} parent=0 // pred_check
    _
  $region23: #{enn_forward.6} parent=0 // pred_check_branch
    %1912 = sbr.rel (0) target = $region25
  $region24: #{enn_forward.6} parent=0 // pred_region
    _
  $region25: #{enn_forward.6} parent=0 // pred_fallthru
    _

// kernel: enn_forward.7
$region0: #{enn_forward.7}
  #allocation0 [shape = 'u32[]', space=smem, size = 0x4, offset = 0x4, fixed_abs, tag = 'smem constant byte address 0x4 - core index']
  #allocation1 [shape = 'u32[144,128]{1,0:T(1,128)}', space=vmem, size = 0x12000, scoped, tag = 'internal scratch']
  %s0 = inlined_call_operand.vmem [shape: bf16[2,128], index: 0, kind: input, shape index: {}]
  %s1 = inlined_call_operand.vmem [shape: bf16[128,256], index: 1, kind: input, shape index: {}]
  %s2 = inlined_call_operand.vmem [shape: f32[1,256], index: 2, kind: input, shape index: {}]
  %s3 = inlined_call_operand.vmem [shape: f32[1,256], index: 3, kind: input, shape index: {}]
  %s4 = inlined_call_operand.vmem [shape: f32[1,256], index: 4, kind: input, shape index: {}]
  %s5 = inlined_call_operand.vmem [shape: bf16[256,128], index: 5, kind: input, shape index: {}]
  %s6 = inlined_call_operand.vmem [shape: f32[1,128], index: 6, kind: input, shape index: {}]
  %s7 = inlined_call_operand.hbm [shape: f32[2,256], index: 7, kind: output, shape index: {0}]
  %s8 = inlined_call_operand.hbm [shape: f32[2,128], index: 8, kind: output, shape index: {1}]
  %9 = xla_tuple %s7, %s8
  %s10 = sld [smem:[#allocation0]]
  $region46: #{enn_forward.7} parent=0
    _
  %s12 = ssub.s32 1, %s10
  %s13 = scalar_select 0, %s12, %s10
  $region1: #{enn_forward.7} parent=0
    #allocation2 [shape = 'u8[2048]{0}', space=vmem, size = 0x800, scoped, tag = 'output window, operand 0, single buffered']
    #allocation3 [shape = 's32[1]{0}', space=sflag, size = 0x4, scoped, tag = 'scoped memory for enn_forward.7']
    #allocation4 [shape = 'u8[1024]{0}', space=vmem, size = 0x400, scoped, tag = 'output window, operand 1, single buffered']
    #allocation5 [shape = 's32[1]{0}', space=sflag, size = 0x4, scoped, tag = 'scoped memory for enn_forward.7']
    %14 = vsyncpa [#allocation3], 0
    %15 = vsyncpa [#allocation5], 0
    // Predicated region
    $region2: #{enn_forward.7} parent=1 // pred_check
      _
    $region3: #{enn_forward.7} parent=1 // pred_check_branch
      %17 = sbr.rel (0) target = $region5
    $region4: #{enn_forward.7} parent=1 // pred_region
      _
    $region5: #{enn_forward.7} parent=1 // pred_fallthru
      _
    // Predicated region
    $region6: #{enn_forward.7} parent=1 // pred_check
      _
    $region7: #{enn_forward.7} parent=1 // pred_check_branch
      %19 = sbr.rel (0) target = $region9
    $region8: #{enn_forward.7} parent=1 // pred_region
      _
    $region9: #{enn_forward.7} parent=1 // pred_fallthru
      _
    // Predicated region
    $region10: #{enn_forward.7} parent=1 // pred_check
      _
    $region11: #{enn_forward.7} parent=1 // pred_check_branch
      %21 = sbr.rel (0) target = $region13
    $region12: #{enn_forward.7} parent=1 // pred_region
      _
    $region13: #{enn_forward.7} parent=1 // pred_fallthru
      _
    // Predicated region
    $region14: #{enn_forward.7} parent=1 // pred_check
      _
    $region15: #{enn_forward.7} parent=1 // pred_check_branch
      %23 = sbr.rel (0) target = $region17
    $region16: #{enn_forward.7} parent=1 // pred_region
      _
    $region17: #{enn_forward.7} parent=1 // pred_fallthru
      _
    // Predicated region
    $region18: #{enn_forward.7} parent=1 // pred_check
      _
    $region19: #{enn_forward.7} parent=1 // pred_check_branch
      %25 = sbr.rel (0) target = $region21
    $region20: #{enn_forward.7} parent=1 // pred_region
      _
    $region21: #{enn_forward.7} parent=1 // pred_fallthru
      _
    // Predicated region
    $region22: #{enn_forward.7} parent=1 // pred_check
      _
    $region23: #{enn_forward.7} parent=1 // pred_check_branch
      %27 = sbr.rel (0) target = $region25
    $region24: #{enn_forward.7} parent=1 // pred_region
      _
    $region25: #{enn_forward.7} parent=1 // pred_fallthru
      _
    // Predicated region
    $region26: #{enn_forward.7} parent=1 // pred_check
      _
    $region27: #{enn_forward.7} parent=1 // pred_check_branch
      %29 = sbr.rel (0) target = $region29
    $region28: #{enn_forward.7} parent=1 // pred_region
      _
    $region29: #{enn_forward.7} parent=1 // pred_fallthru
      _
    %v31 = vld [vmem:[%s0] sm:$0x1]
    %v32 = vld [vmem:[%s1] sm:$0xff]
    %v33 = vld [vmem:[%s1 + $0x8] sm:$0xff]
    %v34 = vld [vmem:[%s1 + $0x10] sm:$0xff]
    %v35 = vld [vmem:[%s1 + $0x18] sm:$0xff]
    %v36 = vld [vmem:[%s1 + $0x20] sm:$0xff]
    %v37 = vld [vmem:[%s1 + $0x28] sm:$0xff]
    %v38 = vld [vmem:[%s1 + $0x30] sm:$0xff]
    %v39 = vld [vmem:[%s1 + $0x38] sm:$0xff]
    %v40 = vld [vmem:[%s1 + $0x40] sm:$0xff]
    %v41 = vld [vmem:[%s1 + $0x48] sm:$0xff]
    %v42 = vld [vmem:[%s1 + $0x50] sm:$0xff]
    %v43 = vld [vmem:[%s1 + $0x58] sm:$0xff]
    %v44 = vld [vmem:[%s1 + $0x60] sm:$0xff]
    %v45 = vld [vmem:[%s1 + $0x68] sm:$0xff]
    %v46 = vld [vmem:[%s1 + $0x70] sm:$0xff]
    %v47 = vld [vmem:[%s1 + $0x78] sm:$0xff]
    %v48 = vld [vmem:[%s2] sm:$0x3]
    %v50 = vlaneseq
    %v51 = vshrl.u32 %v50, 7
    %v52 = vsub.s32 0, %v51
    %v53 = vrot.slane %v48, %v52
    %v54 = vlaneseq
    %v55 = vshrl.u32 %v54, 7
    %v56 = vsub.s32 1, %v55
    %v57 = vrot.slane %v48, %v56
    %v76 = vunpack.c.l.b16 %v32
    %v77 = vunpack.c.h.b16 %v32
    %v78 = vunpack.c.l.b16 %v33
    %v79 = vunpack.c.h.b16 %v33
    %v80 = vunpack.c.l.b16 %v34
    %v81 = vunpack.c.h.b16 %v34
    %v82 = vunpack.c.l.b16 %v35
    %v83 = vunpack.c.h.b16 %v35
    %v84 = vunpack.c.l.b16 %v36
    %v85 = vunpack.c.h.b16 %v36
    %v86 = vunpack.c.l.b16 %v37
    %v87 = vunpack.c.h.b16 %v37
    %v88 = vunpack.c.l.b16 %v38
    %v89 = vunpack.c.h.b16 %v38
    %v90 = vunpack.c.l.b16 %v39
    %v91 = vunpack.c.h.b16 %v39
    %v92 = vunpack.c.l.b16 %v40
    %v93 = vunpack.c.h.b16 %v40
    %v94 = vunpack.c.l.b16 %v41
    %v95 = vunpack.c.h.b16 %v41
    %v96 = vunpack.c.l.b16 %v42
    %v97 = vunpack.c.h.b16 %v42
    %v98 = vunpack.c.l.b16 %v43
    %v99 = vunpack.c.h.b16 %v43
    %v100 = vunpack.c.l.b16 %v44
    %v101 = vunpack.c.h.b16 %v44
    %v102 = vunpack.c.l.b16 %v45
    %v103 = vunpack.c.h.b16 %v45
    %v104 = vunpack.c.l.b16 %v46
    %v105 = vunpack.c.h.b16 %v46
    %v106 = vunpack.c.l.b16 %v47
    %v107 = vunpack.c.h.b16 %v47
    %v108 = vpack.c.b16 %v78, %v76
    %v109 = vpack.c.b16 %v79, %v77
    %v110 = vpack.c.b16 %v82, %v80
    %v111 = vpack.c.b16 %v83, %v81
    %v112 = vpack.c.b16 %v86, %v84
    %v113 = vpack.c.b16 %v87, %v85
    %v114 = vpack.c.b16 %v90, %v88
    %v115 = vpack.c.b16 %v91, %v89
    %v116 = vpack.c.b16 %v94, %v92
    %v117 = vpack.c.b16 %v95, %v93
    %v118 = vpack.c.b16 %v98, %v96
    %v119 = vpack.c.b16 %v99, %v97
    %v120 = vpack.c.b16 %v102, %v100
    %v121 = vpack.c.b16 %v103, %v101
    %v122 = vpack.c.b16 %v106, %v104
    %v123 = vpack.c.b16 %v107, %v105
    %140 = vmatprep.subr.bf16.mxu0 %v123
    %141 = vmatpush1.bf16.msra.mxu0 %v122
    %142 = vmatprep.subr.bf16.mxu0 %v121
    %143 = vmatpush1.bf16.msra.mxu0 %v120
    %144 = vmatprep.subr.bf16.mxu0 %v119
    %145 = vmatpush1.bf16.msra.mxu0 %v118
    %146 = vmatprep.subr.bf16.mxu0 %v117
    %147 = vmatpush1.bf16.msra.mxu0 %v116
    %148 = vmatprep.subr.bf16.mxu0 %v115
    %149 = vmatpush1.bf16.msra.mxu0 %v114
    %150 = vmatprep.subr.bf16.mxu0 %v113
    %151 = vmatpush1.bf16.msra.mxu0 %v112
    %152 = vmatprep.subr.bf16.mxu0 %v111
    %153 = vmatpush1.bf16.msra.mxu0 %v110
    %154 = vmatprep.subr.bf16.mxu0 %v109
    %155 = vmatpush1.bf16.msra.mxu0 %v108
    %156 = vmatprep.subr.bf16.mxu0 0
    %157 = vmatpush2.bf16.msra.mxu0 0
    %158 = vmatprep.subr.bf16.mxu0 0
    %159 = vmatpush2.bf16.msra.mxu0 0
    %160 = vmatprep.subr.bf16.mxu0 0
    %161 = vmatpush2.bf16.msra.mxu0 0
    %162 = vmatprep.subr.bf16.mxu0 0
    %163 = vmatpush2.bf16.msra.mxu0 0
    %164 = vmatprep.subr.bf16.mxu0 0
    %165 = vmatpush2.bf16.msra.mxu0 0
    %166 = vmatprep.subr.bf16.mxu0 0
    %167 = vmatpush2.bf16.msra.mxu0 0
    %168 = vmatprep.subr.bf16.mxu0 0
    %169 = vmatpush2.bf16.msra.mxu0 0
    %170 = vmatprep.subr.bf16.mxu0 0
    %171 = vmatpush2.bf16.msra.mxu0 0
    %172 = vmatprep.mubr.bf16.mxu0 0
    %173 = vmatmul.mubr.bf16.gmra.mxu0 %v31
    %v174 = vpop.f32.mrf.mxu0
    %v175 = vadd.f32 %v53, %v174
    %v176 = vpop.f32.mrf.mxu0
    %v177 = vadd.f32 %v57, %v176
    %v178 = vpop.f32.mrf.mxu0
    %v179 = vpop.f32.mrf.mxu0
    %180 = vdwg.mxu0
    %vm181 = vcmask 1041408
    %v182 = vsel %vm181, %v175, 0.0
    %v183 = vsel %vm181, %v177, 0.0
    %v184 = vadd.f32 %v182, %v183
    %185 = vadd.xlane.f32.xlu0 %v184
    %v186 = vpop.xlane.xlu0 %185
    %v187 = vrcp.pop 256.0
    %v188 = vmul.f32 %v186, %v187
    %v189 = vmul.f32 %v175, %v175
    %v190 = vmul.f32 %v177, %v177
    %v191 = vsel %vm181, %v189, 0.0
    %v192 = vsel %vm181, %v190, 0.0
    %v193 = vadd.f32 %v191, %v192
    %194 = vadd.xlane.f32.xlu0 %v193
    %v195 = vpop.xlane.xlu0 %194
    %v196 = vmul.f32 %v195, %v187
    %v197 = vmul.f32 %v188, %v188
    %v198 = vsub.f32 %v196, %v197
    %v199 = vmax.f32 %v198, 0.0
    %v200 = vsub.f32 %v175, %v188
    %v201 = vsub.f32 %v177, %v188
    %v202 = vadd.f32 %v199, 1e-05
    %v203 = vrsqrt.pop %v202
    %v204 = vmul.f32 %v200, %v203
    %v205 = vmul.f32 %v201, %v203
    %v206 = vld [vmem:[%s3] sm:$0x3]
    %v208 = vlaneseq
    %v209 = vshrl.u32 %v208, 7
    %v210 = vsub.s32 0, %v209
    %v211 = vrot.slane %v206, %v210
    %v212 = vlaneseq
    %v213 = vshrl.u32 %v212, 7
    %v214 = vsub.s32 1, %v213
    %v215 = vrot.slane %v206, %v214
    %v218 = vmul.f32 %v204, %v211
    %v219 = vmul.f32 %v205, %v215
    %v220 = vld [vmem:[%s4] sm:$0x3]
    %v222 = vlaneseq
    %v223 = vshrl.u32 %v222, 7
    %v224 = vsub.s32 0, %v223
    %v225 = vrot.slane %v220, %v224
    %v226 = vlaneseq
    %v227 = vshrl.u32 %v226, 7
    %v228 = vsub.s32 1, %v227
    %v229 = vrot.slane %v220, %v228
    %v232 = vadd.f32 %v218, %v225
    %v233 = vadd.f32 %v219, %v229
    %v236 = vcombine.low %v232, %v233
    %v238 = vunpack.c.l.s4 1983009808
    %v239 = vunpack.c.0.s8 %v238
    %v240 = vlaneseq
    %v241 = vshrl.u32 %v240, 7
    %v242 = vsub.s32 %v239, %v241
    %v243 = vrot.slane %v236, %v242
    %245 = vst [vmem:[#allocation2] sm:$0xf] %v243
    %v246 = vpack.c.bf16 %v232, %v232
    %v247 = vpack.c.bf16 %v233, %v233
    %v248 = vld [vmem:[%s5] sm:$0xf]
    %v249 = vld [vmem:[%s5 + $0x4] sm:$0xf]
    %v250 = vld [vmem:[%s5 + $0x8] sm:$0xf]
    %v251 = vld [vmem:[%s5 + $0xc] sm:$0xf]
    %v252 = vld [vmem:[%s5 + $0x10] sm:$0xf]
    %v253 = vld [vmem:[%s5 + $0x14] sm:$0xf]
    %v254 = vld [vmem:[%s5 + $0x18] sm:$0xf]
    %v255 = vld [vmem:[%s5 + $0x1c] sm:$0xf]
    %v256 = vld [vmem:[%s5 + $0x20] sm:$0xf]
    %v257 = vld [vmem:[%s5 + $0x24] sm:$0xf]
    %v258 = vld [vmem:[%s5 + $0x28] sm:$0xf]
    %v259 = vld [vmem:[%s5 + $0x2c] sm:$0xf]
    %v260 = vld [vmem:[%s5 + $0x30] sm:$0xf]
    %v261 = vld [vmem:[%s5 + $0x34] sm:$0xf]
    %v262 = vld [vmem:[%s5 + $0x38] sm:$0xf]
    %v263 = vld [vmem:[%s5 + $0x3c] sm:$0xf]
    %v264 = vld [vmem:[%s5 + $0x40] sm:$0xf]
    %v265 = vld [vmem:[%s5 + $0x44] sm:$0xf]
    %v266 = vld [vmem:[%s5 + $0x48] sm:$0xf]
    %v267 = vld [vmem:[%s5 + $0x4c] sm:$0xf]
    %v268 = vld [vmem:[%s5 + $0x50] sm:$0xf]
    %v269 = vld [vmem:[%s5 + $0x54] sm:$0xf]
    %v270 = vld [vmem:[%s5 + $0x58] sm:$0xf]
    %v271 = vld [vmem:[%s5 + $0x5c] sm:$0xf]
    %v272 = vld [vmem:[%s5 + $0x60] sm:$0xf]
    %v273 = vld [vmem:[%s5 + $0x64] sm:$0xf]
    %v274 = vld [vmem:[%s5 + $0x68] sm:$0xf]
    %v275 = vld [vmem:[%s5 + $0x6c] sm:$0xf]
    %v276 = vld [vmem:[%s5 + $0x70] sm:$0xf]
    %v277 = vld [vmem:[%s5 + $0x74] sm:$0xf]
    %v278 = vld [vmem:[%s5 + $0x78] sm:$0xf]
    %v279 = vld [vmem:[%s5 + $0x7c] sm:$0xf]
    %v280 = vld [vmem:[%s6] sm:$0x1]
    %v282 = vlaneseq
    %v283 = vshrl.u32 %v282, 7
    %v284 = vsub.s32 0, %v283
    %v285 = vrot.slane %v280, %v284
    %v319 = vunpack.c.l.b16 %v248
    %v320 = vunpack.c.l.b16 %v249
    %v321 = vunpack.c.l.b16 %v250
    %v322 = vunpack.c.l.b16 %v251
    %v323 = vunpack.c.l.b16 %v252
    %v324 = vunpack.c.l.b16 %v253
    %v325 = vunpack.c.l.b16 %v254
    %v326 = vunpack.c.l.b16 %v255
    %v327 = vunpack.c.l.b16 %v256
    %v328 = vunpack.c.l.b16 %v257
    %v329 = vunpack.c.l.b16 %v258
    %v330 = vunpack.c.l.b16 %v259
    %v331 = vunpack.c.l.b16 %v260
    %v332 = vunpack.c.l.b16 %v261
    %v333 = vunpack.c.l.b16 %v262
    %v334 = vunpack.c.l.b16 %v263
    %v335 = vunpack.c.l.b16 %v264
    %v336 = vunpack.c.l.b16 %v265
    %v337 = vunpack.c.l.b16 %v266
    %v338 = vunpack.c.l.b16 %v267
    %v339 = vunpack.c.l.b16 %v268
    %v340 = vunpack.c.l.b16 %v269
    %v341 = vunpack.c.l.b16 %v270
    %v342 = vunpack.c.l.b16 %v271
    %v343 = vunpack.c.l.b16 %v272
    %v344 = vunpack.c.l.b16 %v273
    %v345 = vunpack.c.l.b16 %v274
    %v346 = vunpack.c.l.b16 %v275
    %v347 = vunpack.c.l.b16 %v276
    %v348 = vunpack.c.l.b16 %v277
    %v349 = vunpack.c.l.b16 %v278
    %v350 = vunpack.c.l.b16 %v279
    %v351 = vpack.c.b16 %v320, %v319
    %v352 = vpack.c.b16 %v322, %v321
    %v353 = vpack.c.b16 %v324, %v323
    %v354 = vpack.c.b16 %v326, %v325
    %v355 = vpack.c.b16 %v328, %v327
    %v356 = vpack.c.b16 %v330, %v329
    %v357 = vpack.c.b16 %v332, %v331
    %v358 = vpack.c.b16 %v334, %v333
    %v359 = vpack.c.b16 %v336, %v335
    %v360 = vpack.c.b16 %v338, %v337
    %v361 = vpack.c.b16 %v340, %v339
    %v362 = vpack.c.b16 %v342, %v341
    %v363 = vpack.c.b16 %v344, %v343
    %v364 = vpack.c.b16 %v346, %v345
    %v365 = vpack.c.b16 %v348, %v347
    %v366 = vpack.c.b16 %v350, %v349
    %383 = vmatprep.subr.bf16.mxu0 0
    %384 = vmatpush1.bf16.msra.mxu0 %v358
    %385 = vmatprep.subr.bf16.mxu0 0
    %386 = vmatpush1.bf16.msra.mxu0 %v357
    %387 = vmatprep.subr.bf16.mxu0 0
    %388 = vmatpush1.bf16.msra.mxu0 %v356
    %389 = vmatprep.subr.bf16.mxu0 0
    %390 = vmatpush1.bf16.msra.mxu0 %v355
    %391 = vmatprep.subr.bf16.mxu0 0
    %392 = vmatpush1.bf16.msra.mxu0 %v354
    %393 = vmatprep.subr.bf16.mxu0 0
    %394 = vmatpush1.bf16.msra.mxu0 %v353
    %395 = vmatprep.subr.bf16.mxu0 0
    %396 = vmatpush1.bf16.msra.mxu0 %v352
    %397 = vmatprep.subr.bf16.mxu0 0
    %398 = vmatpush1.bf16.msra.mxu0 %v351
    %399 = vmatprep.subr.bf16.mxu0 0
    %400 = vmatpush2.bf16.msra.mxu0 %v366
    %401 = vmatprep.subr.bf16.mxu0 0
    %402 = vmatpush2.bf16.msra.mxu0 %v365
    %403 = vmatprep.subr.bf16.mxu0 0
    %404 = vmatpush2.bf16.msra.mxu0 %v364
    %405 = vmatprep.subr.bf16.mxu0 0
    %406 = vmatpush2.bf16.msra.mxu0 %v363
    %407 = vmatprep.subr.bf16.mxu0 0
    %408 = vmatpush2.bf16.msra.mxu0 %v362
    %409 = vmatprep.subr.bf16.mxu0 0
    %410 = vmatpush2.bf16.msra.mxu0 %v361
    %411 = vmatprep.subr.bf16.mxu0 0
    %412 = vmatpush2.bf16.msra.mxu0 %v360
    %413 = vmatprep.subr.bf16.mxu0 0
    %414 = vmatpush2.bf16.msra.mxu0 %v359
    %415 = vmatprep.mubr.bf16.mxu0 %v247
    %416 = vmatmul.mubr.bf16.gmra.mxu0 %v246
    %v417 = vpop.f32.mrf.mxu0
    %v418 = vadd.f32 %v285, %v417
    %v419 = vpop.f32.mrf.mxu0
    %v420 = vpop.f32.mrf.mxu0
    %v421 = vpop.f32.mrf.mxu0
    %422 = vdwg.mxu0
    %423 = vst [vmem:[#allocation4] sm:$0x3] %v418
    // Predicated region
    $region30: #{enn_forward.7} parent=1 // pred_check
      _
    $region31: #{enn_forward.7} parent=1 // pred_check_branch
      %425 = sbr.rel (0) target = $region33
    $region32: #{enn_forward.7} parent=1 // pred_region
      %s427 = ssub.s32 64, 64
      %428 = vsyncadd [#allocation3], %s427
      %s430 = sshll.u32 [#allocation2], 4
      %s431 = int_to_ptr.vmem [resolvable:$true] %s430
      %433 = dma.vmem_to_hbm [thread:$0]  %s431, 64, %s7, [#allocation3]
    $region33: #{enn_forward.7} parent=1 // pred_fallthru
      _
    // Predicated region
    $region34: #{enn_forward.7} parent=1 // pred_check
      _
    $region35: #{enn_forward.7} parent=1 // pred_check_branch
      %435 = sbr.rel (0) target = $region37
    $region36: #{enn_forward.7} parent=1 // pred_region
      %s437 = ssub.s32 32, 32
      %438 = vsyncadd [#allocation5], %s437
      %s440 = sshll.u32 [#allocation4], 4
      %s441 = int_to_ptr.vmem [resolvable:$true] %s440
      %443 = dma.vmem_to_hbm [thread:$0]  %s441, 32, %s8, [#allocation5]
    $region37: #{enn_forward.7} parent=1 // pred_fallthru
      _
    // Predicated region
    $region38: #{enn_forward.7} parent=1 // pred_check
      _
    $region39: #{enn_forward.7} parent=1 // pred_check_branch
      %445 = sbr.rel (0) target = $region41
    $region40: #{enn_forward.7} parent=1 // pred_region
      %446 = dma.done [#allocation3], 64
    $region41: #{enn_forward.7} parent=1 // pred_fallthru
      _
    // Predicated region
    $region42: #{enn_forward.7} parent=1 // pred_check
      _
    $region43: #{enn_forward.7} parent=1 // pred_check_branch
      %448 = sbr.rel (0) target = $region45
    $region44: #{enn_forward.7} parent=1 // pred_region
      %449 = dma.done [#allocation5], 32
    $region45: #{enn_forward.7} parent=1 // pred_fallthru
      _
    %450 = vsyncpa [#allocation3], 1
    %451 = vsyncpa [#allocation5], 1

</llo_original>
